<compile_context>
chip_gen: v7x
topology: tpu7x:2x2x1
jax: 0.10.0
libtpu: 0.0.40
codegen_flags: <defaults>
</compile_context>

<pallas_src>
import math

import jax
import jax.numpy as jnp
from jax.experimental import pallas as pl
from jax.experimental.pallas import tpu as pltpu

_NEG_INF = -1e9
_LN_EPS = 1e-6


def _layernorm(x, g, b, eps=_LN_EPS):
    mu = jnp.mean(x, axis=-1, keepdims=True)
    var = jnp.mean((x - mu) ** 2, axis=-1, keepdims=True)
    return (x - mu) * jax.lax.rsqrt(var + eps) * g + b


def _make_kernel(num_heads, head_dim, hidden, *, share_self_kv):
    scale = 1.0 / math.sqrt(head_dim)
    bf16 = jnp.bfloat16
    f32 = jnp.float32

    def _split_heads(t):
        # (n, H) -> (NH, n, DK): leading-axis stack of static lane slices (cheap, safe).
        return jnp.stack(
            [t[:, h * head_dim:(h + 1) * head_dim] for h in range(num_heads)],
            axis=0)

    def _attention(q_in, kv_in, w_ref, b_ref, add_mask, relem=None):
        """Head-batched MHA; optionally Shaw-style relative attention.

        q_in: (TQ, H) f32, kv_in: (SK, H) f32, w_ref: (4,H,H) ref [Wq,Wk,Wv,Wo],
        b_ref: (4,H) ref, add_mask: (TQ, SK) f32 additive mask (0 / -1e9),
        relem: (TQ, SK, DK) f32 or None.  Returns (TQ, H) f32.
        """
        # Full-width projections: bf16 MXU inputs, f32 accumulation.
        q = jnp.dot(q_in.astype(bf16), w_ref[0].astype(bf16),
                    preferred_element_type=f32) + b_ref[0]
        k = jnp.dot(kv_in.astype(bf16), w_ref[1].astype(bf16),
                    preferred_element_type=f32) + b_ref[1]
        v = jnp.dot(kv_in.astype(bf16), w_ref[2].astype(bf16),
                    preferred_element_type=f32) + b_ref[2]

        q_hl = _split_heads(q)                              # (NH, TQ, DK) f32
        k_hl = _split_heads(k)                              # (NH, SK, DK) f32
        v_hl = _split_heads(v)                              # (NH, SK, DK) f32

        # Scores for all heads at once (leading-batch dot_general -> MXU).
        s = jnp.einsum('hqd,hkd->hqk', q_hl.astype(bf16), k_hl.astype(bf16),
                       preferred_element_type=f32)          # (NH, TQ, SK)

        if relem is not None:
            rel_b = relem.astype(bf16)                      # (TQ, SK, DK)
            # Relative score term, batched over query rows, contracting DK (MXU).
            q_qh = pltpu.einshape('hqd->qhd', q_hl).astype(bf16)       # (TQ, NH, DK)
            s_rel = jnp.einsum('qhd,qkd->qhk', q_qh, rel_b,
                               preferred_element_type=f32)  # (TQ, NH, SK)
            s = s + pltpu.einshape('qhk->hqk', s_rel)

        # Additive mask (shared across heads) + numerically stable softmax in f32.
        s = s * scale + add_mask[None, :, :]
        s = s - jnp.max(s, axis=-1, keepdims=True)
        p = jnp.exp(s)
        p = p * pl.reciprocal(jnp.sum(p, axis=-1, keepdims=True), approx=True)

        p_b = p.astype(bf16)
        o = jnp.einsum('hqk,hkd->hqd', p_b, v_hl.astype(bf16),
                       preferred_element_type=f32)          # (NH, TQ, DK)

        if relem is not None:
            # Relative value term, batched over query rows, contracting SK (MXU).
            p_qh = pltpu.einshape('hqk->qhk', p).astype(bf16)          # (TQ, NH, SK)
            o_rel = jnp.einsum('qhk,qkd->qhd', p_qh, rel_b,
                               preferred_element_type=f32)  # (TQ, NH, DK)
            o = o + pltpu.einshape('qhd->hqd', o_rel)

        # Concatenate heads back to (TQ, H); single full-width Wo matmul.
        o_cat = jnp.concatenate([o[h] for h in range(num_heads)], axis=-1)
        return jnp.dot(o_cat.astype(bf16), w_ref[3].astype(bf16),
                       preferred_element_type=f32) + b_ref[3]

    def _body(xq_ref, xf_ref, mask_ref, left_ref, leftmask_ref, edge_ref,
              a1w_ref, a1b_ref, a2w_ref, a2b_ref, lng_ref, lnb_ref,
              w1_ref, b1_ref, w2_ref, b2_ref, o_ref):
        xq = xq_ref[0]                     # (TQ, H)  query-tile rows
        left = left_ref[0]                 # (SL, H)
        relem = edge_ref[0]                # (TQ, SL, DK)

        # Additive masks, built once per tile (not per head).
        add_mask1 = jnp.where(mask_ref[0] == 0.0, _NEG_INF, 0.0).astype(f32)
        add_mask2 = jnp.where(leftmask_ref[0] == 0.0, _NEG_INF, 0.0).astype(f32)

        # --- sublayer1: x + attention1(LN(x), LN(x), LN(x), mask) ---
        hq = _layernorm(xq, lng_ref[0], lnb_ref[0])
        hkv = hq if share_self_kv else _layernorm(xf_ref[0], lng_ref[0], lnb_ref[0])
        xq = xq + _attention(hq, hkv, a1w_ref, a1b_ref, add_mask1, relem=None)

        # --- sublayer3: x + attention2(LN(x), left, left, leftmask, edgeem) ---
        hq = _layernorm(xq, lng_ref[1], lnb_ref[1])
        xq = xq + _attention(hq, left, a2w_ref, a2b_ref, add_mask2, relem=relem)

        # --- sublayer4: x + FFN(LN(x))   (dropout == identity in eval mode) ---
        hq = _layernorm(xq, lng_ref[2], lnb_ref[2])
        ff = jnp.dot(hq.astype(bf16), w1_ref[...].astype(bf16),
                     preferred_element_type=f32) + b1_ref[0]
        ff = jax.nn.gelu(ff, approximate=True)
        ff = jnp.dot(ff.astype(bf16), w2_ref[...].astype(bf16),
                     preferred_element_type=f32) + b2_ref[0]
        o_ref[0] = xq + ff

    if share_self_kv:
        # One query tile per batch element: self-attention K/V come from the same
        # block as Q, so x is passed (and DMA'd) only once and can alias the output.
        def kernel(xq_ref, mask_ref, left_ref, leftmask_ref, edge_ref,
                   a1w_ref, a1b_ref, a2w_ref, a2b_ref, lng_ref, lnb_ref,
                   w1_ref, b1_ref, w2_ref, b2_ref, o_ref):
            _body(xq_ref, xq_ref, mask_ref, left_ref, leftmask_ref, edge_ref,
                  a1w_ref, a1b_ref, a2w_ref, a2b_ref, lng_ref, lnb_ref,
                  w1_ref, b1_ref, w2_ref, b2_ref, o_ref)
    else:
        def kernel(xq_ref, xf_ref, mask_ref, left_ref, leftmask_ref, edge_ref,
                   a1w_ref, a1b_ref, a2w_ref, a2b_ref, lng_ref, lnb_ref,
                   w1_ref, b1_ref, w2_ref, b2_ref, o_ref):
            _body(xq_ref, xf_ref, mask_ref, left_ref, leftmask_ref, edge_ref,
                  a1w_ref, a1b_ref, a2w_ref, a2b_ref, lng_ref, lnb_ref,
                  w1_ref, b1_ref, w2_ref, b2_ref, o_ref)

    return kernel


def graph_transformer_block(x, mask, left, leftmask, edgeem, params, *,
                            num_heads, q_tile=None):
    B, S, H = x.shape
    SL = left.shape[1]
    assert H % num_heads == 0
    DK = H // num_heads
    DFF = params["ffn_w1"].shape[1]
    assert mask.shape == (B, S, S)
    assert leftmask.shape == (B, S, SL)
    assert edgeem.shape == (B, S, SL, DK)

    # Query-tile size.  Tiling S bounds the resident edgeem / mask / FFN blocks
    # (critical for v7x's 64 MiB VMEM) and adds a second parallel grid axis.
    if q_tile is None:
        if S % 256 == 0 and S > 256:
            q_tile = 256
        elif S % 128 == 0 and S > 128:
            q_tile = 128
        else:
            q_tile = S
    TQ = q_tile
    assert S % TQ == 0 and (TQ == S or TQ % 8 == 0)
    NQ = S // TQ
    share_self_kv = NQ == 1

    kernel = _make_kernel(num_heads, DK, H, share_self_kv=share_self_kv)

    def full(shape):
        return pl.BlockSpec(shape, lambda b, q: (0,) * len(shape))

    in_specs = [pl.BlockSpec((1, TQ, H), lambda b, q: (b, q, 0))]          # x (query tile)
    in_arrays = [x]
    if not share_self_kv:
        in_specs.append(pl.BlockSpec((1, S, H), lambda b, q: (b, 0, 0)))   # x (full seq for self K/V)
        in_arrays.append(x)
    in_specs += [
        pl.BlockSpec((1, TQ, S), lambda b, q: (b, q, 0)),                  # mask
        pl.BlockSpec((1, SL, H), lambda b, q: (b, 0, 0)),                  # left
        pl.BlockSpec((1, TQ, SL), lambda b, q: (b, q, 0)),                 # leftmask
        pl.BlockSpec((1, TQ, SL, DK), lambda b, q: (b, q, 0, 0)),          # edgeem
        full((4, H, H)), full((4, H)),                                     # attn1 [Wq,Wk,Wv,Wo], b
        full((4, H, H)), full((4, H)),                                     # attn2 [Wq,Wk,Wv,Wo], b
        full((3, H)), full((3, H)),                                        # LN gammas / betas
        full((H, DFF)), full((1, DFF)),                                    # FFN W1 / b1
        full((DFF, H)), full((1, H)),                                      # FFN W2 / b2
    ]
    in_arrays += [
        mask, left, leftmask, edgeem,
        params["attn1_w"], params["attn1_b"],
        params["attn2_w"], params["attn2_b"],
        params["ln_g"], params["ln_b"],
        params["ffn_w1"], params["ffn_b1"],
        params["ffn_w2"], params["ffn_b2"],
    ]

    # VMEM budget: double-buffered per-step blocks + headroom, clamped so it is
    # valid on every generation (v7x has only 64 MiB physical VMEM per core).
    blk_elems = TQ * H * 2 + TQ * S + SL * H + TQ * SL + TQ * SL * DK
    if not share_self_kv:
        blk_elems += S * H
    blk_elems += 2 * (4 * H * H + 4 * H) + 2 * 3 * H
    blk_elems += H * DFF + DFF + DFF * H + H
    vmem_limit = int(min(max(2 * 4 * blk_elems + (8 << 20), 32 << 20), 64 << 20))

    grid_spec = pltpu.PrefetchScalarGridSpec(
        num_scalar_prefetch=0,
        grid=(B, NQ),
        in_specs=in_specs,
        out_specs=pl.BlockSpec((1, TQ, H), lambda b, q: (b, q, 0)),
    )

    return pl.pallas_call(
        kernel,
        out_shape=jax.ShapeDtypeStruct((B, S, H), jnp.float32),
        grid_spec=grid_spec,
        input_output_aliases={0: 0} if share_self_kv else {},
        compiler_params=pltpu.CompilerParams(
            dimension_semantics=("parallel", "parallel"),
            vmem_limit_bytes=vmem_limit),
    )(*in_arrays)


def init_params(key, H, DFF):
    ks = jax.random.split(key, 8)
    s = 0.05
    return {
        "attn1_w": jax.random.normal(ks[0], (4, H, H), jnp.float32) * s,
        "attn1_b": jax.random.normal(ks[1], (4, H), jnp.float32) * s,
        "attn2_w": jax.random.normal(ks[2], (4, H, H), jnp.float32) * s,
        "attn2_b": jax.random.normal(ks[3], (4, H), jnp.float32) * s,
        "ln_g": jnp.ones((3, H), jnp.float32),
        "ln_b": jnp.zeros((3, H), jnp.float32),
        "ffn_w1": jax.random.normal(ks[4], (H, DFF), jnp.float32) * s,
        "ffn_b1": jax.random.normal(ks[5], (1, DFF), jnp.float32) * s,
        "ffn_w2": jax.random.normal(ks[6], (DFF, H), jnp.float32) * s,
        "ffn_b2": jax.random.normal(ks[7], (1, H), jnp.float32) * s,
    }


def _reference(x, mask, left, leftmask, edgeem, params, *, num_heads):
    """Pure-JAX f32 reference with identical semantics (for a tolerance check)."""
    H = x.shape[-1]
    DK = H // num_heads
    scale = 1.0 / math.sqrt(DK)

    def ln(t, g, b, eps=_LN_EPS):
        mu = jnp.mean(t, axis=-1, keepdims=True)
        var = jnp.mean((t - mu) ** 2, axis=-1, keepdims=True)
        return (t - mu) * jax.lax.rsqrt(var + eps) * g + b

    def attn(qx, kvx, w, bv, m, relem=None):
        q = qx @ w[0] + bv[0]
        k = kvx @ w[1] + bv[1]
        v = kvx @ w[2] + bv[2]
        Bq, Tq, _ = q.shape
        Sk = k.shape[1]
        qh = q.reshape(Bq, Tq, num_heads, DK)
        kh = k.reshape(Bq, Sk, num_heads, DK)
        vh = v.reshape(Bq, Sk, num_heads, DK)
        s = jnp.einsum('bqhd,bkhd->bhqk', qh, kh)
        if relem is not None:
            s = s + jnp.einsum('bqhd,bqkd->bhqk', qh, relem)
        s = s * scale + jnp.where(m[:, None, :, :] == 0.0, _NEG_INF, 0.0)
        p = jax.nn.softmax(s, axis=-1)
        o = jnp.einsum('bhqk,bkhd->bqhd', p, vh)
        if relem is not None:
            o = o + jnp.einsum('bhqk,bqkd->bqhd', p, relem)
        return o.reshape(Bq, Tq, H) @ w[3] + bv[3]

    h = ln(x, params["ln_g"][0], params["ln_b"][0])
    x = x + attn(h, h, params["attn1_w"], params["attn1_b"], mask)
    h = ln(x, params["ln_g"][1], params["ln_b"][1])
    x = x + attn(h, left, params["attn2_w"], params["attn2_b"], leftmask, edgeem)
    h = ln(x, params["ln_g"][2], params["ln_b"][2])
    ff = jax.nn.gelu(h @ params["ffn_w1"] + params["ffn_b1"][0], approximate=True)
    ff = ff @ params["ffn_w2"] + params["ffn_b2"][0]
    return x + ff


if __name__ == "__main__":
    B, S, SL, H, NH, DFF = 2, 8, 8, 32, 4, 128
    DK = H // NH

    key = jax.random.PRNGKey(0)
    kx, kl, ke, km1, km2, kp = jax.random.split(key, 6)

    x = jax.random.normal(kx, (B, S, H), jnp.float32)
    left = jax.random.normal(kl, (B, SL, H), jnp.float32)
    edgeem = jax.random.normal(ke, (B, S, SL, DK), jnp.float32) * 0.1
    mask = (jax.random.uniform(km1, (B, S, S)) > 0.2).astype(jnp.float32)
    leftmask = (jax.random.uniform(km2, (B, S, SL)) > 0.2).astype(jnp.float32)
    # ensure no fully-masked rows
    mask = mask.at[:, :, 0].set(1.0)
    leftmask = leftmask.at[:, :, 0].set(1.0)

    params = init_params(kp, H, DFF)

    ref = _reference(x, mask, left, leftmask, edgeem, params, num_heads=NH)
    out = graph_transformer_block(x, mask, left, leftmask, edgeem, params, num_heads=NH)
    jax.block_until_ready(out)

    assert out.shape == (B, S, H) and out.dtype == jnp.float32
    assert bool(jnp.all(jnp.isfinite(out)))
    max_err = float(jnp.max(jnp.abs(out - ref)))
    assert max_err < 1e-1, f"kernel/reference mismatch: {max_err}"
    print("KERNEL_OK")
</pallas_src>

<mosaic_0001>
module attributes {stable_mosaic.version = 11 : i64} {
  func.func @kernel(%arg0: i32, %arg1: i32, %arg2: memref<1x8x32xf32, #tpu.memory_space<vmem>>, %arg3: memref<1x8x8xf32, #tpu.memory_space<vmem>>, %arg4: memref<1x8x32xf32, #tpu.memory_space<vmem>>, %arg5: memref<1x8x8xf32, #tpu.memory_space<vmem>>, %arg6: memref<1x8x8x8xf32, #tpu.memory_space<vmem>>, %arg7: memref<4x32x32xf32, #tpu.memory_space<vmem>>, %arg8: memref<4x32xf32, #tpu.memory_space<vmem>>, %arg9: memref<4x32x32xf32, #tpu.memory_space<vmem>>, %arg10: memref<4x32xf32, #tpu.memory_space<vmem>>, %arg11: memref<3x32xf32, #tpu.memory_space<vmem>>, %arg12: memref<3x32xf32, #tpu.memory_space<vmem>>, %arg13: memref<32x128xf32, #tpu.memory_space<vmem>>, %arg14: memref<1x128xf32, #tpu.memory_space<vmem>>, %arg15: memref<128x32xf32, #tpu.memory_space<vmem>>, %arg16: memref<1x32xf32, #tpu.memory_space<vmem>>, %arg17: memref<1x8x32xf32, #tpu.memory_space<vmem>>) attributes {dimension_semantics = [#tpu.dimension_semantics<parallel>, #tpu.dimension_semantics<parallel>], iteration_bounds = array<i64: 2, 1>, scalar_prefetch = 0 : i64, scratch_operands = 0 : i64, tpu.core_type = #tpu.core_type<tc>, window_params = [{transform_indices = @transform_0, window_bounds = array<i64: 1, 8, 32>}, {transform_indices = @transform_1, window_bounds = array<i64: 1, 8, 8>}, {transform_indices = @transform_2, window_bounds = array<i64: 1, 8, 32>}, {transform_indices = @transform_3, window_bounds = array<i64: 1, 8, 8>}, {transform_indices = @transform_4, window_bounds = array<i64: 1, 8, 8, 8>}, {pipeline_mode = #tpu.pipeline_mode<synchronous>, transform_indices = @transform_5, window_bounds = array<i64: 4, 32, 32>}, {pipeline_mode = #tpu.pipeline_mode<synchronous>, transform_indices = @transform_6, window_bounds = array<i64: 4, 32>}, {pipeline_mode = #tpu.pipeline_mode<synchronous>, transform_indices = @transform_7, window_bounds = array<i64: 4, 32, 32>}, {pipeline_mode = #tpu.pipeline_mode<synchronous>, transform_indices = @transform_8, window_bounds = array<i64: 4, 32>}, {pipeline_mode = #tpu.pipeline_mode<synchronous>, transform_indices = @transform_9, window_bounds = array<i64: 3, 32>}, {pipeline_mode = #tpu.pipeline_mode<synchronous>, transform_indices = @transform_10, window_bounds = array<i64: 3, 32>}, {pipeline_mode = #tpu.pipeline_mode<synchronous>, transform_indices = @transform_11, window_bounds = array<i64: 32, 128>}, {pipeline_mode = #tpu.pipeline_mode<synchronous>, transform_indices = @transform_12, window_bounds = array<i64: 1, 128>}, {pipeline_mode = #tpu.pipeline_mode<synchronous>, transform_indices = @transform_13, window_bounds = array<i64: 128, 32>}, {pipeline_mode = #tpu.pipeline_mode<synchronous>, transform_indices = @transform_14, window_bounds = array<i64: 1, 32>}, {transform_indices = @transform_15, window_bounds = array<i64: 1, 8, 32>}]} {
    %c0 = arith.constant 0 : index
    %c0_0 = arith.constant 0 : index
    %c0_1 = arith.constant 0 : index
    %0 = vector.load %arg2[%c0, %c0_0, %c0_1] : memref<1x8x32xf32, #tpu.memory_space<vmem>>, vector<1x8x32xf32>
    %1 = vector.shape_cast %0 : vector<1x8x32xf32> to vector<8x32xf32>
    %c0_2 = arith.constant 0 : index
    %c0_3 = arith.constant 0 : index
    %c0_4 = arith.constant 0 : index
    %2 = vector.load %arg4[%c0_2, %c0_3, %c0_4] : memref<1x8x32xf32, #tpu.memory_space<vmem>>, vector<1x8x32xf32>
    %3 = vector.shape_cast %2 : vector<1x8x32xf32> to vector<8x32xf32>
    %c0_5 = arith.constant 0 : index
    %c0_6 = arith.constant 0 : index
    %c0_7 = arith.constant 0 : index
    %c0_8 = arith.constant 0 : index
    %4 = vector.load %arg6[%c0_5, %c0_6, %c0_7, %c0_8] : memref<1x8x8x8xf32, #tpu.memory_space<vmem>>, vector<1x8x8x8xf32>
    %5 = vector.shape_cast %4 : vector<1x8x8x8xf32> to vector<8x8x8xf32>
    %c0_9 = arith.constant 0 : index
    %c0_10 = arith.constant 0 : index
    %c0_11 = arith.constant 0 : index
    %6 = vector.load %arg3[%c0_9, %c0_10, %c0_11] : memref<1x8x8xf32, #tpu.memory_space<vmem>>, vector<1x8x8xf32>
    %7 = vector.shape_cast %6 : vector<1x8x8xf32> to vector<8x8xf32>
    %cst = arith.constant 0.000000e+00 : f32
    %8 = vector.broadcast %cst : f32 to vector<8x8xf32>
    %9 = arith.cmpf oeq, %7, %8 : vector<8x8xf32>
    %cst_12 = arith.constant -1.000000e+09 : f32
    %cst_13 = arith.constant 0.000000e+00 : f32
    %10 = vector.broadcast %cst_12 : f32 to vector<8x8xf32>
    %11 = vector.broadcast %cst_13 : f32 to vector<8x8xf32>
    %12 = arith.select %9, %10, %11 : vector<8x8xi1>, vector<8x8xf32>
    %c0_14 = arith.constant 0 : index
    %c0_15 = arith.constant 0 : index
    %c0_16 = arith.constant 0 : index
    %13 = vector.load %arg5[%c0_14, %c0_15, %c0_16] : memref<1x8x8xf32, #tpu.memory_space<vmem>>, vector<1x8x8xf32>
    %14 = vector.shape_cast %13 : vector<1x8x8xf32> to vector<8x8xf32>
    %cst_17 = arith.constant 0.000000e+00 : f32
    %15 = vector.broadcast %cst_17 : f32 to vector<8x8xf32>
    %16 = arith.cmpf oeq, %14, %15 : vector<8x8xf32>
    %cst_18 = arith.constant -1.000000e+09 : f32
    %cst_19 = arith.constant 0.000000e+00 : f32
    %17 = vector.broadcast %cst_18 : f32 to vector<8x8xf32>
    %18 = vector.broadcast %cst_19 : f32 to vector<8x8xf32>
    %19 = arith.select %16, %17, %18 : vector<8x8xi1>, vector<8x8xf32>
    %c0_20 = arith.constant 0 : index
    %c0_21 = arith.constant 0 : index
    %20 = vector.load %arg11[%c0_20, %c0_21] : memref<3x32xf32, #tpu.memory_space<vmem>>, vector<1x32xf32>
    %21 = vector.shape_cast %20 : vector<1x32xf32> to vector<32xf32>
    %c0_22 = arith.constant 0 : index
    %c0_23 = arith.constant 0 : index
    %22 = vector.load %arg12[%c0_22, %c0_23] : memref<3x32xf32, #tpu.memory_space<vmem>>, vector<1x32xf32>
    %23 = vector.shape_cast %22 : vector<1x32xf32> to vector<32xf32>
    %cst_24 = arith.constant dense<0.000000e+00> : vector<8xf32>
    %24 = vector.multi_reduction <add>, %1, %cst_24 [1] : vector<8x32xf32> to vector<8xf32>
    %25 = vector.shape_cast %24 : vector<8xf32> to vector<8x1xf32>
    %cst_25 = arith.constant 3.200000e+01 : f32
    %26 = vector.broadcast %cst_25 : f32 to vector<8x1xf32>
    %27 = arith.divf %25, %26 : vector<8x1xf32>
    %28 = vector.broadcast %27 : vector<8x1xf32> to vector<8x32xf32>
    %29 = arith.subf %1, %28 : vector<8x32xf32>
    %30 = arith.mulf %29, %29 : vector<8x32xf32>
    %cst_26 = arith.constant dense<0.000000e+00> : vector<8xf32>
    %31 = vector.multi_reduction <add>, %30, %cst_26 [1] : vector<8x32xf32> to vector<8xf32>
    %32 = vector.shape_cast %31 : vector<8xf32> to vector<8x1xf32>
    %cst_27 = arith.constant 3.200000e+01 : f32
    %33 = vector.broadcast %cst_27 : f32 to vector<8x1xf32>
    %34 = arith.divf %32, %33 : vector<8x1xf32>
    %35 = vector.broadcast %27 : vector<8x1xf32> to vector<8x32xf32>
    %36 = arith.subf %1, %35 : vector<8x32xf32>
    %cst_28 = arith.constant 9.99999997E-7 : f32
    %37 = vector.broadcast %cst_28 : f32 to vector<8x1xf32>
    %38 = arith.addf %34, %37 : vector<8x1xf32>
    %39 = math.rsqrt %38 : vector<8x1xf32>
    %40 = vector.broadcast %39 : vector<8x1xf32> to vector<8x32xf32>
    %41 = arith.mulf %36, %40 : vector<8x32xf32>
    %42 = vector.shape_cast %21 : vector<32xf32> to vector<1x32xf32>
    %43 = vector.broadcast %42 : vector<1x32xf32> to vector<8x32xf32>
    %44 = arith.mulf %41, %43 : vector<8x32xf32>
    %45 = vector.shape_cast %23 : vector<32xf32> to vector<1x32xf32>
    %46 = vector.broadcast %45 : vector<1x32xf32> to vector<8x32xf32>
    %47 = arith.addf %44, %46 : vector<8x32xf32>
    %48 = arith.truncf %47 : vector<8x32xf32> to vector<8x32xbf16>
    %c0_29 = arith.constant 0 : index
    %c0_30 = arith.constant 0 : index
    %c0_31 = arith.constant 0 : index
    %49 = vector.load %arg7[%c0_29, %c0_30, %c0_31] : memref<4x32x32xf32, #tpu.memory_space<vmem>>, vector<1x32x32xf32>
    %50 = vector.shape_cast %49 : vector<1x32x32xf32> to vector<32x32xf32>
    %51 = arith.truncf %50 : vector<32x32xf32> to vector<32x32xbf16>
    %cst_32 = arith.constant dense<0.000000e+00> : vector<8x32xf32>
    %52 = tpu.matmul %48, %51, %cst_32 {dimension_numbers = #tpu.dot_dimension_numbers<[1], [0], [0], [1], [0, 0, 1, 1], [], []>} : vector<8x32xbf16>, vector<32x32xbf16>, vector<8x32xf32> -> vector<8x32xf32>
    %c0_33 = arith.constant 0 : index
    %c0_34 = arith.constant 0 : index
    %53 = vector.load %arg8[%c0_33, %c0_34] : memref<4x32xf32, #tpu.memory_space<vmem>>, vector<1x32xf32>
    %54 = vector.shape_cast %53 : vector<1x32xf32> to vector<32xf32>
    %55 = vector.shape_cast %54 : vector<32xf32> to vector<1x32xf32>
    %56 = vector.broadcast %55 : vector<1x32xf32> to vector<8x32xf32>
    %57 = arith.addf %52, %56 : vector<8x32xf32>
    %58 = arith.truncf %47 : vector<8x32xf32> to vector<8x32xbf16>
    %c1 = arith.constant 1 : index
    %c0_35 = arith.constant 0 : index
    %c0_36 = arith.constant 0 : index
    %59 = vector.load %arg7[%c1, %c0_35, %c0_36] : memref<4x32x32xf32, #tpu.memory_space<vmem>>, vector<1x32x32xf32>
    %60 = vector.shape_cast %59 : vector<1x32x32xf32> to vector<32x32xf32>
    %61 = arith.truncf %60 : vector<32x32xf32> to vector<32x32xbf16>
    %cst_37 = arith.constant dense<0.000000e+00> : vector<8x32xf32>
    %62 = tpu.matmul %58, %61, %cst_37 {dimension_numbers = #tpu.dot_dimension_numbers<[1], [0], [0], [1], [0, 0, 1, 1], [], []>} : vector<8x32xbf16>, vector<32x32xbf16>, vector<8x32xf32> -> vector<8x32xf32>
    %c1_38 = arith.constant 1 : index
    %c0_39 = arith.constant 0 : index
    %63 = vector.load %arg8[%c1_38, %c0_39] : memref<4x32xf32, #tpu.memory_space<vmem>>, vector<1x32xf32>
    %64 = vector.shape_cast %63 : vector<1x32xf32> to vector<32xf32>
    %65 = vector.shape_cast %64 : vector<32xf32> to vector<1x32xf32>
    %66 = vector.broadcast %65 : vector<1x32xf32> to vector<8x32xf32>
    %67 = arith.addf %62, %66 : vector<8x32xf32>
    %68 = arith.truncf %47 : vector<8x32xf32> to vector<8x32xbf16>
    %c2 = arith.constant 2 : index
    %c0_40 = arith.constant 0 : index
    %c0_41 = arith.constant 0 : index
    %69 = vector.load %arg7[%c2, %c0_40, %c0_41] : memref<4x32x32xf32, #tpu.memory_space<vmem>>, vector<1x32x32xf32>
    %70 = vector.shape_cast %69 : vector<1x32x32xf32> to vector<32x32xf32>
    %71 = arith.truncf %70 : vector<32x32xf32> to vector<32x32xbf16>
    %cst_42 = arith.constant dense<0.000000e+00> : vector<8x32xf32>
    %72 = tpu.matmul %68, %71, %cst_42 {dimension_numbers = #tpu.dot_dimension_numbers<[1], [0], [0], [1], [0, 0, 1, 1], [], []>} : vector<8x32xbf16>, vector<32x32xbf16>, vector<8x32xf32> -> vector<8x32xf32>
    %c2_43 = arith.constant 2 : index
    %c0_44 = arith.constant 0 : index
    %73 = vector.load %arg8[%c2_43, %c0_44] : memref<4x32xf32, #tpu.memory_space<vmem>>, vector<1x32xf32>
    %74 = vector.shape_cast %73 : vector<1x32xf32> to vector<32xf32>
    %75 = vector.shape_cast %74 : vector<32xf32> to vector<1x32xf32>
    %76 = vector.broadcast %75 : vector<1x32xf32> to vector<8x32xf32>
    %77 = arith.addf %72, %76 : vector<8x32xf32>
    %78 = vector.extract_strided_slice %57 {offsets = [0, 0], sizes = [8, 8], strides = [1, 1]} : vector<8x32xf32> to vector<8x8xf32>
    %79 = vector.extract_strided_slice %57 {offsets = [0, 8], sizes = [8, 8], strides = [1, 1]} : vector<8x32xf32> to vector<8x8xf32>
    %80 = vector.extract_strided_slice %57 {offsets = [0, 16], sizes = [8, 8], strides = [1, 1]} : vector<8x32xf32> to vector<8x8xf32>
    %81 = vector.extract_strided_slice %57 {offsets = [0, 24], sizes = [8, 8], strides = [1, 1]} : vector<8x32xf32> to vector<8x8xf32>
    %82 = vector.shape_cast %78 : vector<8x8xf32> to vector<1x8x8xf32>
    %83 = vector.shape_cast %79 : vector<8x8xf32> to vector<1x8x8xf32>
    %84 = vector.shape_cast %80 : vector<8x8xf32> to vector<1x8x8xf32>
    %85 = vector.shape_cast %81 : vector<8x8xf32> to vector<1x8x8xf32>
    %86 = tpu.concatenate %82, %83, %84, %85 in 0 : vector<1x8x8xf32>, vector<1x8x8xf32>, vector<1x8x8xf32>, vector<1x8x8xf32> -> vector<4x8x8xf32>
    %87 = vector.extract_strided_slice %67 {offsets = [0, 0], sizes = [8, 8], strides = [1, 1]} : vector<8x32xf32> to vector<8x8xf32>
    %88 = vector.extract_strided_slice %67 {offsets = [0, 8], sizes = [8, 8], strides = [1, 1]} : vector<8x32xf32> to vector<8x8xf32>
    %89 = vector.extract_strided_slice %67 {offsets = [0, 16], sizes = [8, 8], strides = [1, 1]} : vector<8x32xf32> to vector<8x8xf32>
    %90 = vector.extract_strided_slice %67 {offsets = [0, 24], sizes = [8, 8], strides = [1, 1]} : vector<8x32xf32> to vector<8x8xf32>
    %91 = vector.shape_cast %87 : vector<8x8xf32> to vector<1x8x8xf32>
    %92 = vector.shape_cast %88 : vector<8x8xf32> to vector<1x8x8xf32>
    %93 = vector.shape_cast %89 : vector<8x8xf32> to vector<1x8x8xf32>
    %94 = vector.shape_cast %90 : vector<8x8xf32> to vector<1x8x8xf32>
    %95 = tpu.concatenate %91, %92, %93, %94 in 0 : vector<1x8x8xf32>, vector<1x8x8xf32>, vector<1x8x8xf32>, vector<1x8x8xf32> -> vector<4x8x8xf32>
    %96 = vector.extract_strided_slice %77 {offsets = [0, 0], sizes = [8, 8], strides = [1, 1]} : vector<8x32xf32> to vector<8x8xf32>
    %97 = vector.extract_strided_slice %77 {offsets = [0, 8], sizes = [8, 8], strides = [1, 1]} : vector<8x32xf32> to vector<8x8xf32>
    %98 = vector.extract_strided_slice %77 {offsets = [0, 16], sizes = [8, 8], strides = [1, 1]} : vector<8x32xf32> to vector<8x8xf32>
    %99 = vector.extract_strided_slice %77 {offsets = [0, 24], sizes = [8, 8], strides = [1, 1]} : vector<8x32xf32> to vector<8x8xf32>
    %100 = vector.shape_cast %96 : vector<8x8xf32> to vector<1x8x8xf32>
    %101 = vector.shape_cast %97 : vector<8x8xf32> to vector<1x8x8xf32>
    %102 = vector.shape_cast %98 : vector<8x8xf32> to vector<1x8x8xf32>
    %103 = vector.shape_cast %99 : vector<8x8xf32> to vector<1x8x8xf32>
    %104 = tpu.concatenate %100, %101, %102, %103 in 0 : vector<1x8x8xf32>, vector<1x8x8xf32>, vector<1x8x8xf32>, vector<1x8x8xf32> -> vector<4x8x8xf32>
    %105 = arith.truncf %86 : vector<4x8x8xf32> to vector<4x8x8xbf16>
    %106 = arith.truncf %95 : vector<4x8x8xf32> to vector<4x8x8xbf16>
    "tpu.trace_start"() <{level = 10 : i32, message = "hqd,hkd->hqk"}> : () -> ()
    %cst_45 = arith.constant dense<0.000000e+00> : vector<4x8x8xf32>
    %107 = tpu.matmul %105, %106, %cst_45 {dimension_numbers = #tpu.dot_dimension_numbers<[2], [2], [1], [1], [0, 0, 0, 1, 1, 1], [0], [0]>} : vector<4x8x8xbf16>, vector<4x8x8xbf16>, vector<4x8x8xf32> -> vector<4x8x8xf32>
    "tpu.trace_stop"() : () -> ()
    %cst_46 = arith.constant 0.353553385 : f32
    %108 = vector.broadcast %cst_46 : f32 to vector<4x8x8xf32>
    %109 = arith.mulf %107, %108 : vector<4x8x8xf32>
    %110 = vector.shape_cast %12 : vector<8x8xf32> to vector<1x8x8xf32>
    %111 = vector.broadcast %110 : vector<1x8x8xf32> to vector<4x8x8xf32>
    %112 = arith.addf %109, %111 : vector<4x8x8xf32>
    %cst_47 = arith.constant dense<0xFF800000> : vector<4x8xf32>
    %113 = vector.multi_reduction <maximumf>, %112, %cst_47 [2] : vector<4x8x8xf32> to vector<4x8xf32>
    %114 = vector.shape_cast %113 : vector<4x8xf32> to vector<4x8x1xf32>
    %115 = vector.broadcast %114 : vector<4x8x1xf32> to vector<4x8x8xf32>
    %116 = arith.subf %112, %115 : vector<4x8x8xf32>
    %117 = math.exp %116 : vector<4x8x8xf32>
    %cst_48 = arith.constant dense<0.000000e+00> : vector<4x8xf32>
    %118 = vector.multi_reduction <add>, %117, %cst_48 [2] : vector<4x8x8xf32> to vector<4x8xf32>
    %119 = vector.shape_cast %118 : vector<4x8xf32> to vector<4x8x1xf32>
    %120 = tpu.reciprocal %119 {approx = true} : vector<4x8x1xf32> -> vector<4x8x1xf32>
    %121 = vector.broadcast %120 : vector<4x8x1xf32> to vector<4x8x8xf32>
    %122 = arith.mulf %117, %121 : vector<4x8x8xf32>
    %123 = arith.truncf %122 : vector<4x8x8xf32> to vector<4x8x8xbf16>
    %124 = arith.truncf %104 : vector<4x8x8xf32> to vector<4x8x8xbf16>
    "tpu.trace_start"() <{level = 10 : i32, message = "hqk,hkd->hqd"}> : () -> ()
    %cst_49 = arith.constant dense<0.000000e+00> : vector<4x8x8xf32>
    %125 = tpu.matmul %123, %124, %cst_49 {dimension_numbers = #tpu.dot_dimension_numbers<[2], [1], [1], [2], [0, 0, 0, 1, 1, 2], [0], [0]>} : vector<4x8x8xbf16>, vector<4x8x8xbf16>, vector<4x8x8xf32> -> vector<4x8x8xf32>
    "tpu.trace_stop"() : () -> ()
    %126 = vector.extract_strided_slice %125 {offsets = [0, 0, 0], sizes = [1, 8, 8], strides = [1, 1, 1]} : vector<4x8x8xf32> to vector<1x8x8xf32>
    %127 = vector.shape_cast %126 : vector<1x8x8xf32> to vector<8x8xf32>
    %128 = vector.extract_strided_slice %125 {offsets = [1, 0, 0], sizes = [1, 8, 8], strides = [1, 1, 1]} : vector<4x8x8xf32> to vector<1x8x8xf32>
    %129 = vector.shape_cast %128 : vector<1x8x8xf32> to vector<8x8xf32>
    %130 = vector.extract_strided_slice %125 {offsets = [2, 0, 0], sizes = [1, 8, 8], strides = [1, 1, 1]} : vector<4x8x8xf32> to vector<1x8x8xf32>
    %131 = vector.shape_cast %130 : vector<1x8x8xf32> to vector<8x8xf32>
    %132 = vector.extract_strided_slice %125 {offsets = [3, 0, 0], sizes = [1, 8, 8], strides = [1, 1, 1]} : vector<4x8x8xf32> to vector<1x8x8xf32>
    %133 = vector.shape_cast %132 : vector<1x8x8xf32> to vector<8x8xf32>
    %134 = tpu.concatenate %127, %129, %131, %133 in 1 : vector<8x8xf32>, vector<8x8xf32>, vector<8x8xf32>, vector<8x8xf32> -> vector<8x32xf32>
    %135 = arith.truncf %134 : vector<8x32xf32> to vector<8x32xbf16>
    %c3 = arith.constant 3 : index
    %c0_50 = arith.constant 0 : index
    %c0_51 = arith.constant 0 : index
    %136 = vector.load %arg7[%c3, %c0_50, %c0_51] : memref<4x32x32xf32, #tpu.memory_space<vmem>>, vector<1x32x32xf32>
    %137 = vector.shape_cast %136 : vector<1x32x32xf32> to vector<32x32xf32>
    %138 = arith.truncf %137 : vector<32x32xf32> to vector<32x32xbf16>
    %cst_52 = arith.constant dense<0.000000e+00> : vector<8x32xf32>
    %139 = tpu.matmul %135, %138, %cst_52 {dimension_numbers = #tpu.dot_dimension_numbers<[1], [0], [0], [1], [0, 0, 1, 1], [], []>} : vector<8x32xbf16>, vector<32x32xbf16>, vector<8x32xf32> -> vector<8x32xf32>
    %c3_53 = arith.constant 3 : index
    %c0_54 = arith.constant 0 : index
    %140 = vector.load %arg8[%c3_53, %c0_54] : memref<4x32xf32, #tpu.memory_space<vmem>>, vector<1x32xf32>
    %141 = vector.shape_cast %140 : vector<1x32xf32> to vector<32xf32>
    %142 = vector.shape_cast %141 : vector<32xf32> to vector<1x32xf32>
    %143 = vector.broadcast %142 : vector<1x32xf32> to vector<8x32xf32>
    %144 = arith.addf %139, %143 : vector<8x32xf32>
    %145 = arith.addf %1, %144 : vector<8x32xf32>
    %c1_55 = arith.constant 1 : index
    %c0_56 = arith.constant 0 : index
    %146 = vector.load %arg11[%c1_55, %c0_56] : memref<3x32xf32, #tpu.memory_space<vmem>>, vector<1x32xf32>
    %147 = vector.shape_cast %146 : vector<1x32xf32> to vector<32xf32>
    %c1_57 = arith.constant 1 : index
    %c0_58 = arith.constant 0 : index
    %148 = vector.load %arg12[%c1_57, %c0_58] : memref<3x32xf32, #tpu.memory_space<vmem>>, vector<1x32xf32>
    %149 = vector.shape_cast %148 : vector<1x32xf32> to vector<32xf32>
    %cst_59 = arith.constant dense<0.000000e+00> : vector<8xf32>
    %150 = vector.multi_reduction <add>, %145, %cst_59 [1] : vector<8x32xf32> to vector<8xf32>
    %151 = vector.shape_cast %150 : vector<8xf32> to vector<8x1xf32>
    %cst_60 = arith.constant 3.200000e+01 : f32
    %152 = vector.broadcast %cst_60 : f32 to vector<8x1xf32>
    %153 = arith.divf %151, %152 : vector<8x1xf32>
    %154 = vector.broadcast %153 : vector<8x1xf32> to vector<8x32xf32>
    %155 = arith.subf %145, %154 : vector<8x32xf32>
    %156 = arith.mulf %155, %155 : vector<8x32xf32>
    %cst_61 = arith.constant dense<0.000000e+00> : vector<8xf32>
    %157 = vector.multi_reduction <add>, %156, %cst_61 [1] : vector<8x32xf32> to vector<8xf32>
    %158 = vector.shape_cast %157 : vector<8xf32> to vector<8x1xf32>
    %cst_62 = arith.constant 3.200000e+01 : f32
    %159 = vector.broadcast %cst_62 : f32 to vector<8x1xf32>
    %160 = arith.divf %158, %159 : vector<8x1xf32>
    %161 = vector.broadcast %153 : vector<8x1xf32> to vector<8x32xf32>
    %162 = arith.subf %145, %161 : vector<8x32xf32>
    %cst_63 = arith.constant 9.99999997E-7 : f32
    %163 = vector.broadcast %cst_63 : f32 to vector<8x1xf32>
    %164 = arith.addf %160, %163 : vector<8x1xf32>
    %165 = math.rsqrt %164 : vector<8x1xf32>
    %166 = vector.broadcast %165 : vector<8x1xf32> to vector<8x32xf32>
    %167 = arith.mulf %162, %166 : vector<8x32xf32>
    %168 = vector.shape_cast %147 : vector<32xf32> to vector<1x32xf32>
    %169 = vector.broadcast %168 : vector<1x32xf32> to vector<8x32xf32>
    %170 = arith.mulf %167, %169 : vector<8x32xf32>
    %171 = vector.shape_cast %149 : vector<32xf32> to vector<1x32xf32>
    %172 = vector.broadcast %171 : vector<1x32xf32> to vector<8x32xf32>
    %173 = arith.addf %170, %172 : vector<8x32xf32>
    %174 = arith.truncf %173 : vector<8x32xf32> to vector<8x32xbf16>
    %c0_64 = arith.constant 0 : index
    %c0_65 = arith.constant 0 : index
    %c0_66 = arith.constant 0 : index
    %175 = vector.load %arg9[%c0_64, %c0_65, %c0_66] : memref<4x32x32xf32, #tpu.memory_space<vmem>>, vector<1x32x32xf32>
    %176 = vector.shape_cast %175 : vector<1x32x32xf32> to vector<32x32xf32>
    %177 = arith.truncf %176 : vector<32x32xf32> to vector<32x32xbf16>
    %cst_67 = arith.constant dense<0.000000e+00> : vector<8x32xf32>
    %178 = tpu.matmul %174, %177, %cst_67 {dimension_numbers = #tpu.dot_dimension_numbers<[1], [0], [0], [1], [0, 0, 1, 1], [], []>} : vector<8x32xbf16>, vector<32x32xbf16>, vector<8x32xf32> -> vector<8x32xf32>
    %c0_68 = arith.constant 0 : index
    %c0_69 = arith.constant 0 : index
    %179 = vector.load %arg10[%c0_68, %c0_69] : memref<4x32xf32, #tpu.memory_space<vmem>>, vector<1x32xf32>
    %180 = vector.shape_cast %179 : vector<1x32xf32> to vector<32xf32>
    %181 = vector.shape_cast %180 : vector<32xf32> to vector<1x32xf32>
    %182 = vector.broadcast %181 : vector<1x32xf32> to vector<8x32xf32>
    %183 = arith.addf %178, %182 : vector<8x32xf32>
    %184 = arith.truncf %3 : vector<8x32xf32> to vector<8x32xbf16>
    %c1_70 = arith.constant 1 : index
    %c0_71 = arith.constant 0 : index
    %c0_72 = arith.constant 0 : index
    %185 = vector.load %arg9[%c1_70, %c0_71, %c0_72] : memref<4x32x32xf32, #tpu.memory_space<vmem>>, vector<1x32x32xf32>
    %186 = vector.shape_cast %185 : vector<1x32x32xf32> to vector<32x32xf32>
    %187 = arith.truncf %186 : vector<32x32xf32> to vector<32x32xbf16>
    %cst_73 = arith.constant dense<0.000000e+00> : vector<8x32xf32>
    %188 = tpu.matmul %184, %187, %cst_73 {dimension_numbers = #tpu.dot_dimension_numbers<[1], [0], [0], [1], [0, 0, 1, 1], [], []>} : vector<8x32xbf16>, vector<32x32xbf16>, vector<8x32xf32> -> vector<8x32xf32>
    %c1_74 = arith.constant 1 : index
    %c0_75 = arith.constant 0 : index
    %189 = vector.load %arg10[%c1_74, %c0_75] : memref<4x32xf32, #tpu.memory_space<vmem>>, vector<1x32xf32>
    %190 = vector.shape_cast %189 : vector<1x32xf32> to vector<32xf32>
    %191 = vector.shape_cast %190 : vector<32xf32> to vector<1x32xf32>
    %192 = vector.broadcast %191 : vector<1x32xf32> to vector<8x32xf32>
    %193 = arith.addf %188, %192 : vector<8x32xf32>
    %194 = arith.truncf %3 : vector<8x32xf32> to vector<8x32xbf16>
    %c2_76 = arith.constant 2 : index
    %c0_77 = arith.constant 0 : index
    %c0_78 = arith.constant 0 : index
    %195 = vector.load %arg9[%c2_76, %c0_77, %c0_78] : memref<4x32x32xf32, #tpu.memory_space<vmem>>, vector<1x32x32xf32>
    %196 = vector.shape_cast %195 : vector<1x32x32xf32> to vector<32x32xf32>
    %197 = arith.truncf %196 : vector<32x32xf32> to vector<32x32xbf16>
    %cst_79 = arith.constant dense<0.000000e+00> : vector<8x32xf32>
    %198 = tpu.matmul %194, %197, %cst_79 {dimension_numbers = #tpu.dot_dimension_numbers<[1], [0], [0], [1], [0, 0, 1, 1], [], []>} : vector<8x32xbf16>, vector<32x32xbf16>, vector<8x32xf32> -> vector<8x32xf32>
    %c2_80 = arith.constant 2 : index
    %c0_81 = arith.constant 0 : index
    %199 = vector.load %arg10[%c2_80, %c0_81] : memref<4x32xf32, #tpu.memory_space<vmem>>, vector<1x32xf32>
    %200 = vector.shape_cast %199 : vector<1x32xf32> to vector<32xf32>
    %201 = vector.shape_cast %200 : vector<32xf32> to vector<1x32xf32>
    %202 = vector.broadcast %201 : vector<1x32xf32> to vector<8x32xf32>
    %203 = arith.addf %198, %202 : vector<8x32xf32>
    %204 = vector.extract_strided_slice %183 {offsets = [0, 0], sizes = [8, 8], strides = [1, 1]} : vector<8x32xf32> to vector<8x8xf32>
    %205 = vector.extract_strided_slice %183 {offsets = [0, 8], sizes = [8, 8], strides = [1, 1]} : vector<8x32xf32> to vector<8x8xf32>
    %206 = vector.extract_strided_slice %183 {offsets = [0, 16], sizes = [8, 8], strides = [1, 1]} : vector<8x32xf32> to vector<8x8xf32>
    %207 = vector.extract_strided_slice %183 {offsets = [0, 24], sizes = [8, 8], strides = [1, 1]} : vector<8x32xf32> to vector<8x8xf32>
    %208 = vector.shape_cast %204 : vector<8x8xf32> to vector<1x8x8xf32>
    %209 = vector.shape_cast %205 : vector<8x8xf32> to vector<1x8x8xf32>
    %210 = vector.shape_cast %206 : vector<8x8xf32> to vector<1x8x8xf32>
    %211 = vector.shape_cast %207 : vector<8x8xf32> to vector<1x8x8xf32>
    %212 = tpu.concatenate %208, %209, %210, %211 in 0 : vector<1x8x8xf32>, vector<1x8x8xf32>, vector<1x8x8xf32>, vector<1x8x8xf32> -> vector<4x8x8xf32>
    %213 = vector.extract_strided_slice %193 {offsets = [0, 0], sizes = [8, 8], strides = [1, 1]} : vector<8x32xf32> to vector<8x8xf32>
    %214 = vector.extract_strided_slice %193 {offsets = [0, 8], sizes = [8, 8], strides = [1, 1]} : vector<8x32xf32> to vector<8x8xf32>
    %215 = vector.extract_strided_slice %193 {offsets = [0, 16], sizes = [8, 8], strides = [1, 1]} : vector<8x32xf32> to vector<8x8xf32>
    %216 = vector.extract_strided_slice %193 {offsets = [0, 24], sizes = [8, 8], strides = [1, 1]} : vector<8x32xf32> to vector<8x8xf32>
    %217 = vector.shape_cast %213 : vector<8x8xf32> to vector<1x8x8xf32>
    %218 = vector.shape_cast %214 : vector<8x8xf32> to vector<1x8x8xf32>
    %219 = vector.shape_cast %215 : vector<8x8xf32> to vector<1x8x8xf32>
    %220 = vector.shape_cast %216 : vector<8x8xf32> to vector<1x8x8xf32>
    %221 = tpu.concatenate %217, %218, %219, %220 in 0 : vector<1x8x8xf32>, vector<1x8x8xf32>, vector<1x8x8xf32>, vector<1x8x8xf32> -> vector<4x8x8xf32>
    %222 = vector.extract_strided_slice %203 {offsets = [0, 0], sizes = [8, 8], strides = [1, 1]} : vector<8x32xf32> to vector<8x8xf32>
    %223 = vector.extract_strided_slice %203 {offsets = [0, 8], sizes = [8, 8], strides = [1, 1]} : vector<8x32xf32> to vector<8x8xf32>
    %224 = vector.extract_strided_slice %203 {offsets = [0, 16], sizes = [8, 8], strides = [1, 1]} : vector<8x32xf32> to vector<8x8xf32>
    %225 = vector.extract_strided_slice %203 {offsets = [0, 24], sizes = [8, 8], strides = [1, 1]} : vector<8x32xf32> to vector<8x8xf32>
    %226 = vector.shape_cast %222 : vector<8x8xf32> to vector<1x8x8xf32>
    %227 = vector.shape_cast %223 : vector<8x8xf32> to vector<1x8x8xf32>
    %228 = vector.shape_cast %224 : vector<8x8xf32> to vector<1x8x8xf32>
    %229 = vector.shape_cast %225 : vector<8x8xf32> to vector<1x8x8xf32>
    %230 = tpu.concatenate %226, %227, %228, %229 in 0 : vector<1x8x8xf32>, vector<1x8x8xf32>, vector<1x8x8xf32>, vector<1x8x8xf32> -> vector<4x8x8xf32>
    %231 = arith.truncf %212 : vector<4x8x8xf32> to vector<4x8x8xbf16>
    %232 = arith.truncf %221 : vector<4x8x8xf32> to vector<4x8x8xbf16>
    "tpu.trace_start"() <{level = 10 : i32, message = "hqd,hkd->hqk"}> : () -> ()
    %cst_82 = arith.constant dense<0.000000e+00> : vector<4x8x8xf32>
    %233 = tpu.matmul %231, %232, %cst_82 {dimension_numbers = #tpu.dot_dimension_numbers<[2], [2], [1], [1], [0, 0, 0, 1, 1, 1], [0], [0]>} : vector<4x8x8xbf16>, vector<4x8x8xbf16>, vector<4x8x8xf32> -> vector<4x8x8xf32>
    "tpu.trace_stop"() : () -> ()
    %234 = arith.truncf %5 : vector<8x8x8xf32> to vector<8x8x8xbf16>
    %235 = tpu.transpose %212, [1, 0, 2] : vector<4x8x8xf32> -> vector<8x4x8xf32>
    %236 = arith.truncf %235 : vector<8x4x8xf32> to vector<8x4x8xbf16>
    "tpu.trace_start"() <{level = 10 : i32, message = "qhd,qkd->qhk"}> : () -> ()
    %cst_83 = arith.constant dense<0.000000e+00> : vector<8x4x8xf32>
    %237 = tpu.matmul %236, %234, %cst_83 {dimension_numbers = #tpu.dot_dimension_numbers<[2], [2], [1], [1], [0, 0, 0, 1, 1, 1], [0], [0]>} : vector<8x4x8xbf16>, vector<8x8x8xbf16>, vector<8x4x8xf32> -> vector<8x4x8xf32>
    "tpu.trace_stop"() : () -> ()
    %238 = tpu.transpose %237, [1, 0, 2] : vector<8x4x8xf32> -> vector<4x8x8xf32>
    %239 = arith.addf %233, %238 : vector<4x8x8xf32>
    %cst_84 = arith.constant 0.353553385 : f32
    %240 = vector.broadcast %cst_84 : f32 to vector<4x8x8xf32>
    %241 = arith.mulf %239, %240 : vector<4x8x8xf32>
    %242 = vector.shape_cast %19 : vector<8x8xf32> to vector<1x8x8xf32>
    %243 = vector.broadcast %242 : vector<1x8x8xf32> to vector<4x8x8xf32>
    %244 = arith.addf %241, %243 : vector<4x8x8xf32>
    %cst_85 = arith.constant dense<0xFF800000> : vector<4x8xf32>
    %245 = vector.multi_reduction <maximumf>, %244, %cst_85 [2] : vector<4x8x8xf32> to vector<4x8xf32>
    %246 = vector.shape_cast %245 : vector<4x8xf32> to vector<4x8x1xf32>
    %247 = vector.broadcast %246 : vector<4x8x1xf32> to vector<4x8x8xf32>
    %248 = arith.subf %244, %247 : vector<4x8x8xf32>
    %249 = math.exp %248 : vector<4x8x8xf32>
    %cst_86 = arith.constant dense<0.000000e+00> : vector<4x8xf32>
    %250 = vector.multi_reduction <add>, %249, %cst_86 [2] : vector<4x8x8xf32> to vector<4x8xf32>
    %251 = vector.shape_cast %250 : vector<4x8xf32> to vector<4x8x1xf32>
    %252 = tpu.reciprocal %251 {approx = true} : vector<4x8x1xf32> -> vector<4x8x1xf32>
    %253 = vector.broadcast %252 : vector<4x8x1xf32> to vector<4x8x8xf32>
    %254 = arith.mulf %249, %253 : vector<4x8x8xf32>
    %255 = arith.truncf %254 : vector<4x8x8xf32> to vector<4x8x8xbf16>
    %256 = arith.truncf %230 : vector<4x8x8xf32> to vector<4x8x8xbf16>
    "tpu.trace_start"() <{level = 10 : i32, message = "hqk,hkd->hqd"}> : () -> ()
    %cst_87 = arith.constant dense<0.000000e+00> : vector<4x8x8xf32>
    %257 = tpu.matmul %255, %256, %cst_87 {dimension_numbers = #tpu.dot_dimension_numbers<[2], [1], [1], [2], [0, 0, 0, 1, 1, 2], [0], [0]>} : vector<4x8x8xbf16>, vector<4x8x8xbf16>, vector<4x8x8xf32> -> vector<4x8x8xf32>
    "tpu.trace_stop"() : () -> ()
    %258 = tpu.transpose %254, [1, 0, 2] : vector<4x8x8xf32> -> vector<8x4x8xf32>
    %259 = arith.truncf %258 : vector<8x4x8xf32> to vector<8x4x8xbf16>
    "tpu.trace_start"() <{level = 10 : i32, message = "qhk,qkd->qhd"}> : () -> ()
    %cst_88 = arith.constant dense<0.000000e+00> : vector<8x4x8xf32>
    %260 = tpu.matmul %259, %234, %cst_88 {dimension_numbers = #tpu.dot_dimension_numbers<[2], [1], [1], [2], [0, 0, 0, 1, 1, 2], [0], [0]>} : vector<8x4x8xbf16>, vector<8x8x8xbf16>, vector<8x4x8xf32> -> vector<8x4x8xf32>
    "tpu.trace_stop"() : () -> ()
    %261 = tpu.transpose %260, [1, 0, 2] : vector<8x4x8xf32> -> vector<4x8x8xf32>
    %262 = arith.addf %257, %261 : vector<4x8x8xf32>
    %263 = vector.extract_strided_slice %262 {offsets = [0, 0, 0], sizes = [1, 8, 8], strides = [1, 1, 1]} : vector<4x8x8xf32> to vector<1x8x8xf32>
    %264 = vector.shape_cast %263 : vector<1x8x8xf32> to vector<8x8xf32>
    %265 = vector.extract_strided_slice %262 {offsets = [1, 0, 0], sizes = [1, 8, 8], strides = [1, 1, 1]} : vector<4x8x8xf32> to vector<1x8x8xf32>
    %266 = vector.shape_cast %265 : vector<1x8x8xf32> to vector<8x8xf32>
    %267 = vector.extract_strided_slice %262 {offsets = [2, 0, 0], sizes = [1, 8, 8], strides = [1, 1, 1]} : vector<4x8x8xf32> to vector<1x8x8xf32>
    %268 = vector.shape_cast %267 : vector<1x8x8xf32> to vector<8x8xf32>
    %269 = vector.extract_strided_slice %262 {offsets = [3, 0, 0], sizes = [1, 8, 8], strides = [1, 1, 1]} : vector<4x8x8xf32> to vector<1x8x8xf32>
    %270 = vector.shape_cast %269 : vector<1x8x8xf32> to vector<8x8xf32>
    %271 = tpu.concatenate %264, %266, %268, %270 in 1 : vector<8x8xf32>, vector<8x8xf32>, vector<8x8xf32>, vector<8x8xf32> -> vector<8x32xf32>
    %272 = arith.truncf %271 : vector<8x32xf32> to vector<8x32xbf16>
    %c3_89 = arith.constant 3 : index
    %c0_90 = arith.constant 0 : index
    %c0_91 = arith.constant 0 : index
    %273 = vector.load %arg9[%c3_89, %c0_90, %c0_91] : memref<4x32x32xf32, #tpu.memory_space<vmem>>, vector<1x32x32xf32>
    %274 = vector.shape_cast %273 : vector<1x32x32xf32> to vector<32x32xf32>
    %275 = arith.truncf %274 : vector<32x32xf32> to vector<32x32xbf16>
    %cst_92 = arith.constant dense<0.000000e+00> : vector<8x32xf32>
    %276 = tpu.matmul %272, %275, %cst_92 {dimension_numbers = #tpu.dot_dimension_numbers<[1], [0], [0], [1], [0, 0, 1, 1], [], []>} : vector<8x32xbf16>, vector<32x32xbf16>, vector<8x32xf32> -> vector<8x32xf32>
    %c3_93 = arith.constant 3 : index
    %c0_94 = arith.constant 0 : index
    %277 = vector.load %arg10[%c3_93, %c0_94] : memref<4x32xf32, #tpu.memory_space<vmem>>, vector<1x32xf32>
    %278 = vector.shape_cast %277 : vector<1x32xf32> to vector<32xf32>
    %279 = vector.shape_cast %278 : vector<32xf32> to vector<1x32xf32>
    %280 = vector.broadcast %279 : vector<1x32xf32> to vector<8x32xf32>
    %281 = arith.addf %276, %280 : vector<8x32xf32>
    %282 = arith.addf %145, %281 : vector<8x32xf32>
    %c2_95 = arith.constant 2 : index
    %c0_96 = arith.constant 0 : index
    %283 = vector.load %arg11[%c2_95, %c0_96] : memref<3x32xf32, #tpu.memory_space<vmem>>, vector<1x32xf32>
    %284 = vector.shape_cast %283 : vector<1x32xf32> to vector<32xf32>
    %c2_97 = arith.constant 2 : index
    %c0_98 = arith.constant 0 : index
    %285 = vector.load %arg12[%c2_97, %c0_98] : memref<3x32xf32, #tpu.memory_space<vmem>>, vector<1x32xf32>
    %286 = vector.shape_cast %285 : vector<1x32xf32> to vector<32xf32>
    %cst_99 = arith.constant dense<0.000000e+00> : vector<8xf32>
    %287 = vector.multi_reduction <add>, %282, %cst_99 [1] : vector<8x32xf32> to vector<8xf32>
    %288 = vector.shape_cast %287 : vector<8xf32> to vector<8x1xf32>
    %cst_100 = arith.constant 3.200000e+01 : f32
    %289 = vector.broadcast %cst_100 : f32 to vector<8x1xf32>
    %290 = arith.divf %288, %289 : vector<8x1xf32>
    %291 = vector.broadcast %290 : vector<8x1xf32> to vector<8x32xf32>
    %292 = arith.subf %282, %291 : vector<8x32xf32>
    %293 = arith.mulf %292, %292 : vector<8x32xf32>
    %cst_101 = arith.constant dense<0.000000e+00> : vector<8xf32>
    %294 = vector.multi_reduction <add>, %293, %cst_101 [1] : vector<8x32xf32> to vector<8xf32>
    %295 = vector.shape_cast %294 : vector<8xf32> to vector<8x1xf32>
    %cst_102 = arith.constant 3.200000e+01 : f32
    %296 = vector.broadcast %cst_102 : f32 to vector<8x1xf32>
    %297 = arith.divf %295, %296 : vector<8x1xf32>
    %298 = vector.broadcast %290 : vector<8x1xf32> to vector<8x32xf32>
    %299 = arith.subf %282, %298 : vector<8x32xf32>
    %cst_103 = arith.constant 9.99999997E-7 : f32
    %300 = vector.broadcast %cst_103 : f32 to vector<8x1xf32>
    %301 = arith.addf %297, %300 : vector<8x1xf32>
    %302 = math.rsqrt %301 : vector<8x1xf32>
    %303 = vector.broadcast %302 : vector<8x1xf32> to vector<8x32xf32>
    %304 = arith.mulf %299, %303 : vector<8x32xf32>
    %305 = vector.shape_cast %284 : vector<32xf32> to vector<1x32xf32>
    %306 = vector.broadcast %305 : vector<1x32xf32> to vector<8x32xf32>
    %307 = arith.mulf %304, %306 : vector<8x32xf32>
    %308 = vector.shape_cast %286 : vector<32xf32> to vector<1x32xf32>
    %309 = vector.broadcast %308 : vector<1x32xf32> to vector<8x32xf32>
    %310 = arith.addf %307, %309 : vector<8x32xf32>
    %311 = arith.truncf %310 : vector<8x32xf32> to vector<8x32xbf16>
    %c0_104 = arith.constant 0 : index
    %c0_105 = arith.constant 0 : index
    %312 = vector.load %arg13[%c0_104, %c0_105] : memref<32x128xf32, #tpu.memory_space<vmem>>, vector<32x128xf32>
    %313 = arith.truncf %312 : vector<32x128xf32> to vector<32x128xbf16>
    %cst_106 = arith.constant dense<0.000000e+00> : vector<8x128xf32>
    %314 = tpu.matmul %311, %313, %cst_106 {dimension_numbers = #tpu.dot_dimension_numbers<[1], [0], [0], [1], [0, 0, 1, 1], [], []>} : vector<8x32xbf16>, vector<32x128xbf16>, vector<8x128xf32> -> vector<8x128xf32>
    %c0_107 = arith.constant 0 : index
    %c0_108 = arith.constant 0 : index
    %315 = vector.load %arg14[%c0_107, %c0_108] : memref<1x128xf32, #tpu.memory_space<vmem>>, vector<1x128xf32>
    %316 = vector.shape_cast %315 : vector<1x128xf32> to vector<128xf32>
    %317 = vector.shape_cast %316 : vector<128xf32> to vector<1x128xf32>
    %318 = vector.broadcast %317 : vector<1x128xf32> to vector<8x128xf32>
    %319 = arith.addf %314, %318 : vector<8x128xf32>
    %320 = arith.mulf %319, %319 : vector<8x128xf32>
    %321 = arith.mulf %319, %320 : vector<8x128xf32>
    %cst_109 = arith.constant 4.471500e-02 : f32
    %322 = vector.broadcast %cst_109 : f32 to vector<8x128xf32>
    %323 = arith.mulf %322, %321 : vector<8x128xf32>
    %324 = arith.addf %319, %323 : vector<8x128xf32>
    %cst_110 = arith.constant 0.797884583 : f32
    %325 = vector.broadcast %cst_110 : f32 to vector<8x128xf32>
    %326 = arith.mulf %325, %324 : vector<8x128xf32>
    %327 = math.tanh %326 : vector<8x128xf32>
    %cst_111 = arith.constant 1.000000e+00 : f32
    %328 = vector.broadcast %cst_111 : f32 to vector<8x128xf32>
    %329 = arith.addf %328, %327 : vector<8x128xf32>
    %cst_112 = arith.constant 5.000000e-01 : f32
    %330 = vector.broadcast %cst_112 : f32 to vector<8x128xf32>
    %331 = arith.mulf %330, %329 : vector<8x128xf32>
    %332 = arith.mulf %319, %331 : vector<8x128xf32>
    %333 = arith.truncf %332 : vector<8x128xf32> to vector<8x128xbf16>
    %c0_113 = arith.constant 0 : index
    %c0_114 = arith.constant 0 : index
    %334 = vector.load %arg15[%c0_113, %c0_114] : memref<128x32xf32, #tpu.memory_space<vmem>>, vector<128x32xf32>
    %335 = arith.truncf %334 : vector<128x32xf32> to vector<128x32xbf16>
    %cst_115 = arith.constant dense<0.000000e+00> : vector<8x32xf32>
    %336 = tpu.matmul %333, %335, %cst_115 {dimension_numbers = #tpu.dot_dimension_numbers<[1], [0], [0], [1], [0, 0, 1, 1], [], []>} : vector<8x128xbf16>, vector<128x32xbf16>, vector<8x32xf32> -> vector<8x32xf32>
    %c0_116 = arith.constant 0 : index
    %c0_117 = arith.constant 0 : index
    %337 = vector.load %arg16[%c0_116, %c0_117] : memref<1x32xf32, #tpu.memory_space<vmem>>, vector<1x32xf32>
    %338 = vector.shape_cast %337 : vector<1x32xf32> to vector<32xf32>
    %339 = vector.shape_cast %338 : vector<32xf32> to vector<1x32xf32>
    %340 = vector.broadcast %339 : vector<1x32xf32> to vector<8x32xf32>
    %341 = arith.addf %336, %340 : vector<8x32xf32>
    %342 = arith.addf %282, %341 : vector<8x32xf32>
    %c0_118 = arith.constant 0 : index
    %c0_119 = arith.constant 0 : index
    %c0_120 = arith.constant 0 : index
    %343 = vector.load %arg17[%c0_118, %c0_119, %c0_120] : memref<1x8x32xf32, #tpu.memory_space<vmem>>, vector<1x8x32xf32>
    %344 = vector.shape_cast %343 : vector<1x8x32xf32> to vector<8x32xf32>
    %345 = vector.shape_cast %342 : vector<8x32xf32> to vector<1x8x32xf32>
    tpu.vector_store %arg17[%c0_118, %c0_119, %c0_120], %345 {strides = array<i32>} : memref<1x8x32xf32, #tpu.memory_space<vmem>>, vector<1x8x32xf32>,
    return
  }
  func.func @transform_0(%arg0: i32, %arg1: i32) -> (i32, i32, i32) {
    %c0_i32 = arith.constant 0 : i32
    %c0_i32_0 = arith.constant 0 : i32
    return %arg0, %arg1, %c0_i32 : i32, i32, i32
  }
  func.func @transform_1(%arg0: i32, %arg1: i32) -> (i32, i32, i32) {
    %c0_i32 = arith.constant 0 : i32
    %c0_i32_0 = arith.constant 0 : i32
    return %arg0, %arg1, %c0_i32 : i32, i32, i32
  }
  func.func @transform_2(%arg0: i32, %arg1: i32) -> (i32, i32, i32) {
    %c0_i32 = arith.constant 0 : i32
    %c0_i32_0 = arith.constant 0 : i32
    %c0_i32_1 = arith.constant 0 : i32
    return %arg0, %c0_i32, %c0_i32_0 : i32, i32, i32
  }
  func.func @transform_3(%arg0: i32, %arg1: i32) -> (i32, i32, i32) {
    %c0_i32 = arith.constant 0 : i32
    %c0_i32_0 = arith.constant 0 : i32
    return %arg0, %arg1, %c0_i32 : i32, i32, i32
  }
  func.func @transform_4(%arg0: i32, %arg1: i32) -> (i32, i32, i32, i32) {
    %c0_i32 = arith.constant 0 : i32
    %c0_i32_0 = arith.constant 0 : i32
    %c0_i32_1 = arith.constant 0 : i32
    return %arg0, %arg1, %c0_i32, %c0_i32_0 : i32, i32, i32, i32
  }
  func.func @transform_5(%arg0: i32, %arg1: i32) -> (i32, i32, i32) {
    %c0_i32 = arith.constant 0 : i32
    %c0_i32_0 = arith.constant 0 : i32
    %c0_i32_1 = arith.constant 0 : i32
    %c0_i32_2 = arith.constant 0 : i32
    return %c0_i32, %c0_i32_0, %c0_i32_1 : i32, i32, i32
  }
  func.func @transform_6(%arg0: i32, %arg1: i32) -> (i32, i32) {
    %c0_i32 = arith.constant 0 : i32
    %c0_i32_0 = arith.constant 0 : i32
    %c0_i32_1 = arith.constant 0 : i32
    return %c0_i32, %c0_i32_0 : i32, i32
  }
  func.func @transform_7(%arg0: i32, %arg1: i32) -> (i32, i32, i32) {
    %c0_i32 = arith.constant 0 : i32
    %c0_i32_0 = arith.constant 0 : i32
    %c0_i32_1 = arith.constant 0 : i32
    %c0_i32_2 = arith.constant 0 : i32
    return %c0_i32, %c0_i32_0, %c0_i32_1 : i32, i32, i32
  }
  func.func @transform_8(%arg0: i32, %arg1: i32) -> (i32, i32) {
    %c0_i32 = arith.constant 0 : i32
    %c0_i32_0 = arith.constant 0 : i32
    %c0_i32_1 = arith.constant 0 : i32
    return %c0_i32, %c0_i32_0 : i32, i32
  }
  func.func @transform_9(%arg0: i32, %arg1: i32) -> (i32, i32) {
    %c0_i32 = arith.constant 0 : i32
    %c0_i32_0 = arith.constant 0 : i32
    %c0_i32_1 = arith.constant 0 : i32
    return %c0_i32, %c0_i32_0 : i32, i32
  }
  func.func @transform_10(%arg0: i32, %arg1: i32) -> (i32, i32) {
    %c0_i32 = arith.constant 0 : i32
    %c0_i32_0 = arith.constant 0 : i32
    %c0_i32_1 = arith.constant 0 : i32
    return %c0_i32, %c0_i32_0 : i32, i32
  }
  func.func @transform_11(%arg0: i32, %arg1: i32) -> (i32, i32) {
    %c0_i32 = arith.constant 0 : i32
    %c0_i32_0 = arith.constant 0 : i32
    %c0_i32_1 = arith.constant 0 : i32
    return %c0_i32, %c0_i32_0 : i32, i32
  }
  func.func @transform_12(%arg0: i32, %arg1: i32) -> (i32, i32) {
    %c0_i32 = arith.constant 0 : i32
    %c0_i32_0 = arith.constant 0 : i32
    %c0_i32_1 = arith.constant 0 : i32
    return %c0_i32, %c0_i32_0 : i32, i32
  }
  func.func @transform_13(%arg0: i32, %arg1: i32) -> (i32, i32) {
    %c0_i32 = arith.constant 0 : i32
    %c0_i32_0 = arith.constant 0 : i32
    %c0_i32_1 = arith.constant 0 : i32
    return %c0_i32, %c0_i32_0 : i32, i32
  }
  func.func @transform_14(%arg0: i32, %arg1: i32) -> (i32, i32) {
    %c0_i32 = arith.constant 0 : i32
    %c0_i32_0 = arith.constant 0 : i32
    %c0_i32_1 = arith.constant 0 : i32
    return %c0_i32, %c0_i32_0 : i32, i32
  }
  func.func @transform_15(%arg0: i32, %arg1: i32) -> (i32, i32, i32) {
    %c0_i32 = arith.constant 0 : i32
    %c0_i32_0 = arith.constant 0 : i32
    return %arg0, %arg1, %c0_i32 : i32, i32, i32
  }
}

</mosaic_0001>

<llo_original>
// kernel: tpu_custom_call.1
$region0: #{tpu_custom_call.1}
  #allocation0 [shape = 'u32[]', space=smem, size = 0x4, offset = 0x4, fixed_abs, tag = 'smem constant byte address 0x4 - core index']
  #allocation1 [shape = 'u32[144,128]{1,0:T(1,128)}', space=vmem, size = 0x12000, scoped, tag = 'internal scratch']
  %s0 = inlined_call_operand.hbm [shape: f32[2,8,32], index: 0, kind: input, shape index: {}, may-alias: {0,15}]
  %s1 = inlined_call_operand.vmem [shape: f32[2,8,8], index: 1, kind: input, shape index: {}]
  %s2 = inlined_call_operand.hbm [shape: f32[2,8,32], index: 2, kind: input, shape index: {}]
  %s3 = inlined_call_operand.hbm [shape: f32[2,8,8], index: 3, kind: input, shape index: {}]
  %s4 = inlined_call_operand.vmem [shape: f32[2,8,8,8], index: 4, kind: input, shape index: {}]
  %s5 = inlined_call_operand.hbm [shape: f32[4,32,32], index: 5, kind: input, shape index: {}]
  %s6 = inlined_call_operand.vmem [shape: f32[4,32], index: 6, kind: input, shape index: {}]
  %s7 = inlined_call_operand.hbm [shape: f32[4,32,32], index: 7, kind: input, shape index: {}]
  %s8 = inlined_call_operand.vmem [shape: f32[4,32], index: 8, kind: input, shape index: {}]
  %s9 = inlined_call_operand.vmem [shape: f32[3,32], index: 9, kind: input, shape index: {}]
  %s10 = inlined_call_operand.vmem [shape: f32[3,32], index: 10, kind: input, shape index: {}]
  %s11 = inlined_call_operand.vmem [shape: f32[32,128], index: 11, kind: input, shape index: {}]
  %s12 = inlined_call_operand.vmem [shape: f32[1,128], index: 12, kind: input, shape index: {}]
  %s13 = inlined_call_operand.vmem [shape: f32[128,32], index: 13, kind: input, shape index: {}]
  %s14 = inlined_call_operand.vmem [shape: f32[1,32], index: 14, kind: input, shape index: {}]
  %s15 = inlined_call_operand.hbm [shape: f32[2,8,32], index: 15, kind: output, shape index: {}, may-alias: {0,15}]
  %s16 = sld [smem:[#allocation0]]
  $region113: #{tpu_custom_call.1} parent=0
    _
  %s18 = ssub.s32 1, %s16
  %s19 = scalar_select 0, %s18, %s16
  $region1: #{tpu_custom_call.1} parent=0
    #allocation2 [shape = 'u8[8192]{0}', space=vmem, size = 0x2000, scoped, tag = 'input window, operand 0']
    #allocation3 [shape = 's32[2]{0}', space=sflag, size = 0x8, scoped, tag = 'scoped memory for tpu_custom_call.1']
    #allocation4 [shape = 's32[2]{0}', space=sflag, size = 0x8, scoped, tag = 'scoped memory for tpu_custom_call.1']
    #allocation5 [shape = 'u8[8192]{0}', space=vmem, size = 0x2000, scoped, tag = 'input window, operand 2']
    #allocation6 [shape = 's32[2]{0}', space=sflag, size = 0x8, scoped, tag = 'scoped memory for tpu_custom_call.1']
    #allocation7 [shape = 'u8[8192]{0}', space=vmem, size = 0x2000, scoped, tag = 'input window, operand 3']
    #allocation8 [shape = 'u8[65536]{0}', space=vmem, size = 0x10000, scoped, tag = 'input window, operand 5, single buffered']
    #allocation9 [shape = 's32[1]{0}', space=sflag, size = 0x4, scoped, tag = 'scoped memory for tpu_custom_call.1']
    #allocation10 [shape = 'u8[65536]{0}', space=vmem, size = 0x10000, scoped, tag = 'input window, operand 7, single buffered']
    #allocation11 [shape = 'u8[8192]{0}', space=vmem, size = 0x2000, scoped, tag = 'output window, operand 0']
    %20 = vsyncpa [#allocation3], 0
    %s21 = scalar_lea.sflag [#allocation3], 1
    %22 = vsyncpa %s21, 0
    %23 = vsyncpa [#allocation6], 0
    %s24 = scalar_lea.sflag [#allocation6], 1
    %25 = vsyncpa %s24, 0
    %26 = vsyncpa [#allocation9], 0
    %27 = vsyncpa [#allocation4], 0
    %s28 = scalar_lea.sflag [#allocation4], 1
    %29 = vsyncpa %s28, 0
    loop: start=0, step=1, limit=4
    $region2: #{tpu_custom_call.1} parent=1 // loop_pre_header
      _
    $region3: #{tpu_custom_call.1} parent=1 // loop_header
      %s31 = sphi 0, %s35
      %p32 = scmp.ge.s32.totalorder %s31, 4
      %s38 = sphi 0, %s50
      %s39 = sphi 0, %s46
      %s40 = sphi 0, %s38
      %s41 = sphi 0, %s39
      %s42 = sphi 0, %s40
      %s43 = sphi 0, %s41
      %s55 = sphi 0, %s57
      %s58 = sphi 0, %s55
      %s59 = sphi 0, %s58
      %s75 = sphi 0, %s59
      %s83 = sphi 0, %s85
      %s86 = sphi 0, %s83
      %s87 = sphi 0, %s86
      %s103 = sphi 0, %s87
      %s109 = sphi 0, %s111
      %s112 = sphi 0, %s109
      %s113 = sphi 0, %s112
      %s129 = sphi 0, %s113
      %s137 = sphi 0, %s139
      %s140 = sphi 0, %s137
      %s141 = sphi 0, %s140
      %s157 = sphi 0, %s141
      %s165 = sphi 0, %s167
      %s168 = sphi 0, %s165
      %s169 = sphi 0, %s168
      %s185 = sphi 0, %s169
      %s189 = sphi 0, %s189
      %s191 = sphi 0, %s189
      %s192 = sphi 0, %s191
      %s206 = sphi 0, %s192
      %s210 = sphi 0, %s210
      %s212 = sphi 0, %s210
      %s213 = sphi 0, %s212
      %s227 = sphi 0, %s213
      %s231 = sphi 0, %s231
      %s233 = sphi 0, %s231
      %s234 = sphi 0, %s233
      %s248 = sphi 0, %s234
      %s252 = sphi 0, %s252
      %s254 = sphi 0, %s252
      %s255 = sphi 0, %s254
      %s269 = sphi 0, %s255
      %s273 = sphi 0, %s273
      %s275 = sphi 0, %s273
      %s276 = sphi 0, %s275
      %s290 = sphi 0, %s276
      %s294 = sphi 0, %s294
      %s296 = sphi 0, %s294
      %s297 = sphi 0, %s296
      %s311 = sphi 0, %s297
      %s315 = sphi 0, %s315
      %s317 = sphi 0, %s315
      %s318 = sphi 0, %s317
      %s332 = sphi 0, %s318
      %s336 = sphi 0, %s336
      %s338 = sphi 0, %s336
      %s339 = sphi 0, %s338
      %s353 = sphi 0, %s339
      %s357 = sphi 0, %s357
      %s359 = sphi 0, %s357
      %s360 = sphi 0, %s359
      %s374 = sphi 0, %s360
      %s378 = sphi 0, %s378
      %s380 = sphi 0, %s378
      %s381 = sphi 0, %s380
      %s395 = sphi 0, %s381
      %s403 = sphi 0, %s405
      %s406 = sphi 0, %s403
      %s407 = sphi 0, %s406
      %s423 = sphi 0, %s407
    $region4: #{tpu_custom_call.1} parent=1 // loop_header_branch
      %34 = sbr.rel (%p32) target = $region8
    $region5: #{tpu_custom_call.1} parent=1 // loop_body
      %s36 = ssub.s32 %s31, 1
      %s37 = ssub.s32 %s31, 2
      %s44 = sadd.s32 1, %s39
      %p45 = scmp.ge.s32.totalorder %s44, 1
      %s46 = scalar_select %p45, 0, %s44
      %s47 = sadd.s32 1, %s38
      %s48 = scalar_select %p45, %s47, %s38
      %p49 = scmp.ge.s32.totalorder %s48, 2
      %s50 = scalar_select %p49, 0, %s48
      %s51 = ssub.s32 %s38, %s50
      %s52 = ssub.s32 %s39, %s46
      %s53 = sor.u32 %s51, %s52
      %p54 = scmp.eq.s32.totalorder %s53, 0
      %s56 = sadd.s32 %s55, 1
      %s57 = scalar_select %p54, %s55, %s56
      %p60 = pneg %p54
      %p61 = scmp.eq.s32.totalorder %s31, 1
      %p62 = por %p60, %p61
      %p63 = scmp.ne.s32.totalorder %s55, %s58
      %p64 = scmp.eq.s32.totalorder %s31, 0
      %p65 = por %p63, %p64
      %p66 = scmp.ne.s32.totalorder %s55, %s58
      %p67 = scmp.eq.s32.totalorder %s36, 1
      %p68 = por %p66, %p67
      %p69 = scmp.ne.s32.totalorder %s58, %s59
      %p70 = scmp.eq.s32.totalorder %s36, 0
      %p71 = por %p69, %p70
      %p72 = scmp.ne.s32.totalorder %s58, %s59
      %p73 = scmp.eq.s32.totalorder %s37, 1
      %p74 = por %p72, %p73
      %p76 = scmp.ne.s32.totalorder %s59, %s75
      %p77 = scmp.eq.s32.totalorder %s37, 0
      %p78 = por %p76, %p77
      %s79 = ssub.s32 %s38, %s50
      %s80 = ssub.s32 %s39, %s46
      %s81 = sor.u32 %s79, %s80
      %p82 = scmp.eq.s32.totalorder %s81, 0
      %s84 = sadd.s32 %s83, 1
      %s85 = scalar_select %p82, %s83, %s84
      %p88 = pneg %p82
      %p89 = scmp.eq.s32.totalorder %s31, 1
      %p90 = por %p88, %p89
      %p91 = scmp.ne.s32.totalorder %s83, %s86
      %p92 = scmp.eq.s32.totalorder %s31, 0
      %p93 = por %p91, %p92
      %p94 = scmp.ne.s32.totalorder %s83, %s86
      %p95 = scmp.eq.s32.totalorder %s36, 1
      %p96 = por %p94, %p95
      %p97 = scmp.ne.s32.totalorder %s86, %s87
      %p98 = scmp.eq.s32.totalorder %s36, 0
      %p99 = por %p97, %p98
      %p100 = scmp.ne.s32.totalorder %s86, %s87
      %p101 = scmp.eq.s32.totalorder %s37, 1
      %p102 = por %p100, %p101
      %p104 = scmp.ne.s32.totalorder %s87, %s103
      %p105 = scmp.eq.s32.totalorder %s37, 0
      %p106 = por %p104, %p105
      %s107 = ssub.s32 %s38, %s50
      %p108 = scmp.eq.s32.totalorder %s107, 0
      %s110 = sadd.s32 %s109, 1
      %s111 = scalar_select %p108, %s109, %s110
      %p114 = pneg %p108
      %p115 = scmp.eq.s32.totalorder %s31, 1
      %p116 = por %p114, %p115
      %p117 = scmp.ne.s32.totalorder %s109, %s112
      %p118 = scmp.eq.s32.totalorder %s31, 0
      %p119 = por %p117, %p118
      %p120 = scmp.ne.s32.totalorder %s109, %s112
      %p121 = scmp.eq.s32.totalorder %s36, 1
      %p122 = por %p120, %p121
      %p123 = scmp.ne.s32.totalorder %s112, %s113
      %p124 = scmp.eq.s32.totalorder %s36, 0
      %p125 = por %p123, %p124
      %p126 = scmp.ne.s32.totalorder %s112, %s113
      %p127 = scmp.eq.s32.totalorder %s37, 1
      %p128 = por %p126, %p127
      %p130 = scmp.ne.s32.totalorder %s113, %s129
      %p131 = scmp.eq.s32.totalorder %s37, 0
      %p132 = por %p130, %p131
      %s133 = ssub.s32 %s38, %s50
      %s134 = ssub.s32 %s39, %s46
      %s135 = sor.u32 %s133, %s134
      %p136 = scmp.eq.s32.totalorder %s135, 0
      %s138 = sadd.s32 %s137, 1
      %s139 = scalar_select %p136, %s137, %s138
      %p142 = pneg %p136
      %p143 = scmp.eq.s32.totalorder %s31, 1
      %p144 = por %p142, %p143
      %p145 = scmp.ne.s32.totalorder %s137, %s140
      %p146 = scmp.eq.s32.totalorder %s31, 0
      %p147 = por %p145, %p146
      %p148 = scmp.ne.s32.totalorder %s137, %s140
      %p149 = scmp.eq.s32.totalorder %s36, 1
      %p150 = por %p148, %p149
      %p151 = scmp.ne.s32.totalorder %s140, %s141
      %p152 = scmp.eq.s32.totalorder %s36, 0
      %p153 = por %p151, %p152
      %p154 = scmp.ne.s32.totalorder %s140, %s141
      %p155 = scmp.eq.s32.totalorder %s37, 1
      %p156 = por %p154, %p155
      %p158 = scmp.ne.s32.totalorder %s141, %s157
      %p159 = scmp.eq.s32.totalorder %s37, 0
      %p160 = por %p158, %p159
      %s161 = ssub.s32 %s38, %s50
      %s162 = ssub.s32 %s39, %s46
      %s163 = sor.u32 %s161, %s162
      %p164 = scmp.eq.s32.totalorder %s163, 0
      %s166 = sadd.s32 %s165, 1
      %s167 = scalar_select %p164, %s165, %s166
      %p170 = pneg %p164
      %p171 = scmp.eq.s32.totalorder %s31, 1
      %p172 = por %p170, %p171
      %p173 = scmp.ne.s32.totalorder %s165, %s168
      %p174 = scmp.eq.s32.totalorder %s31, 0
      %p175 = por %p173, %p174
      %p176 = scmp.ne.s32.totalorder %s165, %s168
      %p177 = scmp.eq.s32.totalorder %s36, 1
      %p178 = por %p176, %p177
      %p179 = scmp.ne.s32.totalorder %s168, %s169
      %p180 = scmp.eq.s32.totalorder %s36, 0
      %p181 = por %p179, %p180
      %p182 = scmp.ne.s32.totalorder %s168, %s169
      %p183 = scmp.eq.s32.totalorder %s37, 1
      %p184 = por %p182, %p183
      %p186 = scmp.ne.s32.totalorder %s169, %s185
      %p187 = scmp.eq.s32.totalorder %s37, 0
      %p188 = por %p186, %p187
      %s190 = sadd.s32 %s189, 1
      %p193 = scmp.eq.s32.totalorder %s31, 1
      %p194 = scmp.ne.s32.totalorder %s189, %s191
      %p195 = scmp.eq.s32.totalorder %s31, 0
      %p196 = por %p194, %p195
      %p197 = scmp.ne.s32.totalorder %s189, %s191
      %p198 = scmp.eq.s32.totalorder %s36, 1
      %p199 = por %p197, %p198
      %p200 = scmp.ne.s32.totalorder %s191, %s192
      %p201 = scmp.eq.s32.totalorder %s36, 0
      %p202 = por %p200, %p201
      %p203 = scmp.ne.s32.totalorder %s191, %s192
      %p204 = scmp.eq.s32.totalorder %s37, 1
      %p205 = por %p203, %p204
      %p207 = scmp.ne.s32.totalorder %s192, %s206
      %p208 = scmp.eq.s32.totalorder %s37, 0
      %p209 = por %p207, %p208
      %s211 = sadd.s32 %s210, 1
      %p214 = scmp.eq.s32.totalorder %s31, 1
      %p215 = scmp.ne.s32.totalorder %s210, %s212
      %p216 = scmp.eq.s32.totalorder %s31, 0
      %p217 = por %p215, %p216
      %p218 = scmp.ne.s32.totalorder %s210, %s212
      %p219 = scmp.eq.s32.totalorder %s36, 1
      %p220 = por %p218, %p219
      %p221 = scmp.ne.s32.totalorder %s212, %s213
      %p222 = scmp.eq.s32.totalorder %s36, 0
      %p223 = por %p221, %p222
      %p224 = scmp.ne.s32.totalorder %s212, %s213
      %p225 = scmp.eq.s32.totalorder %s37, 1
      %p226 = por %p224, %p225
      %p228 = scmp.ne.s32.totalorder %s213, %s227
      %p229 = scmp.eq.s32.totalorder %s37, 0
      %p230 = por %p228, %p229
      %s232 = sadd.s32 %s231, 1
      %p235 = scmp.eq.s32.totalorder %s31, 1
      %p236 = scmp.ne.s32.totalorder %s231, %s233
      %p237 = scmp.eq.s32.totalorder %s31, 0
      %p238 = por %p236, %p237
      %p239 = scmp.ne.s32.totalorder %s231, %s233
      %p240 = scmp.eq.s32.totalorder %s36, 1
      %p241 = por %p239, %p240
      %p242 = scmp.ne.s32.totalorder %s233, %s234
      %p243 = scmp.eq.s32.totalorder %s36, 0
      %p244 = por %p242, %p243
      %p245 = scmp.ne.s32.totalorder %s233, %s234
      %p246 = scmp.eq.s32.totalorder %s37, 1
      %p247 = por %p245, %p246
      %p249 = scmp.ne.s32.totalorder %s234, %s248
      %p250 = scmp.eq.s32.totalorder %s37, 0
      %p251 = por %p249, %p250
      %s253 = sadd.s32 %s252, 1
      %p256 = scmp.eq.s32.totalorder %s31, 1
      %p257 = scmp.ne.s32.totalorder %s252, %s254
      %p258 = scmp.eq.s32.totalorder %s31, 0
      %p259 = por %p257, %p258
      %p260 = scmp.ne.s32.totalorder %s252, %s254
      %p261 = scmp.eq.s32.totalorder %s36, 1
      %p262 = por %p260, %p261
      %p263 = scmp.ne.s32.totalorder %s254, %s255
      %p264 = scmp.eq.s32.totalorder %s36, 0
      %p265 = por %p263, %p264
      %p266 = scmp.ne.s32.totalorder %s254, %s255
      %p267 = scmp.eq.s32.totalorder %s37, 1
      %p268 = por %p266, %p267
      %p270 = scmp.ne.s32.totalorder %s255, %s269
      %p271 = scmp.eq.s32.totalorder %s37, 0
      %p272 = por %p270, %p271
      %s274 = sadd.s32 %s273, 1
      %p277 = scmp.eq.s32.totalorder %s31, 1
      %p278 = scmp.ne.s32.totalorder %s273, %s275
      %p279 = scmp.eq.s32.totalorder %s31, 0
      %p280 = por %p278, %p279
      %p281 = scmp.ne.s32.totalorder %s273, %s275
      %p282 = scmp.eq.s32.totalorder %s36, 1
      %p283 = por %p281, %p282
      %p284 = scmp.ne.s32.totalorder %s275, %s276
      %p285 = scmp.eq.s32.totalorder %s36, 0
      %p286 = por %p284, %p285
      %p287 = scmp.ne.s32.totalorder %s275, %s276
      %p288 = scmp.eq.s32.totalorder %s37, 1
      %p289 = por %p287, %p288
      %p291 = scmp.ne.s32.totalorder %s276, %s290
      %p292 = scmp.eq.s32.totalorder %s37, 0
      %p293 = por %p291, %p292
      %s295 = sadd.s32 %s294, 1
      %p298 = scmp.eq.s32.totalorder %s31, 1
      %p299 = scmp.ne.s32.totalorder %s294, %s296
      %p300 = scmp.eq.s32.totalorder %s31, 0
      %p301 = por %p299, %p300
      %p302 = scmp.ne.s32.totalorder %s294, %s296
      %p303 = scmp.eq.s32.totalorder %s36, 1
      %p304 = por %p302, %p303
      %p305 = scmp.ne.s32.totalorder %s296, %s297
      %p306 = scmp.eq.s32.totalorder %s36, 0
      %p307 = por %p305, %p306
      %p308 = scmp.ne.s32.totalorder %s296, %s297
      %p309 = scmp.eq.s32.totalorder %s37, 1
      %p310 = por %p308, %p309
      %p312 = scmp.ne.s32.totalorder %s297, %s311
      %p313 = scmp.eq.s32.totalorder %s37, 0
      %p314 = por %p312, %p313
      %s316 = sadd.s32 %s315, 1
      %p319 = scmp.eq.s32.totalorder %s31, 1
      %p320 = scmp.ne.s32.totalorder %s315, %s317
      %p321 = scmp.eq.s32.totalorder %s31, 0
      %p322 = por %p320, %p321
      %p323 = scmp.ne.s32.totalorder %s315, %s317
      %p324 = scmp.eq.s32.totalorder %s36, 1
      %p325 = por %p323, %p324
      %p326 = scmp.ne.s32.totalorder %s317, %s318
      %p327 = scmp.eq.s32.totalorder %s36, 0
      %p328 = por %p326, %p327
      %p329 = scmp.ne.s32.totalorder %s317, %s318
      %p330 = scmp.eq.s32.totalorder %s37, 1
      %p331 = por %p329, %p330
      %p333 = scmp.ne.s32.totalorder %s318, %s332
      %p334 = scmp.eq.s32.totalorder %s37, 0
      %p335 = por %p333, %p334
      %s337 = sadd.s32 %s336, 1
      %p340 = scmp.eq.s32.totalorder %s31, 1
      %p341 = scmp.ne.s32.totalorder %s336, %s338
      %p342 = scmp.eq.s32.totalorder %s31, 0
      %p343 = por %p341, %p342
      %p344 = scmp.ne.s32.totalorder %s336, %s338
      %p345 = scmp.eq.s32.totalorder %s36, 1
      %p346 = por %p344, %p345
      %p347 = scmp.ne.s32.totalorder %s338, %s339
      %p348 = scmp.eq.s32.totalorder %s36, 0
      %p349 = por %p347, %p348
      %p350 = scmp.ne.s32.totalorder %s338, %s339
      %p351 = scmp.eq.s32.totalorder %s37, 1
      %p352 = por %p350, %p351
      %p354 = scmp.ne.s32.totalorder %s339, %s353
      %p355 = scmp.eq.s32.totalorder %s37, 0
      %p356 = por %p354, %p355
      %s358 = sadd.s32 %s357, 1
      %p361 = scmp.eq.s32.totalorder %s31, 1
      %p362 = scmp.ne.s32.totalorder %s357, %s359
      %p363 = scmp.eq.s32.totalorder %s31, 0
      %p364 = por %p362, %p363
      %p365 = scmp.ne.s32.totalorder %s357, %s359
      %p366 = scmp.eq.s32.totalorder %s36, 1
      %p367 = por %p365, %p366
      %p368 = scmp.ne.s32.totalorder %s359, %s360
      %p369 = scmp.eq.s32.totalorder %s36, 0
      %p370 = por %p368, %p369
      %p371 = scmp.ne.s32.totalorder %s359, %s360
      %p372 = scmp.eq.s32.totalorder %s37, 1
      %p373 = por %p371, %p372
      %p375 = scmp.ne.s32.totalorder %s360, %s374
      %p376 = scmp.eq.s32.totalorder %s37, 0
      %p377 = por %p375, %p376
      %s379 = sadd.s32 %s378, 1
      %p382 = scmp.eq.s32.totalorder %s31, 1
      %p383 = scmp.ne.s32.totalorder %s378, %s380
      %p384 = scmp.eq.s32.totalorder %s31, 0
      %p385 = por %p383, %p384
      %p386 = scmp.ne.s32.totalorder %s378, %s380
      %p387 = scmp.eq.s32.totalorder %s36, 1
      %p388 = por %p386, %p387
      %p389 = scmp.ne.s32.totalorder %s380, %s381
      %p390 = scmp.eq.s32.totalorder %s36, 0
      %p391 = por %p389, %p390
      %p392 = scmp.ne.s32.totalorder %s380, %s381
      %p393 = scmp.eq.s32.totalorder %s37, 1
      %p394 = por %p392, %p393
      %p396 = scmp.ne.s32.totalorder %s381, %s395
      %p397 = scmp.eq.s32.totalorder %s37, 0
      %p398 = por %p396, %p397
      %s399 = ssub.s32 %s38, %s50
      %s400 = ssub.s32 %s39, %s46
      %s401 = sor.u32 %s399, %s400
      %p402 = scmp.eq.s32.totalorder %s401, 0
      %s404 = sadd.s32 %s403, 1
      %s405 = scalar_select %p402, %s403, %s404
      %p408 = pneg %p402
      %p409 = scmp.eq.s32.totalorder %s31, 1
      %p410 = por %p408, %p409
      %p411 = scmp.ne.s32.totalorder %s403, %s406
      %p412 = scmp.eq.s32.totalorder %s31, 0
      %p413 = por %p411, %p412
      %p414 = scmp.ne.s32.totalorder %s403, %s406
      %p415 = scmp.eq.s32.totalorder %s36, 1
      %p416 = por %p414, %p415
      %p417 = scmp.ne.s32.totalorder %s406, %s407
      %p418 = scmp.eq.s32.totalorder %s36, 0
      %p419 = por %p417, %p418
      %p420 = scmp.ne.s32.totalorder %s406, %s407
      %p421 = scmp.eq.s32.totalorder %s37, 1
      %p422 = por %p420, %p421
      %p424 = scmp.ne.s32.totalorder %s407, %s423
      %p425 = scmp.eq.s32.totalorder %s37, 0
      %p426 = por %p424, %p425
      %p427 = scmp.le.s32.totalorder 1, %s31
      %p428 = scmp.lt.s32.totalorder %s31, 3
      %p429 = pnand %p427, %p428
      %p430 = pneg %p429
      // Predicated region
      $region9: #{tpu_custom_call.1} parent=5 // pred_check
        _
      $region10: #{tpu_custom_call.1} parent=5 // pred_check_branch
        %432 = sbr.rel (%p429) target = $region12
      $region11: #{tpu_custom_call.1} parent=5 // pred_region
        %s433 = ssub.s32 %s31, 1
        // Predicated region
        $region13: #{tpu_custom_call.1} parent=11 // pred_check
          %p434 = pneg %p202
        $region14: #{tpu_custom_call.1} parent=11 // pred_check_branch
          %436 = sbr.rel (%p434) target = $region16
        $region15: #{tpu_custom_call.1} parent=11 // pred_region
          %s438 = ssub.s32 2048, 2048
          %439 = vsyncadd [#allocation9], %s438
          %s440 = sshll.u32 [#allocation8], 4
          %s441 = int_to_ptr.vmem [resolvable:$true] %s440
          %446 = dma.hbm_to_vmem [thread:$0]  %s5, 2048, %s441, [#allocation9], 128, 128, 8
        $region16: #{tpu_custom_call.1} parent=11 // pred_fallthru
          _
        // Predicated region
        $region17: #{tpu_custom_call.1} parent=11 // pred_check
          %p447 = pneg %p223
        $region18: #{tpu_custom_call.1} parent=11 // pred_check_branch
          %449 = sbr.rel (%p447) target = $region20
        $region19: #{tpu_custom_call.1} parent=11 // pred_region
          _
        $region20: #{tpu_custom_call.1} parent=11 // pred_fallthru
          _
        // Predicated region
        $region21: #{tpu_custom_call.1} parent=11 // pred_check
          %p450 = pneg %p244
        $region22: #{tpu_custom_call.1} parent=11 // pred_check_branch
          %452 = sbr.rel (%p450) target = $region24
        $region23: #{tpu_custom_call.1} parent=11 // pred_region
          %s454 = ssub.s32 2048, 2048
          %455 = vsyncadd [#allocation9], %s454
          %s456 = sshll.u32 [#allocation10], 4
          %s457 = int_to_ptr.vmem [resolvable:$true] %s456
          %462 = dma.hbm_to_vmem [thread:$0]  %s7, 2048, %s457, [#allocation9], 128, 128, 8
        $region24: #{tpu_custom_call.1} parent=11 // pred_fallthru
          _
        // Predicated region
        $region25: #{tpu_custom_call.1} parent=11 // pred_check
          %p463 = pneg %p265
        $region26: #{tpu_custom_call.1} parent=11 // pred_check_branch
          %465 = sbr.rel (%p463) target = $region28
        $region27: #{tpu_custom_call.1} parent=11 // pred_region
          _
        $region28: #{tpu_custom_call.1} parent=11 // pred_fallthru
          _
        // Predicated region
        $region29: #{tpu_custom_call.1} parent=11 // pred_check
          %p466 = pneg %p286
        $region30: #{tpu_custom_call.1} parent=11 // pred_check_branch
          %468 = sbr.rel (%p466) target = $region32
        $region31: #{tpu_custom_call.1} parent=11 // pred_region
          _
        $region32: #{tpu_custom_call.1} parent=11 // pred_fallthru
          _
        // Predicated region
        $region33: #{tpu_custom_call.1} parent=11 // pred_check
          %p469 = pneg %p307
        $region34: #{tpu_custom_call.1} parent=11 // pred_check_branch
          %471 = sbr.rel (%p469) target = $region36
        $region35: #{tpu_custom_call.1} parent=11 // pred_region
          _
        $region36: #{tpu_custom_call.1} parent=11 // pred_fallthru
          _
        // Predicated region
        $region37: #{tpu_custom_call.1} parent=11 // pred_check
          %p472 = pneg %p328
        $region38: #{tpu_custom_call.1} parent=11 // pred_check_branch
          %474 = sbr.rel (%p472) target = $region40
        $region39: #{tpu_custom_call.1} parent=11 // pred_region
          _
        $region40: #{tpu_custom_call.1} parent=11 // pred_fallthru
          _
        // Predicated region
        $region41: #{tpu_custom_call.1} parent=11 // pred_check
          %p475 = pneg %p349
        $region42: #{tpu_custom_call.1} parent=11 // pred_check_branch
          %477 = sbr.rel (%p475) target = $region44
        $region43: #{tpu_custom_call.1} parent=11 // pred_region
          _
        $region44: #{tpu_custom_call.1} parent=11 // pred_fallthru
          _
        // Predicated region
        $region45: #{tpu_custom_call.1} parent=11 // pred_check
          %p478 = pneg %p370
        $region46: #{tpu_custom_call.1} parent=11 // pred_check_branch
          %480 = sbr.rel (%p478) target = $region48
        $region47: #{tpu_custom_call.1} parent=11 // pred_region
          _
        $region48: #{tpu_custom_call.1} parent=11 // pred_fallthru
          _
        // Predicated region
        $region49: #{tpu_custom_call.1} parent=11 // pred_check
          %p481 = pneg %p391
        $region50: #{tpu_custom_call.1} parent=11 // pred_check_branch
          %483 = sbr.rel (%p481) target = $region52
        $region51: #{tpu_custom_call.1} parent=11 // pred_region
          _
        $region52: #{tpu_custom_call.1} parent=11 // pred_fallthru
          _
      $region12: #{tpu_custom_call.1} parent=5 // pred_fallthru
        _
      %p484 = scmp.lt.s32.totalorder %s31, 2
      // Predicated region
      $region53: #{tpu_custom_call.1} parent=5 // pred_check
        %p485 = pneg %p484
      $region54: #{tpu_custom_call.1} parent=5 // pred_check_branch
        %487 = sbr.rel (%p485) target = $region56
      $region55: #{tpu_custom_call.1} parent=5 // pred_region
        // Predicated region
        $region57: #{tpu_custom_call.1} parent=55 // pred_check
          %p488 = pneg %p65
        $region58: #{tpu_custom_call.1} parent=55 // pred_check_branch
          %490 = sbr.rel (%p488) target = $region60
        $region59: #{tpu_custom_call.1} parent=55 // pred_region
          %s491 = sand.u32 %s55, 1
          %s492 = scalar_lea.sflag [#allocation3], %s491
          %s493 = sand.u32 %s55, 1
          %s494 = smul.addr %s493, 8
          %s495 = scalar_lea.vmem [#allocation2], %s494
          %s497 = ssub.s32 128, 128
          %498 = vsyncadd %s492, %s497
          %s499 = sadd.s32 %s39, %s38
          %s500 = smul.addr %s499, 128
          %s501 = scalar_lea.hbm %s0, %s500
          %s503 = sshll.u32 %s495, 4
          %s504 = int_to_ptr.vmem [resolvable:$true] %s503
          %506 = dma.hbm_to_vmem [thread:$0]  %s501, 128, %s504, %s492
        $region60: #{tpu_custom_call.1} parent=55 // pred_fallthru
          _
        // Predicated region
        $region61: #{tpu_custom_call.1} parent=55 // pred_check
          %p507 = pneg %p93
        $region62: #{tpu_custom_call.1} parent=55 // pred_check_branch
          %509 = sbr.rel (%p507) target = $region64
        $region63: #{tpu_custom_call.1} parent=55 // pred_region
          %p510 = scmp.lt.s32.totalorder %s38, 1
          %s511 = scalar_select %p510, %s38, 1
          %p512 = scmp.lt.s32.totalorder %s39, 0
          %s513 = scalar_select %p512, %s39, 0
          %s514 = sadd.s32 %s513, %s511
          %s515 = smul.addr %s514, 8
          %s516 = scalar_lea.vmem %s1, %s515
        $region64: #{tpu_custom_call.1} parent=55 // pred_fallthru
          _
        // Predicated region
        $region65: #{tpu_custom_call.1} parent=55 // pred_check
          %p517 = pneg %p119
        $region66: #{tpu_custom_call.1} parent=55 // pred_check_branch
          %519 = sbr.rel (%p517) target = $region68
        $region67: #{tpu_custom_call.1} parent=55 // pred_region
          %s520 = sand.u32 %s31, 1
          %s521 = scalar_lea.sflag [#allocation6], %s520
          %s522 = sand.u32 %s109, 1
          %s523 = smul.addr %s522, 8
          %s524 = scalar_lea.vmem [#allocation5], %s523
          %s526 = ssub.s32 128, 128
          %527 = vsyncadd %s521, %s526
          %s528 = smul.addr %s38, 128
          %s529 = scalar_lea.hbm %s2, %s528
          %s531 = sshll.u32 %s524, 4
          %s532 = int_to_ptr.vmem [resolvable:$true] %s531
          %534 = dma.hbm_to_vmem [thread:$0]  %s529, 128, %s532, %s521
        $region68: #{tpu_custom_call.1} parent=55 // pred_fallthru
          _
        // Predicated region
        $region69: #{tpu_custom_call.1} parent=55 // pred_check
          %p535 = pneg %p147
        $region70: #{tpu_custom_call.1} parent=55 // pred_check_branch
          %537 = sbr.rel (%p535) target = $region72
        $region71: #{tpu_custom_call.1} parent=55 // pred_region
          %s538 = sand.u32 %s31, 1
          %s539 = scalar_lea.sflag [#allocation6], %s538
          %s540 = sand.u32 %s137, 1
          %s541 = smul.addr %s540, 8
          %s542 = scalar_lea.vmem [#allocation7], %s541
          %s544 = ssub.s32 128, 128
          %545 = vsyncadd %s539, %s544
          %s546 = sadd.s32 %s39, %s38
          %s547 = smul.addr %s546, 128
          %s548 = scalar_lea.hbm %s3, %s547
          %s550 = sshll.u32 %s542, 4
          %s551 = int_to_ptr.vmem [resolvable:$true] %s550
          %553 = dma.hbm_to_vmem [thread:$0]  %s548, 128, %s551, %s539
        $region72: #{tpu_custom_call.1} parent=55 // pred_fallthru
          _
        // Predicated region
        $region73: #{tpu_custom_call.1} parent=55 // pred_check
          %p554 = pneg %p175
        $region74: #{tpu_custom_call.1} parent=55 // pred_check_branch
          %556 = sbr.rel (%p554) target = $region76
        $region75: #{tpu_custom_call.1} parent=55 // pred_region
          %s557 = smul.u32 8, %s39
          %p558 = scmp.lt.s32.totalorder %s38, 1
          %s559 = scalar_select %p558, %s38, 1
          %p560 = scmp.lt.s32.totalorder %s557, 7
          %s561 = scalar_select %p560, %s557, 7
          %s562 = smul.addr %s559, 8
          %s563 = sadd.s32 %s561, %s562
          %s564 = smul.addr %s563, 8
          %s565 = scalar_lea.vmem %s4, %s564
          %s566 = smul.u32 8, %s39
        $region76: #{tpu_custom_call.1} parent=55 // pred_fallthru
          _
      $region56: #{tpu_custom_call.1} parent=5 // pred_fallthru
        _
      %p567 = scmp.le.s32.totalorder 1, %s31
      %p568 = scmp.lt.s32.totalorder %s31, 3
      %p569 = pnand %p567, %p568
      %p570 = pneg %p569
      // Predicated region
      $region77: #{tpu_custom_call.1} parent=5 // pred_check
        _
      $region78: #{tpu_custom_call.1} parent=5 // pred_check_branch
        %572 = sbr.rel (%p569) target = $region80
      $region79: #{tpu_custom_call.1} parent=5 // pred_region
        %s573 = ssub.s32 %s31, 1
        %s574 = sand.u32 %s58, 1
        %s575 = scalar_lea.sflag [#allocation3], %s574
        %s576 = sand.u32 %s58, 1
        %s577 = smul.addr %s576, 8
        %s578 = scalar_lea.vmem [#allocation2], %s577
        // Predicated region
        $region81: #{tpu_custom_call.1} parent=79 // pred_check
          %p579 = pneg %p71
        $region82: #{tpu_custom_call.1} parent=79 // pred_check_branch
          %581 = sbr.rel (%p579) target = $region84
        $region83: #{tpu_custom_call.1} parent=79 // pred_region
          %582 = dma.done %s575, 128
        $region84: #{tpu_custom_call.1} parent=79 // pred_fallthru
          _
        %s583 = sand.u32 %s36, 1
        %s584 = scalar_lea.sflag [#allocation6], %s583
        %s585 = sand.u32 %s112, 1
        %s586 = smul.addr %s585, 8
        %s587 = scalar_lea.vmem [#allocation5], %s586
        // Predicated region
        $region85: #{tpu_custom_call.1} parent=79 // pred_check
          %p588 = pneg %p125
        $region86: #{tpu_custom_call.1} parent=79 // pred_check_branch
          %590 = sbr.rel (%p588) target = $region88
        $region87: #{tpu_custom_call.1} parent=79 // pred_region
          %591 = dma.done %s584, 128
        $region88: #{tpu_custom_call.1} parent=79 // pred_fallthru
          _
        %s592 = sand.u32 %s36, 1
        %s593 = scalar_lea.sflag [#allocation6], %s592
        %s594 = sand.u32 %s140, 1
        %s595 = smul.addr %s594, 8
        %s596 = scalar_lea.vmem [#allocation7], %s595
        // Predicated region
        $region89: #{tpu_custom_call.1} parent=79 // pred_check
          %p597 = pneg %p153
        $region90: #{tpu_custom_call.1} parent=79 // pred_check_branch
          %599 = sbr.rel (%p597) target = $region92
        $region91: #{tpu_custom_call.1} parent=79 // pred_region
          %600 = dma.done %s593, 128
        $region92: #{tpu_custom_call.1} parent=79 // pred_fallthru
          _
        // Predicated region
        $region93: #{tpu_custom_call.1} parent=79 // pred_check
          %p601 = pneg %p202
        $region94: #{tpu_custom_call.1} parent=79 // pred_check_branch
          %603 = sbr.rel (%p601) target = $region96
        $region95: #{tpu_custom_call.1} parent=79 // pred_region
          %604 = dma.done [#allocation9], 2048
        $region96: #{tpu_custom_call.1} parent=79 // pred_fallthru
          _
        // Predicated region
        $region97: #{tpu_custom_call.1} parent=79 // pred_check
          %p605 = pneg %p244
        $region98: #{tpu_custom_call.1} parent=79 // pred_check_branch
          %607 = sbr.rel (%p605) target = $region100
        $region99: #{tpu_custom_call.1} parent=79 // pred_region
          %608 = dma.done [#allocation9], 2048
        $region100: #{tpu_custom_call.1} parent=79 // pred_fallthru
          _
        %s609 = sand.u32 %s58, 1
        %s610 = scalar_lea.sflag [#allocation3], %s609
        %s611 = sand.u32 %s58, 1
        %s612 = smul.addr %s611, 8
        %s613 = scalar_lea.vmem [#allocation2], %s612
        %p614 = pneg %p71
        %p615 = pneg %p68
        %p616 = scmp.lt.s32.totalorder %s40, 1
        %s617 = scalar_select %p616, %s40, 1
        %p618 = scmp.lt.s32.totalorder %s41, 0
        %s619 = scalar_select %p618, %s41, 0
        %s620 = sadd.s32 %s619, %s617
        %s621 = smul.addr %s620, 8
        %s622 = scalar_lea.vmem %s1, %s621
        %p623 = pneg %p99
        %p624 = pneg %p96
        %s625 = sand.u32 %s36, 1
        %s626 = scalar_lea.sflag [#allocation6], %s625
        %s627 = sand.u32 %s112, 1
        %s628 = smul.addr %s627, 8
        %s629 = scalar_lea.vmem [#allocation5], %s628
        %p630 = pneg %p125
        %p631 = pneg %p122
        %s632 = sand.u32 %s36, 1
        %s633 = scalar_lea.sflag [#allocation6], %s632
        %s634 = sand.u32 %s140, 1
        %s635 = smul.addr %s634, 8
        %s636 = scalar_lea.vmem [#allocation7], %s635
        %p637 = pneg %p153
        %p638 = pneg %p150
        %s639 = smul.u32 8, %s41
        %p640 = scmp.lt.s32.totalorder %s40, 1
        %s641 = scalar_select %p640, %s40, 1
        %p642 = scmp.lt.s32.totalorder %s639, 7
        %s643 = scalar_select %p642, %s639, 7
        %s644 = smul.addr %s641, 8
        %s645 = sadd.s32 %s643, %s644
        %s646 = smul.addr %s645, 8
        %s647 = scalar_lea.vmem %s4, %s646
        %p648 = pneg %p181
        %p649 = pneg %p178
        %p650 = pneg %p202
        %p651 = pneg %p199
        %p652 = pneg %p223
        %p653 = pneg %p220
        %p654 = pneg %p244
        %p655 = pneg %p241
        %p656 = pneg %p265
        %p657 = pneg %p262
        %p658 = pneg %p286
        %p659 = pneg %p283
        %p660 = pneg %p307
        %p661 = pneg %p304
        %p662 = pneg %p328
        %p663 = pneg %p325
        %p664 = pneg %p349
        %p665 = pneg %p346
        %p666 = pneg %p370
        %p667 = pneg %p367
        %p668 = pneg %p391
        %p669 = pneg %p388
        %p670 = pneg %p419
        %p671 = pneg %p416
        %s672 = sand.u32 %s406, 1
        %s673 = scalar_lea.sflag [#allocation4], %s672
        %s674 = sand.u32 %s406, 1
        %s675 = smul.addr %s674, 8
        %s676 = scalar_lea.vmem [#allocation11], %s675
        %p677 = scmp.lt.s32.totalorder %s40, 1
        %s678 = scalar_select %p677, %s40, 1
        %p679 = scmp.lt.s32.totalorder %s41, 0
        %s680 = scalar_select %p679, %s41, 0
        %s681 = sadd.s32 %s680, %s678
        %s682 = smul.addr %s681, 8
        %s683 = scalar_lea.vmem %s1, %s682
        %s684 = smul.u32 8, %s41
        %p685 = scmp.lt.s32.totalorder %s40, 1
        %s686 = scalar_select %p685, %s40, 1
        %p687 = scmp.lt.s32.totalorder %s684, 7
        %s688 = scalar_select %p687, %s684, 7
        %s689 = smul.addr %s686, 8
        %s690 = sadd.s32 %s688, %s689
        %s691 = smul.addr %s690, 8
        %s692 = scalar_lea.vmem %s4, %s691
        %s693 = smul.u32 8, %s41
        %v695 = vld [vmem:[%s578] sm:$0xff]
        %v696 = vld [vmem:[%s587] sm:$0xff]
        %v697 = vld [vmem:[%s692] sm:$0xff]
        %v698 = vld [vmem:[%s692 + $0x8] sm:$0xff]
        %v699 = vld [vmem:[%s692 + $0x10] sm:$0xff]
        %v700 = vld [vmem:[%s692 + $0x18] sm:$0xff]
        %v701 = vld [vmem:[%s692 + $0x20] sm:$0xff]
        %v702 = vld [vmem:[%s692 + $0x28] sm:$0xff]
        %v703 = vld [vmem:[%s692 + $0x30] sm:$0xff]
        %v704 = vld [vmem:[%s692 + $0x38] sm:$0xff]
        %v705 = vld [vmem:[%s683] sm:$0xff]
        %vm706 = vcmp.eq.f32.partialorder %v705, 0.0
        %v707 = vsel %vm706, -1e+09, 0.0
        %v708 = vld [vmem:[%s596] sm:$0xff]
        %vm709 = vcmp.eq.f32.partialorder %v708, 0.0
        %v710 = vsel %vm709, -1e+09, 0.0
        %v711 = vld [vmem:[%s9] sm:$0x1]
        %v712 = vld [vmem:[%s10] sm:$0x1]
        %vm713 = vcmask 261120
        %v714 = vsel %vm713, %v695, 0.0
        %715 = vadd.xlane.f32.xlu0 %v714
        %v716 = vpop.xlane.xlu0 %715
        %v717 = vrcp.pop 32.0
        %v718 = vmul.f32 %v716, %v717
        %v719 = vsub.f32 %v695, %v718
        %v720 = vmul.f32 %v719, %v719
        %v721 = vsel %vm713, %v720, 0.0
        %722 = vadd.xlane.f32.xlu0 %v721
        %v723 = vpop.xlane.xlu0 %722
        %v724 = vmul.f32 %v723, %v717
        %v725 = vadd.f32 %v724, 1e-06
        %v726 = vrsqrt.pop %v725
        %v727 = vmul.f32 %v719, %v726
        %v728 = vlaneseq
        %v729 = vshrl.u32 %v728, 7
        %v730 = vsub.s32 0, %v729
        %v731 = vrot.slane %v711, %v730
        %v732 = vmul.f32 %v727, %v731
        %v733 = vlaneseq
        %v734 = vshrl.u32 %v733, 7
        %v735 = vsub.s32 0, %v734
        %v736 = vrot.slane %v712, %v735
        %v737 = vadd.f32 %v732, %v736
        %v738 = vpack.c.bf16 %v737, %v737
        %v739 = vld [vmem:[#allocation8] sm:$0xff]
        %v740 = vld [vmem:[#allocation8 + $0x8] sm:$0xff]
        %v741 = vld [vmem:[#allocation8 + $0x10] sm:$0xff]
        %v742 = vld [vmem:[#allocation8 + $0x18] sm:$0xff]
        %v743 = vpack.c.bf16 %v740, %v739
        %v744 = vpack.c.bf16 %v742, %v741
        %v745 = vld [vmem:[%s6] sm:$0x1]
        %v746 = vlaneseq
        %v747 = vshrl.u32 %v746, 7
        %v748 = vsub.s32 0, %v747
        %v749 = vrot.slane %v745, %v748
        %v751 = vsel %vm713, %v738, 0
        %753 = vmatprep.subr.bf16.mxu0 0
        %754 = vmatpush1.bf16.msra.mxu0 %v743
        %755 = vmatprep.subr.bf16.mxu0 0
        %756 = vmatpush1.bf16.msra.mxu0 %v744
        %757 = vmatprep.subr.bf16.mxu0 0
        %758 = vmatpush1.bf16.msra.mxu0 0
        %759 = vmatprep.subr.bf16.mxu0 0
        %760 = vmatpush1.bf16.msra.mxu0 0
        %761 = vmatprep.subr.bf16.mxu0 0
        %762 = vmatpush1.bf16.msra.mxu0 0
        %763 = vmatprep.subr.bf16.mxu0 0
        %764 = vmatpush1.bf16.msra.mxu0 0
        %765 = vmatprep.subr.bf16.mxu0 0
        %766 = vmatpush1.bf16.msra.mxu0 0
        %767 = vmatprep.subr.bf16.mxu0 0
        %768 = vmatpush1.bf16.msra.mxu0 0
        %769 = vmatprep.subr.bf16.mxu0 0
        %770 = vmatpush1.bf16.msra.mxu0 0
        %771 = vmatprep.subr.bf16.mxu0 0
        %772 = vmatpush1.bf16.msra.mxu0 0
        %773 = vmatprep.subr.bf16.mxu0 0
        %774 = vmatpush1.bf16.msra.mxu0 0
        %775 = vmatprep.subr.bf16.mxu0 0
        %776 = vmatpush1.bf16.msra.mxu0 0
        %777 = vmatprep.subr.bf16.mxu0 0
        %778 = vmatpush1.bf16.msra.mxu0 0
        %779 = vmatprep.subr.bf16.mxu0 0
        %780 = vmatpush1.bf16.msra.mxu0 0
        %781 = vmatprep.subr.bf16.mxu0 0
        %782 = vmatpush1.bf16.msra.mxu0 0
        %783 = vmatprep.subr.bf16.mxu0 0
        %784 = vmatpush1.bf16.msra.mxu0 0
        %785 = vmatprep.mubr.bf16.mxu0 0
        %786 = vmatmul.mubr.bf16.gmra.mrb[0].mxu0 %v751
        %v787 = vpop.f32.mrb[0].mxu0
        %v788 = vadd.f32 %v749, %v787
        %v789 = vpop.f32.mrb[0].mxu0
        %v790 = vpop.f32.mrb[0].mxu0
        %v791 = vpop.f32.mrb[0].mxu0
        %792 = vdwg.mxu0
        %s793 = scalar_lea.vmem [#allocation8], 32
        %v794 = vld [vmem:[%s793] sm:$0xff]
        %v795 = vld [vmem:[%s793 + $0x8] sm:$0xff]
        %v796 = vld [vmem:[%s793 + $0x10] sm:$0xff]
        %v797 = vld [vmem:[%s793 + $0x18] sm:$0xff]
        %v798 = vpack.c.bf16 %v795, %v794
        %v799 = vpack.c.bf16 %v797, %v796
        %v800 = vld [vmem:[%s6 + $0x1] sm:$0x1]
        %v801 = vlaneseq
        %v802 = vshrl.u32 %v801, 7
        %v803 = vsub.s32 0, %v802
        %v804 = vrot.slane %v800, %v803
        %805 = vmatprep.subr.bf16.mxu0 0
        %806 = vmatpush1.bf16.msra.mxu0 %v798
        %807 = vmatprep.subr.bf16.mxu0 0
        %808 = vmatpush1.bf16.msra.mxu0 %v799
        %809 = vmatprep.subr.bf16.mxu0 0
        %810 = vmatpush1.bf16.msra.mxu0 0
        %811 = vmatprep.subr.bf16.mxu0 0
        %812 = vmatpush1.bf16.msra.mxu0 0
        %813 = vmatprep.subr.bf16.mxu0 0
        %814 = vmatpush1.bf16.msra.mxu0 0
        %815 = vmatprep.subr.bf16.mxu0 0
        %816 = vmatpush1.bf16.msra.mxu0 0
        %817 = vmatprep.subr.bf16.mxu0 0
        %818 = vmatpush1.bf16.msra.mxu0 0
        %819 = vmatprep.subr.bf16.mxu0 0
        %820 = vmatpush1.bf16.msra.mxu0 0
        %821 = vmatprep.subr.bf16.mxu0 0
        %822 = vmatpush1.bf16.msra.mxu0 0
        %823 = vmatprep.subr.bf16.mxu0 0
        %824 = vmatpush1.bf16.msra.mxu0 0
        %825 = vmatprep.subr.bf16.mxu0 0
        %826 = vmatpush1.bf16.msra.mxu0 0
        %827 = vmatprep.subr.bf16.mxu0 0
        %828 = vmatpush1.bf16.msra.mxu0 0
        %829 = vmatprep.subr.bf16.mxu0 0
        %830 = vmatpush1.bf16.msra.mxu0 0
        %831 = vmatprep.subr.bf16.mxu0 0
        %832 = vmatpush1.bf16.msra.mxu0 0
        %833 = vmatprep.subr.bf16.mxu0 0
        %834 = vmatpush1.bf16.msra.mxu0 0
        %835 = vmatprep.subr.bf16.mxu0 0
        %836 = vmatpush1.bf16.msra.mxu0 0
        %837 = vmatprep.mubr.bf16.mxu0 0
        %838 = vmatmul.mubr.bf16.gmra.mrb[0].mxu0 %v751
        %v839 = vpop.f32.mrb[0].mxu0
        %v840 = vadd.f32 %v804, %v839
        %v841 = vpop.f32.mrb[0].mxu0
        %v842 = vpop.f32.mrb[0].mxu0
        %v843 = vpop.f32.mrb[0].mxu0
        %844 = vdwg.mxu0
        %s845 = scalar_lea.vmem [#allocation8], 64
        %v846 = vld [vmem:[%s845] sm:$0xff]
        %v847 = vld [vmem:[%s845 + $0x8] sm:$0xff]
        %v848 = vld [vmem:[%s845 + $0x10] sm:$0xff]
        %v849 = vld [vmem:[%s845 + $0x18] sm:$0xff]
        %v850 = vpack.c.bf16 %v847, %v846
        %v851 = vpack.c.bf16 %v849, %v848
        %v852 = vld [vmem:[%s6 + $0x2] sm:$0x1]
        %v853 = vlaneseq
        %v854 = vshrl.u32 %v853, 7
        %v855 = vsub.s32 0, %v854
        %v856 = vrot.slane %v852, %v855
        %857 = vmatprep.subr.bf16.mxu0 0
        %858 = vmatpush1.bf16.msra.mxu0 %v850
        %859 = vmatprep.subr.bf16.mxu0 0
        %860 = vmatpush1.bf16.msra.mxu0 %v851
        %861 = vmatprep.subr.bf16.mxu0 0
        %862 = vmatpush1.bf16.msra.mxu0 0
        %863 = vmatprep.subr.bf16.mxu0 0
        %864 = vmatpush1.bf16.msra.mxu0 0
        %865 = vmatprep.subr.bf16.mxu0 0
        %866 = vmatpush1.bf16.msra.mxu0 0
        %867 = vmatprep.subr.bf16.mxu0 0
        %868 = vmatpush1.bf16.msra.mxu0 0
        %869 = vmatprep.subr.bf16.mxu0 0
        %870 = vmatpush1.bf16.msra.mxu0 0
        %871 = vmatprep.subr.bf16.mxu0 0
        %872 = vmatpush1.bf16.msra.mxu0 0
        %873 = vmatprep.subr.bf16.mxu0 0
        %874 = vmatpush1.bf16.msra.mxu0 0
        %875 = vmatprep.subr.bf16.mxu0 0
        %876 = vmatpush1.bf16.msra.mxu0 0
        %877 = vmatprep.subr.bf16.mxu0 0
        %878 = vmatpush1.bf16.msra.mxu0 0
        %879 = vmatprep.subr.bf16.mxu0 0
        %880 = vmatpush1.bf16.msra.mxu0 0
        %881 = vmatprep.subr.bf16.mxu0 0
        %882 = vmatpush1.bf16.msra.mxu0 0
        %883 = vmatprep.subr.bf16.mxu0 0
        %884 = vmatpush1.bf16.msra.mxu0 0
        %885 = vmatprep.subr.bf16.mxu0 0
        %886 = vmatpush1.bf16.msra.mxu0 0
        %887 = vmatprep.subr.bf16.mxu0 0
        %888 = vmatpush1.bf16.msra.mxu0 0
        %889 = vmatprep.mubr.bf16.mxu0 0
        %890 = vmatmul.mubr.bf16.gmra.mrb[0].mxu0 %v751
        %v891 = vpop.f32.mrb[0].mxu0
        %v892 = vadd.f32 %v856, %v891
        %v893 = vpop.f32.mrb[0].mxu0
        %v894 = vpop.f32.mrb[0].mxu0
        %v895 = vpop.f32.mrb[0].mxu0
        %896 = vdwg.mxu0
        %898 = vrot.lane.b32.xlu0 %v788, 120
        %v899 = vpop.permute.xlu0 %898
        %901 = vrot.lane.b32.xlu0 %v788, 112
        %v902 = vpop.permute.xlu0 %901
        %904 = vrot.lane.b32.xlu0 %v788, 104
        %v905 = vpop.permute.xlu0 %904
        %908 = vrot.lane.b32.xlu0 %v840, 120
        %v909 = vpop.permute.xlu0 %908
        %911 = vrot.lane.b32.xlu0 %v840, 112
        %v912 = vpop.permute.xlu0 %911
        %914 = vrot.lane.b32.xlu0 %v840, 104
        %v915 = vpop.permute.xlu0 %914
        %918 = vrot.lane.b32.xlu0 %v892, 120
        %v919 = vpop.permute.xlu0 %918
        %921 = vrot.lane.b32.xlu0 %v892, 112
        %v922 = vpop.permute.xlu0 %921
        %924 = vrot.lane.b32.xlu0 %v892, 104
        %v925 = vpop.permute.xlu0 %924
        %v927 = vpack.c.bf16 %v788, %v788
        %v928 = vpack.c.bf16 %v899, %v899
        %v929 = vpack.c.bf16 %v902, %v902
        %v930 = vpack.c.bf16 %v905, %v905
        %v931 = vpack.c.bf16 %v840, %v840
        %v932 = vpack.c.bf16 %v909, %v909
        %v933 = vpack.c.bf16 %v912, %v912
        %v934 = vpack.c.bf16 %v915, %v915
        %vm935 = vcmask 64512
        %v937 = vsel %vm935, %v927, 0
        %v940 = vsel %vm935, %v931, 0
        %942 = vmatprep.subr.bf16.mxu0 0
        %943 = vmatpush1.bf16.xpose.msra.mxu0 %v940
        %944 = vmatprep.subr.bf16.mxu0 0
        %945 = vmatpush1.bf16.xpose.msra.mxu0 0
        %946 = vmatprep.subr.bf16.mxu0 0
        %947 = vmatpush1.bf16.xpose.msra.mxu0 0
        %948 = vmatprep.subr.bf16.mxu0 0
        %949 = vmatpush1.bf16.xpose.msra.mxu0 0
        %950 = vmatprep.subr.bf16.mxu0 0
        %951 = vmatpush1.bf16.xpose.msra.mxu0 0
        %952 = vmatprep.subr.bf16.mxu0 0
        %953 = vmatpush1.bf16.xpose.msra.mxu0 0
        %954 = vmatprep.subr.bf16.mxu0 0
        %955 = vmatpush1.bf16.xpose.msra.mxu0 0
        %956 = vmatprep.subr.bf16.mxu0 0
        %957 = vmatpush1.bf16.xpose.msra.mxu0 0
        %958 = vmatprep.subr.bf16.mxu0 0
        %959 = vmatpush1.bf16.xpose.msra.mxu0 0
        %960 = vmatprep.subr.bf16.mxu0 0
        %961 = vmatpush1.bf16.xpose.msra.mxu0 0
        %962 = vmatprep.subr.bf16.mxu0 0
        %963 = vmatpush1.bf16.xpose.msra.mxu0 0
        %964 = vmatprep.subr.bf16.mxu0 0
        %965 = vmatpush1.bf16.xpose.msra.mxu0 0
        %966 = vmatprep.subr.bf16.mxu0 0
        %967 = vmatpush1.bf16.xpose.msra.mxu0 0
        %968 = vmatprep.subr.bf16.mxu0 0
        %969 = vmatpush1.bf16.xpose.msra.mxu0 0
        %970 = vmatprep.subr.bf16.mxu0 0
        %971 = vmatpush1.bf16.xpose.msra.mxu0 0
        %972 = vmatprep.subr.bf16.mxu0 0
        %973 = vmatpush1.bf16.xpose.msra.mxu0 0
        %974 = vmatprep.mubr.bf16.mxu0 0
        %975 = vmatmul.mubr.bf16.gmra.mrb[0].mxu0 %v937
        %v976 = vpop.f32.mrb[0].mxu0
        %v977 = vadd.f32 0.0, %v976
        %v978 = vpop.f32.mrb[0].mxu0
        %v979 = vpop.f32.mrb[0].mxu0
        %v980 = vpop.f32.mrb[0].mxu0
        %981 = vdwg.mxu0
        %v983 = vsel %vm935, %v928, 0
        %v986 = vsel %vm935, %v932, 0
        %988 = vmatprep.subr.bf16.mxu0 0
        %989 = vmatpush1.bf16.xpose.msra.mxu0 %v986
        %990 = vmatprep.subr.bf16.mxu0 0
        %991 = vmatpush1.bf16.xpose.msra.mxu0 0
        %992 = vmatprep.subr.bf16.mxu0 0
        %993 = vmatpush1.bf16.xpose.msra.mxu0 0
        %994 = vmatprep.subr.bf16.mxu0 0
        %995 = vmatpush1.bf16.xpose.msra.mxu0 0
        %996 = vmatprep.subr.bf16.mxu0 0
        %997 = vmatpush1.bf16.xpose.msra.mxu0 0
        %998 = vmatprep.subr.bf16.mxu0 0
        %999 = vmatpush1.bf16.xpose.msra.mxu0 0
        %1000 = vmatprep.subr.bf16.mxu0 0
        %1001 = vmatpush1.bf16.xpose.msra.mxu0 0
        %1002 = vmatprep.subr.bf16.mxu0 0
        %1003 = vmatpush1.bf16.xpose.msra.mxu0 0
        %1004 = vmatprep.subr.bf16.mxu0 0
        %1005 = vmatpush1.bf16.xpose.msra.mxu0 0
        %1006 = vmatprep.subr.bf16.mxu0 0
        %1007 = vmatpush1.bf16.xpose.msra.mxu0 0
        %1008 = vmatprep.subr.bf16.mxu0 0
        %1009 = vmatpush1.bf16.xpose.msra.mxu0 0
        %1010 = vmatprep.subr.bf16.mxu0 0
        %1011 = vmatpush1.bf16.xpose.msra.mxu0 0
        %1012 = vmatprep.subr.bf16.mxu0 0
        %1013 = vmatpush1.bf16.xpose.msra.mxu0 0
        %1014 = vmatprep.subr.bf16.mxu0 0
        %1015 = vmatpush1.bf16.xpose.msra.mxu0 0
        %1016 = vmatprep.subr.bf16.mxu0 0
        %1017 = vmatpush1.bf16.xpose.msra.mxu0 0
        %1018 = vmatprep.subr.bf16.mxu0 0
        %1019 = vmatpush1.bf16.xpose.msra.mxu0 0
        %1020 = vmatprep.mubr.bf16.mxu0 0
        %1021 = vmatmul.mubr.bf16.gmra.mrb[0].mxu0 %v983
        %v1022 = vpop.f32.mrb[0].mxu0
        %v1023 = vadd.f32 0.0, %v1022
        %v1024 = vpop.f32.mrb[0].mxu0
        %v1025 = vpop.f32.mrb[0].mxu0
        %v1026 = vpop.f32.mrb[0].mxu0
        %1027 = vdwg.mxu0
        %v1029 = vsel %vm935, %v929, 0
        %v1032 = vsel %vm935, %v933, 0
        %1034 = vmatprep.subr.bf16.mxu0 0
        %1035 = vmatpush1.bf16.xpose.msra.mxu0 %v1032
        %1036 = vmatprep.subr.bf16.mxu0 0
        %1037 = vmatpush1.bf16.xpose.msra.mxu0 0
        %1038 = vmatprep.subr.bf16.mxu0 0
        %1039 = vmatpush1.bf16.xpose.msra.mxu0 0
        %1040 = vmatprep.subr.bf16.mxu0 0
        %1041 = vmatpush1.bf16.xpose.msra.mxu0 0
        %1042 = vmatprep.subr.bf16.mxu0 0
        %1043 = vmatpush1.bf16.xpose.msra.mxu0 0
        %1044 = vmatprep.subr.bf16.mxu0 0
        %1045 = vmatpush1.bf16.xpose.msra.mxu0 0
        %1046 = vmatprep.subr.bf16.mxu0 0
        %1047 = vmatpush1.bf16.xpose.msra.mxu0 0
        %1048 = vmatprep.subr.bf16.mxu0 0
        %1049 = vmatpush1.bf16.xpose.msra.mxu0 0
        %1050 = vmatprep.subr.bf16.mxu0 0
        %1051 = vmatpush1.bf16.xpose.msra.mxu0 0
        %1052 = vmatprep.subr.bf16.mxu0 0
        %1053 = vmatpush1.bf16.xpose.msra.mxu0 0
        %1054 = vmatprep.subr.bf16.mxu0 0
        %1055 = vmatpush1.bf16.xpose.msra.mxu0 0
        %1056 = vmatprep.subr.bf16.mxu0 0
        %1057 = vmatpush1.bf16.xpose.msra.mxu0 0
        %1058 = vmatprep.subr.bf16.mxu0 0
        %1059 = vmatpush1.bf16.xpose.msra.mxu0 0
        %1060 = vmatprep.subr.bf16.mxu0 0
        %1061 = vmatpush1.bf16.xpose.msra.mxu0 0
        %1062 = vmatprep.subr.bf16.mxu0 0
        %1063 = vmatpush1.bf16.xpose.msra.mxu0 0
        %1064 = vmatprep.subr.bf16.mxu0 0
        %1065 = vmatpush1.bf16.xpose.msra.mxu0 0
        %1066 = vmatprep.mubr.bf16.mxu0 0
        %1067 = vmatmul.mubr.bf16.gmra.mrb[0].mxu0 %v1029
        %v1068 = vpop.f32.mrb[0].mxu0
        %v1069 = vadd.f32 0.0, %v1068
        %v1070 = vpop.f32.mrb[0].mxu0
        %v1071 = vpop.f32.mrb[0].mxu0
        %v1072 = vpop.f32.mrb[0].mxu0
        %1073 = vdwg.mxu0
        %v1075 = vsel %vm935, %v930, 0
        %v1078 = vsel %vm935, %v934, 0
        %1080 = vmatprep.subr.bf16.mxu0 0
        %1081 = vmatpush1.bf16.xpose.msra.mxu0 %v1078
        %1082 = vmatprep.subr.bf16.mxu0 0
        %1083 = vmatpush1.bf16.xpose.msra.mxu0 0
        %1084 = vmatprep.subr.bf16.mxu0 0
        %1085 = vmatpush1.bf16.xpose.msra.mxu0 0
        %1086 = vmatprep.subr.bf16.mxu0 0
        %1087 = vmatpush1.bf16.xpose.msra.mxu0 0
        %1088 = vmatprep.subr.bf16.mxu0 0
        %1089 = vmatpush1.bf16.xpose.msra.mxu0 0
        %1090 = vmatprep.subr.bf16.mxu0 0
        %1091 = vmatpush1.bf16.xpose.msra.mxu0 0
        %1092 = vmatprep.subr.bf16.mxu0 0
        %1093 = vmatpush1.bf16.xpose.msra.mxu0 0
        %1094 = vmatprep.subr.bf16.mxu0 0
        %1095 = vmatpush1.bf16.xpose.msra.mxu0 0
        %1096 = vmatprep.subr.bf16.mxu0 0
        %1097 = vmatpush1.bf16.xpose.msra.mxu0 0
        %1098 = vmatprep.subr.bf16.mxu0 0
        %1099 = vmatpush1.bf16.xpose.msra.mxu0 0
        %1100 = vmatprep.subr.bf16.mxu0 0
        %1101 = vmatpush1.bf16.xpose.msra.mxu0 0
        %1102 = vmatprep.subr.bf16.mxu0 0
        %1103 = vmatpush1.bf16.xpose.msra.mxu0 0
        %1104 = vmatprep.subr.bf16.mxu0 0
        %1105 = vmatpush1.bf16.xpose.msra.mxu0 0
        %1106 = vmatprep.subr.bf16.mxu0 0
        %1107 = vmatpush1.bf16.xpose.msra.mxu0 0
        %1108 = vmatprep.subr.bf16.mxu0 0
        %1109 = vmatpush1.bf16.xpose.msra.mxu0 0
        %1110 = vmatprep.subr.bf16.mxu0 0
        %1111 = vmatpush1.bf16.xpose.msra.mxu0 0
        %1112 = vmatprep.mubr.bf16.mxu0 0
        %1113 = vmatmul.mubr.bf16.gmra.mrb[0].mxu0 %v1075
        %v1114 = vpop.f32.mrb[0].mxu0
        %v1115 = vadd.f32 0.0, %v1114
        %v1116 = vpop.f32.mrb[0].mxu0
        %v1117 = vpop.f32.mrb[0].mxu0
        %v1118 = vpop.f32.mrb[0].mxu0
        %1119 = vdwg.mxu0
        %v1120 = vmul.f32 %v977, 0.35355338
        %v1121 = vmul.f32 %v1023, 0.35355338
        %v1122 = vmul.f32 %v1069, 0.35355338
        %v1123 = vmul.f32 %v1115, 0.35355338
        %v1124 = vadd.f32 %v1120, %v707
        %v1125 = vadd.f32 %v1121, %v707
        %v1126 = vadd.f32 %v1122, %v707
        %v1127 = vadd.f32 %v1123, %v707
        %v1128 = vsel %vm935, %v1124, -inf
        %1129 = vmax.xlane.f32.xlu0 %v1128
        %v1130 = vpop.xlane.xlu0 %1129
        %v1131 = vsel %vm935, %v1125, -inf
        %1132 = vmax.xlane.f32.xlu0 %v1131
        %v1133 = vpop.xlane.xlu0 %1132
        %v1134 = vsel %vm935, %v1126, -inf
        %1135 = vmax.xlane.f32.xlu0 %v1134
        %v1136 = vpop.xlane.xlu0 %1135
        %v1137 = vsel %vm935, %v1127, -inf
        %1138 = vmax.xlane.f32.xlu0 %v1137
        %v1139 = vpop.xlane.xlu0 %1138
        %v1140 = vsub.f32 %v1124, %v1130
        %v1141 = vsub.f32 %v1125, %v1133
        %v1142 = vsub.f32 %v1126, %v1136
        %v1143 = vsub.f32 %v1127, %v1139
        %v1144 = vmul.f32 %v1140, 1.442695
        %v1145 = vpow.pop %v1144
        %v1146 = vmul.f32 %v1141, 1.442695
        %v1147 = vpow.pop %v1146
        %v1148 = vmul.f32 %v1142, 1.442695
        %v1149 = vpow.pop %v1148
        %v1150 = vmul.f32 %v1143, 1.442695
        %v1151 = vpow.pop %v1150
        %v1152 = vsel %vm935, %v1145, 0.0
        %1153 = vadd.xlane.f32.xlu0 %v1152
        %v1154 = vpop.xlane.xlu0 %1153
        %v1155 = vsel %vm935, %v1147, 0.0
        %1156 = vadd.xlane.f32.xlu0 %v1155
        %v1157 = vpop.xlane.xlu0 %1156
        %v1158 = vsel %vm935, %v1149, 0.0
        %1159 = vadd.xlane.f32.xlu0 %v1158
        %v1160 = vpop.xlane.xlu0 %1159
        %v1161 = vsel %vm935, %v1151, 0.0
        %1162 = vadd.xlane.f32.xlu0 %v1161
        %v1163 = vpop.xlane.xlu0 %1162
        %v1164 = vrcp.pop %v1154
        %v1165 = vrcp.pop %v1157
        %v1166 = vrcp.pop %v1160
        %v1167 = vrcp.pop %v1163
        %v1168 = vmul.f32 %v1145, %v1164
        %v1169 = vmul.f32 %v1147, %v1165
        %v1170 = vmul.f32 %v1149, %v1166
        %v1171 = vmul.f32 %v1151, %v1167
        %v1172 = vpack.c.bf16 %v1168, %v1168
        %v1173 = vpack.c.bf16 %v1169, %v1169
        %v1174 = vpack.c.bf16 %v1170, %v1170
        %v1175 = vpack.c.bf16 %v1171, %v1171
        %v1176 = vpack.c.bf16 %v892, %v892
        %v1177 = vpack.c.bf16 %v919, %v919
        %v1178 = vpack.c.bf16 %v922, %v922
        %v1179 = vpack.c.bf16 %v925, %v925
        %v1181 = vsel %vm935, %v1172, 0
        %vm1183 = vcmask 1043456
        %v1185 = vsel %vm1183, %v1176, 0
        %1187 = vmatprep.subr.bf16.mxu0 0
        %1188 = vmatpush1.bf16.msra.mxu0 %v1185
        %1189 = vmatprep.subr.bf16.mxu0 0
        %1190 = vmatpush1.bf16.msra.mxu0 0
        %1191 = vmatprep.subr.bf16.mxu0 0
        %1192 = vmatpush1.bf16.msra.mxu0 0
        %1193 = vmatprep.subr.bf16.mxu0 0
        %1194 = vmatpush1.bf16.msra.mxu0 0
        %1195 = vmatprep.subr.bf16.mxu0 0
        %1196 = vmatpush1.bf16.msra.mxu0 0
        %1197 = vmatprep.subr.bf16.mxu0 0
        %1198 = vmatpush1.bf16.msra.mxu0 0
        %1199 = vmatprep.subr.bf16.mxu0 0
        %1200 = vmatpush1.bf16.msra.mxu0 0
        %1201 = vmatprep.subr.bf16.mxu0 0
        %1202 = vmatpush1.bf16.msra.mxu0 0
        %1203 = vmatprep.subr.bf16.mxu0 0
        %1204 = vmatpush1.bf16.msra.mxu0 0
        %1205 = vmatprep.subr.bf16.mxu0 0
        %1206 = vmatpush1.bf16.msra.mxu0 0
        %1207 = vmatprep.subr.bf16.mxu0 0
        %1208 = vmatpush1.bf16.msra.mxu0 0
        %1209 = vmatprep.subr.bf16.mxu0 0
        %1210 = vmatpush1.bf16.msra.mxu0 0
        %1211 = vmatprep.subr.bf16.mxu0 0
        %1212 = vmatpush1.bf16.msra.mxu0 0
        %1213 = vmatprep.subr.bf16.mxu0 0
        %1214 = vmatpush1.bf16.msra.mxu0 0
        %1215 = vmatprep.subr.bf16.mxu0 0
        %1216 = vmatpush1.bf16.msra.mxu0 0
        %1217 = vmatprep.subr.bf16.mxu0 0
        %1218 = vmatpush1.bf16.msra.mxu0 0
        %1219 = vmatprep.mubr.bf16.mxu0 0
        %1220 = vmatmul.mubr.bf16.gmra.mrb[0].mxu0 %v1181
        %v1221 = vpop.f32.mrb[0].mxu0
        %v1222 = vadd.f32 0.0, %v1221
        %v1223 = vpop.f32.mrb[0].mxu0
        %v1224 = vpop.f32.mrb[0].mxu0
        %v1225 = vpop.f32.mrb[0].mxu0
        %1226 = vdwg.mxu0
        %v1228 = vsel %vm935, %v1173, 0
        %v1231 = vsel %vm1183, %v1177, 0
        %1233 = vmatprep.subr.bf16.mxu0 0
        %1234 = vmatpush1.bf16.msra.mxu0 %v1231
        %1235 = vmatprep.subr.bf16.mxu0 0
        %1236 = vmatpush1.bf16.msra.mxu0 0
        %1237 = vmatprep.subr.bf16.mxu0 0
        %1238 = vmatpush1.bf16.msra.mxu0 0
        %1239 = vmatprep.subr.bf16.mxu0 0
        %1240 = vmatpush1.bf16.msra.mxu0 0
        %1241 = vmatprep.subr.bf16.mxu0 0
        %1242 = vmatpush1.bf16.msra.mxu0 0
        %1243 = vmatprep.subr.bf16.mxu0 0
        %1244 = vmatpush1.bf16.msra.mxu0 0
        %1245 = vmatprep.subr.bf16.mxu0 0
        %1246 = vmatpush1.bf16.msra.mxu0 0
        %1247 = vmatprep.subr.bf16.mxu0 0
        %1248 = vmatpush1.bf16.msra.mxu0 0
        %1249 = vmatprep.subr.bf16.mxu0 0
        %1250 = vmatpush1.bf16.msra.mxu0 0
        %1251 = vmatprep.subr.bf16.mxu0 0
        %1252 = vmatpush1.bf16.msra.mxu0 0
        %1253 = vmatprep.subr.bf16.mxu0 0
        %1254 = vmatpush1.bf16.msra.mxu0 0
        %1255 = vmatprep.subr.bf16.mxu0 0
        %1256 = vmatpush1.bf16.msra.mxu0 0
        %1257 = vmatprep.subr.bf16.mxu0 0
        %1258 = vmatpush1.bf16.msra.mxu0 0
        %1259 = vmatprep.subr.bf16.mxu0 0
        %1260 = vmatpush1.bf16.msra.mxu0 0
        %1261 = vmatprep.subr.bf16.mxu0 0
        %1262 = vmatpush1.bf16.msra.mxu0 0
        %1263 = vmatprep.subr.bf16.mxu0 0
        %1264 = vmatpush1.bf16.msra.mxu0 0
        %1265 = vmatprep.mubr.bf16.mxu0 0
        %1266 = vmatmul.mubr.bf16.gmra.mrb[0].mxu0 %v1228
        %v1267 = vpop.f32.mrb[0].mxu0
        %v1268 = vadd.f32 0.0, %v1267
        %v1269 = vpop.f32.mrb[0].mxu0
        %v1270 = vpop.f32.mrb[0].mxu0
        %v1271 = vpop.f32.mrb[0].mxu0
        %1272 = vdwg.mxu0
        %v1274 = vsel %vm935, %v1174, 0
        %v1277 = vsel %vm1183, %v1178, 0
        %1279 = vmatprep.subr.bf16.mxu0 0
        %1280 = vmatpush1.bf16.msra.mxu0 %v1277
        %1281 = vmatprep.subr.bf16.mxu0 0
        %1282 = vmatpush1.bf16.msra.mxu0 0
        %1283 = vmatprep.subr.bf16.mxu0 0
        %1284 = vmatpush1.bf16.msra.mxu0 0
        %1285 = vmatprep.subr.bf16.mxu0 0
        %1286 = vmatpush1.bf16.msra.mxu0 0
        %1287 = vmatprep.subr.bf16.mxu0 0
        %1288 = vmatpush1.bf16.msra.mxu0 0
        %1289 = vmatprep.subr.bf16.mxu0 0
        %1290 = vmatpush1.bf16.msra.mxu0 0
        %1291 = vmatprep.subr.bf16.mxu0 0
        %1292 = vmatpush1.bf16.msra.mxu0 0
        %1293 = vmatprep.subr.bf16.mxu0 0
        %1294 = vmatpush1.bf16.msra.mxu0 0
        %1295 = vmatprep.subr.bf16.mxu0 0
        %1296 = vmatpush1.bf16.msra.mxu0 0
        %1297 = vmatprep.subr.bf16.mxu0 0
        %1298 = vmatpush1.bf16.msra.mxu0 0
        %1299 = vmatprep.subr.bf16.mxu0 0
        %1300 = vmatpush1.bf16.msra.mxu0 0
        %1301 = vmatprep.subr.bf16.mxu0 0
        %1302 = vmatpush1.bf16.msra.mxu0 0
        %1303 = vmatprep.subr.bf16.mxu0 0
        %1304 = vmatpush1.bf16.msra.mxu0 0
        %1305 = vmatprep.subr.bf16.mxu0 0
        %1306 = vmatpush1.bf16.msra.mxu0 0
        %1307 = vmatprep.subr.bf16.mxu0 0
        %1308 = vmatpush1.bf16.msra.mxu0 0
        %1309 = vmatprep.subr.bf16.mxu0 0
        %1310 = vmatpush1.bf16.msra.mxu0 0
        %1311 = vmatprep.mubr.bf16.mxu0 0
        %1312 = vmatmul.mubr.bf16.gmra.mrb[0].mxu0 %v1274
        %v1313 = vpop.f32.mrb[0].mxu0
        %v1314 = vadd.f32 0.0, %v1313
        %v1315 = vpop.f32.mrb[0].mxu0
        %v1316 = vpop.f32.mrb[0].mxu0
        %v1317 = vpop.f32.mrb[0].mxu0
        %1318 = vdwg.mxu0
        %v1320 = vsel %vm935, %v1175, 0
        %v1323 = vsel %vm1183, %v1179, 0
        %1325 = vmatprep.subr.bf16.mxu0 0
        %1326 = vmatpush1.bf16.msra.mxu0 %v1323
        %1327 = vmatprep.subr.bf16.mxu0 0
        %1328 = vmatpush1.bf16.msra.mxu0 0
        %1329 = vmatprep.subr.bf16.mxu0 0
        %1330 = vmatpush1.bf16.msra.mxu0 0
        %1331 = vmatprep.subr.bf16.mxu0 0
        %1332 = vmatpush1.bf16.msra.mxu0 0
        %1333 = vmatprep.subr.bf16.mxu0 0
        %1334 = vmatpush1.bf16.msra.mxu0 0
        %1335 = vmatprep.subr.bf16.mxu0 0
        %1336 = vmatpush1.bf16.msra.mxu0 0
        %1337 = vmatprep.subr.bf16.mxu0 0
        %1338 = vmatpush1.bf16.msra.mxu0 0
        %1339 = vmatprep.subr.bf16.mxu0 0
        %1340 = vmatpush1.bf16.msra.mxu0 0
        %1341 = vmatprep.subr.bf16.mxu0 0
        %1342 = vmatpush1.bf16.msra.mxu0 0
        %1343 = vmatprep.subr.bf16.mxu0 0
        %1344 = vmatpush1.bf16.msra.mxu0 0
        %1345 = vmatprep.subr.bf16.mxu0 0
        %1346 = vmatpush1.bf16.msra.mxu0 0
        %1347 = vmatprep.subr.bf16.mxu0 0
        %1348 = vmatpush1.bf16.msra.mxu0 0
        %1349 = vmatprep.subr.bf16.mxu0 0
        %1350 = vmatpush1.bf16.msra.mxu0 0
        %1351 = vmatprep.subr.bf16.mxu0 0
        %1352 = vmatpush1.bf16.msra.mxu0 0
        %1353 = vmatprep.subr.bf16.mxu0 0
        %1354 = vmatpush1.bf16.msra.mxu0 0
        %1355 = vmatprep.subr.bf16.mxu0 0
        %1356 = vmatpush1.bf16.msra.mxu0 0
        %1357 = vmatprep.mubr.bf16.mxu0 0
        %1358 = vmatmul.mubr.bf16.gmra.mrb[0].mxu0 %v1320
        %v1359 = vpop.f32.mrb[0].mxu0
        %v1360 = vadd.f32 0.0, %v1359
        %v1361 = vpop.f32.mrb[0].mxu0
        %v1362 = vpop.f32.mrb[0].mxu0
        %v1363 = vpop.f32.mrb[0].mxu0
        %1364 = vdwg.mxu0
        %1366 = vrot.lane.b32.xlu0 %v1268, 8
        %v1367 = vpop.permute.xlu0 %1366
        %1370 = vrot.lane.b32.xlu0 %v1314, 16
        %v1371 = vpop.permute.xlu0 %1370
        %1374 = vrot.lane.b32.xlu0 %v1360, 24
        %v1375 = vpop.permute.xlu0 %1374
        %v1377 = vsel %vm935, %v1222, %v1367
        %vm1378 = vcmask 130048
        %v1379 = vsel %vm1378, %v1377, %v1371
        %vm1380 = vcmask 195584
        %v1381 = vsel %vm1380, %v1379, %v1375
        %v1382 = vpack.c.bf16 %v1381, %v1381
        %s1383 = scalar_lea.vmem [#allocation8], 96
        %v1384 = vld [vmem:[%s1383] sm:$0xff]
        %v1385 = vld [vmem:[%s1383 + $0x8] sm:$0xff]
        %v1386 = vld [vmem:[%s1383 + $0x10] sm:$0xff]
        %v1387 = vld [vmem:[%s1383 + $0x18] sm:$0xff]
        %v1388 = vpack.c.bf16 %v1385, %v1384
        %v1389 = vpack.c.bf16 %v1387, %v1386
        %v1390 = vld [vmem:[%s6 + $0x3] sm:$0x1]
        %v1391 = vlaneseq
        %v1392 = vshrl.u32 %v1391, 7
        %v1393 = vsub.s32 0, %v1392
        %v1394 = vrot.slane %v1390, %v1393
        %v1396 = vsel %vm713, %v1382, 0
        %1398 = vmatprep.subr.bf16.mxu0 0
        %1399 = vmatpush1.bf16.msra.mxu0 %v1388
        %1400 = vmatprep.subr.bf16.mxu0 0
        %1401 = vmatpush1.bf16.msra.mxu0 %v1389
        %1402 = vmatprep.subr.bf16.mxu0 0
        %1403 = vmatpush1.bf16.msra.mxu0 0
        %1404 = vmatprep.subr.bf16.mxu0 0
        %1405 = vmatpush1.bf16.msra.mxu0 0
        %1406 = vmatprep.subr.bf16.mxu0 0
        %1407 = vmatpush1.bf16.msra.mxu0 0
        %1408 = vmatprep.subr.bf16.mxu0 0
        %1409 = vmatpush1.bf16.msra.mxu0 0
        %1410 = vmatprep.subr.bf16.mxu0 0
        %1411 = vmatpush1.bf16.msra.mxu0 0
        %1412 = vmatprep.subr.bf16.mxu0 0
        %1413 = vmatpush1.bf16.msra.mxu0 0
        %1414 = vmatprep.subr.bf16.mxu0 0
        %1415 = vmatpush1.bf16.msra.mxu0 0
        %1416 = vmatprep.subr.bf16.mxu0 0
        %1417 = vmatpush1.bf16.msra.mxu0 0
        %1418 = vmatprep.subr.bf16.mxu0 0
        %1419 = vmatpush1.bf16.msra.mxu0 0
        %1420 = vmatprep.subr.bf16.mxu0 0
        %1421 = vmatpush1.bf16.msra.mxu0 0
        %1422 = vmatprep.subr.bf16.mxu0 0
        %1423 = vmatpush1.bf16.msra.mxu0 0
        %1424 = vmatprep.subr.bf16.mxu0 0
        %1425 = vmatpush1.bf16.msra.mxu0 0
        %1426 = vmatprep.subr.bf16.mxu0 0
        %1427 = vmatpush1.bf16.msra.mxu0 0
        %1428 = vmatprep.subr.bf16.mxu0 0
        %1429 = vmatpush1.bf16.msra.mxu0 0
        %1430 = vmatprep.mubr.bf16.mxu0 0
        %1431 = vmatmul.mubr.bf16.gmra.mrb[0].mxu0 %v1396
        %v1432 = vpop.f32.mrb[0].mxu0
        %v1433 = vadd.f32 %v1394, %v1432
        %v1434 = vpop.f32.mrb[0].mxu0
        %v1435 = vpop.f32.mrb[0].mxu0
        %v1436 = vpop.f32.mrb[0].mxu0
        %1437 = vdwg.mxu0
        %v1438 = vadd.f32 %v695, %v1433
        %v1439 = vld [vmem:[%s9 + $0x1] sm:$0x1]
        %v1440 = vld [vmem:[%s10 + $0x1] sm:$0x1]
        %v1441 = vsel %vm713, %v1438, 0.0
        %1442 = vadd.xlane.f32.xlu0 %v1441
        %v1443 = vpop.xlane.xlu0 %1442
        %v1444 = vmul.f32 %v1443, %v717
        %v1445 = vsub.f32 %v1438, %v1444
        %v1446 = vmul.f32 %v1445, %v1445
        %v1447 = vsel %vm713, %v1446, 0.0
        %1448 = vadd.xlane.f32.xlu0 %v1447
        %v1449 = vpop.xlane.xlu0 %1448
        %v1450 = vmul.f32 %v1449, %v717
        %v1451 = vadd.f32 %v1450, 1e-06
        %v1452 = vrsqrt.pop %v1451
        %v1453 = vmul.f32 %v1445, %v1452
        %v1454 = vlaneseq
        %v1455 = vshrl.u32 %v1454, 7
        %v1456 = vsub.s32 0, %v1455
        %v1457 = vrot.slane %v1439, %v1456
        %v1458 = vmul.f32 %v1453, %v1457
        %v1459 = vlaneseq
        %v1460 = vshrl.u32 %v1459, 7
        %v1461 = vsub.s32 0, %v1460
        %v1462 = vrot.slane %v1440, %v1461
        %v1463 = vadd.f32 %v1458, %v1462
        %v1464 = vpack.c.bf16 %v1463, %v1463
        %v1465 = vld [vmem:[#allocation10] sm:$0xff]
        %v1466 = vld [vmem:[#allocation10 + $0x8] sm:$0xff]
        %v1467 = vld [vmem:[#allocation10 + $0x10] sm:$0xff]
        %v1468 = vld [vmem:[#allocation10 + $0x18] sm:$0xff]
        %v1469 = vpack.c.bf16 %v1466, %v1465
        %v1470 = vpack.c.bf16 %v1468, %v1467
        %v1471 = vld [vmem:[%s8] sm:$0x1]
        %v1472 = vlaneseq
        %v1473 = vshrl.u32 %v1472, 7
        %v1474 = vsub.s32 0, %v1473
        %v1475 = vrot.slane %v1471, %v1474
        %v1477 = vsel %vm713, %v1464, 0
        %1479 = vmatprep.subr.bf16.mxu0 0
        %1480 = vmatpush1.bf16.msra.mxu0 %v1469
        %1481 = vmatprep.subr.bf16.mxu0 0
        %1482 = vmatpush1.bf16.msra.mxu0 %v1470
        %1483 = vmatprep.subr.bf16.mxu0 0
        %1484 = vmatpush1.bf16.msra.mxu0 0
        %1485 = vmatprep.subr.bf16.mxu0 0
        %1486 = vmatpush1.bf16.msra.mxu0 0
        %1487 = vmatprep.subr.bf16.mxu0 0
        %1488 = vmatpush1.bf16.msra.mxu0 0
        %1489 = vmatprep.subr.bf16.mxu0 0
        %1490 = vmatpush1.bf16.msra.mxu0 0
        %1491 = vmatprep.subr.bf16.mxu0 0
        %1492 = vmatpush1.bf16.msra.mxu0 0
        %1493 = vmatprep.subr.bf16.mxu0 0
        %1494 = vmatpush1.bf16.msra.mxu0 0
        %1495 = vmatprep.subr.bf16.mxu0 0
        %1496 = vmatpush1.bf16.msra.mxu0 0
        %1497 = vmatprep.subr.bf16.mxu0 0
        %1498 = vmatpush1.bf16.msra.mxu0 0
        %1499 = vmatprep.subr.bf16.mxu0 0
        %1500 = vmatpush1.bf16.msra.mxu0 0
        %1501 = vmatprep.subr.bf16.mxu0 0
        %1502 = vmatpush1.bf16.msra.mxu0 0
        %1503 = vmatprep.subr.bf16.mxu0 0
        %1504 = vmatpush1.bf16.msra.mxu0 0
        %1505 = vmatprep.subr.bf16.mxu0 0
        %1506 = vmatpush1.bf16.msra.mxu0 0
        %1507 = vmatprep.subr.bf16.mxu0 0
        %1508 = vmatpush1.bf16.msra.mxu0 0
        %1509 = vmatprep.subr.bf16.mxu0 0
        %1510 = vmatpush1.bf16.msra.mxu0 0
        %1511 = vmatprep.mubr.bf16.mxu0 0
        %1512 = vmatmul.mubr.bf16.gmra.mrb[0].mxu0 %v1477
        %v1513 = vpop.f32.mrb[0].mxu0
        %v1514 = vadd.f32 %v1475, %v1513
        %v1515 = vpop.f32.mrb[0].mxu0
        %v1516 = vpop.f32.mrb[0].mxu0
        %v1517 = vpop.f32.mrb[0].mxu0
        %1518 = vdwg.mxu0
        %v1519 = vpack.c.bf16 %v696, %v696
        %s1520 = scalar_lea.vmem [#allocation10], 32
        %v1521 = vld [vmem:[%s1520] sm:$0xff]
        %v1522 = vld [vmem:[%s1520 + $0x8] sm:$0xff]
        %v1523 = vld [vmem:[%s1520 + $0x10] sm:$0xff]
        %v1524 = vld [vmem:[%s1520 + $0x18] sm:$0xff]
        %v1525 = vpack.c.bf16 %v1522, %v1521
        %v1526 = vpack.c.bf16 %v1524, %v1523
        %v1527 = vld [vmem:[%s8 + $0x1] sm:$0x1]
        %v1528 = vlaneseq
        %v1529 = vshrl.u32 %v1528, 7
        %v1530 = vsub.s32 0, %v1529
        %v1531 = vrot.slane %v1527, %v1530
        %v1533 = vsel %vm713, %v1519, 0
        %1535 = vmatprep.subr.bf16.mxu0 0
        %1536 = vmatpush1.bf16.msra.mxu0 %v1525
        %1537 = vmatprep.subr.bf16.mxu0 0
        %1538 = vmatpush1.bf16.msra.mxu0 %v1526
        %1539 = vmatprep.subr.bf16.mxu0 0
        %1540 = vmatpush1.bf16.msra.mxu0 0
        %1541 = vmatprep.subr.bf16.mxu0 0
        %1542 = vmatpush1.bf16.msra.mxu0 0
        %1543 = vmatprep.subr.bf16.mxu0 0
        %1544 = vmatpush1.bf16.msra.mxu0 0
        %1545 = vmatprep.subr.bf16.mxu0 0
        %1546 = vmatpush1.bf16.msra.mxu0 0
        %1547 = vmatprep.subr.bf16.mxu0 0
        %1548 = vmatpush1.bf16.msra.mxu0 0
        %1549 = vmatprep.subr.bf16.mxu0 0
        %1550 = vmatpush1.bf16.msra.mxu0 0
        %1551 = vmatprep.subr.bf16.mxu0 0
        %1552 = vmatpush1.bf16.msra.mxu0 0
        %1553 = vmatprep.subr.bf16.mxu0 0
        %1554 = vmatpush1.bf16.msra.mxu0 0
        %1555 = vmatprep.subr.bf16.mxu0 0
        %1556 = vmatpush1.bf16.msra.mxu0 0
        %1557 = vmatprep.subr.bf16.mxu0 0
        %1558 = vmatpush1.bf16.msra.mxu0 0
        %1559 = vmatprep.subr.bf16.mxu0 0
        %1560 = vmatpush1.bf16.msra.mxu0 0
        %1561 = vmatprep.subr.bf16.mxu0 0
        %1562 = vmatpush1.bf16.msra.mxu0 0
        %1563 = vmatprep.subr.bf16.mxu0 0
        %1564 = vmatpush1.bf16.msra.mxu0 0
        %1565 = vmatprep.subr.bf16.mxu0 0
        %1566 = vmatpush1.bf16.msra.mxu0 0
        %1567 = vmatprep.mubr.bf16.mxu0 0
        %1568 = vmatmul.mubr.bf16.gmra.mrb[0].mxu0 %v1533
        %v1569 = vpop.f32.mrb[0].mxu0
        %v1570 = vadd.f32 %v1531, %v1569
        %v1571 = vpop.f32.mrb[0].mxu0
        %v1572 = vpop.f32.mrb[0].mxu0
        %v1573 = vpop.f32.mrb[0].mxu0
        %1574 = vdwg.mxu0
        %s1575 = scalar_lea.vmem [#allocation10], 64
        %v1576 = vld [vmem:[%s1575] sm:$0xff]
        %v1577 = vld [vmem:[%s1575 + $0x8] sm:$0xff]
        %v1578 = vld [vmem:[%s1575 + $0x10] sm:$0xff]
        %v1579 = vld [vmem:[%s1575 + $0x18] sm:$0xff]
        %v1580 = vpack.c.bf16 %v1577, %v1576
        %v1581 = vpack.c.bf16 %v1579, %v1578
        %v1582 = vld [vmem:[%s8 + $0x2] sm:$0x1]
        %v1583 = vlaneseq
        %v1584 = vshrl.u32 %v1583, 7
        %v1585 = vsub.s32 0, %v1584
        %v1586 = vrot.slane %v1582, %v1585
        %1587 = vmatprep.subr.bf16.mxu0 0
        %1588 = vmatpush1.bf16.msra.mxu0 %v1580
        %1589 = vmatprep.subr.bf16.mxu0 0
        %1590 = vmatpush1.bf16.msra.mxu0 %v1581
        %1591 = vmatprep.subr.bf16.mxu0 0
        %1592 = vmatpush1.bf16.msra.mxu0 0
        %1593 = vmatprep.subr.bf16.mxu0 0
        %1594 = vmatpush1.bf16.msra.mxu0 0
        %1595 = vmatprep.subr.bf16.mxu0 0
        %1596 = vmatpush1.bf16.msra.mxu0 0
        %1597 = vmatprep.subr.bf16.mxu0 0
        %1598 = vmatpush1.bf16.msra.mxu0 0
        %1599 = vmatprep.subr.bf16.mxu0 0
        %1600 = vmatpush1.bf16.msra.mxu0 0
        %1601 = vmatprep.subr.bf16.mxu0 0
        %1602 = vmatpush1.bf16.msra.mxu0 0
        %1603 = vmatprep.subr.bf16.mxu0 0
        %1604 = vmatpush1.bf16.msra.mxu0 0
        %1605 = vmatprep.subr.bf16.mxu0 0
        %1606 = vmatpush1.bf16.msra.mxu0 0
        %1607 = vmatprep.subr.bf16.mxu0 0
        %1608 = vmatpush1.bf16.msra.mxu0 0
        %1609 = vmatprep.subr.bf16.mxu0 0
        %1610 = vmatpush1.bf16.msra.mxu0 0
        %1611 = vmatprep.subr.bf16.mxu0 0
        %1612 = vmatpush1.bf16.msra.mxu0 0
        %1613 = vmatprep.subr.bf16.mxu0 0
        %1614 = vmatpush1.bf16.msra.mxu0 0
        %1615 = vmatprep.subr.bf16.mxu0 0
        %1616 = vmatpush1.bf16.msra.mxu0 0
        %1617 = vmatprep.subr.bf16.mxu0 0
        %1618 = vmatpush1.bf16.msra.mxu0 0
        %1619 = vmatprep.mubr.bf16.mxu0 0
        %1620 = vmatmul.mubr.bf16.gmra.mrb[0].mxu0 %v1533
        %v1621 = vpop.f32.mrb[0].mxu0
        %v1622 = vadd.f32 %v1586, %v1621
        %v1623 = vpop.f32.mrb[0].mxu0
        %v1624 = vpop.f32.mrb[0].mxu0
        %v1625 = vpop.f32.mrb[0].mxu0
        %1626 = vdwg.mxu0
        %1628 = vrot.lane.b32.xlu0 %v1514, 120
        %v1629 = vpop.permute.xlu0 %1628
        %1631 = vrot.lane.b32.xlu0 %v1514, 112
        %v1632 = vpop.permute.xlu0 %1631
        %1634 = vrot.lane.b32.xlu0 %v1514, 104
        %v1635 = vpop.permute.xlu0 %1634
        %1638 = vrot.lane.b32.xlu0 %v1570, 120
        %v1639 = vpop.permute.xlu0 %1638
        %1641 = vrot.lane.b32.xlu0 %v1570, 112
        %v1642 = vpop.permute.xlu0 %1641
        %1644 = vrot.lane.b32.xlu0 %v1570, 104
        %v1645 = vpop.permute.xlu0 %1644
        %1648 = vrot.lane.b32.xlu0 %v1622, 120
        %v1649 = vpop.permute.xlu0 %1648
        %1651 = vrot.lane.b32.xlu0 %v1622, 112
        %v1652 = vpop.permute.xlu0 %1651
        %1654 = vrot.lane.b32.xlu0 %v1622, 104
        %v1655 = vpop.permute.xlu0 %1654
        %v1657 = vpack.c.bf16 %v1514, %v1514
        %v1658 = vpack.c.bf16 %v1629, %v1629
        %v1659 = vpack.c.bf16 %v1632, %v1632
        %v1660 = vpack.c.bf16 %v1635, %v1635
        %v1661 = vpack.c.bf16 %v1570, %v1570
        %v1662 = vpack.c.bf16 %v1639, %v1639
        %v1663 = vpack.c.bf16 %v1642, %v1642
        %v1664 = vpack.c.bf16 %v1645, %v1645
        %v1665 = vpack.c.bf16 %v697, %v697
        %v1666 = vpack.c.bf16 %v698, %v698
        %v1667 = vpack.c.bf16 %v699, %v699
        %v1668 = vpack.c.bf16 %v700, %v700
        %v1669 = vpack.c.bf16 %v701, %v701
        %v1670 = vpack.c.bf16 %v702, %v702
        %v1671 = vpack.c.bf16 %v703, %v703
        %v1672 = vpack.c.bf16 %v704, %v704
        %v1673 = vcombine.low %v1514, %v1632
        %v1674 = vcombine.high %v1514, %v1632
        %v1676 = vunpack.c.l.s4 1983009808
        %v1677 = vunpack.c.0.s8 %v1676
        %v1678 = vlaneseq
        %v1679 = vshrl.u32 %v1678, 7
        %v1680 = vsub.s32 %v1677, %v1679
        %v1681 = vrot.slane %v1673, %v1680
        %v1683 = vunpack.c.l.s4 1983009808
        %v1684 = vunpack.c.0.s8 %v1683
        %v1685 = vlaneseq
        %v1686 = vshrl.u32 %v1685, 7
        %v1687 = vsub.s32 %v1684, %v1686
        %v1688 = vrot.slane %v1674, %v1687
        %v1689 = vcombine.low %v1629, %v1635
        %v1690 = vcombine.high %v1629, %v1635
        %v1692 = vunpack.c.l.s4 1983009808
        %v1693 = vunpack.c.0.s8 %v1692
        %v1694 = vlaneseq
        %v1695 = vshrl.u32 %v1694, 7
        %v1696 = vsub.s32 %v1693, %v1695
        %v1697 = vrot.slane %v1689, %v1696
        %v1699 = vunpack.c.l.s4 1983009808
        %v1700 = vunpack.c.0.s8 %v1699
        %v1701 = vlaneseq
        %v1702 = vshrl.u32 %v1701, 7
        %v1703 = vsub.s32 %v1700, %v1702
        %v1704 = vrot.slane %v1690, %v1703
        %v1705 = vcombine.low %v1681, %v1697
        %v1706 = vcombine.high %v1681, %v1697
        %v1708 = vunpack.c.l.s4 1934713408
        %v1709 = vunpack.c.0.s8 %v1708
        %v1710 = vlaneseq
        %v1711 = vshrl.u32 %v1710, 7
        %v1712 = vsub.s32 %v1709, %v1711
        %v1713 = vrot.slane %v1705, %v1712
        %v1715 = vunpack.c.l.s4 1934713408
        %v1716 = vunpack.c.0.s8 %v1715
        %v1717 = vlaneseq
        %v1718 = vshrl.u32 %v1717, 7
        %v1719 = vsub.s32 %v1716, %v1718
        %v1720 = vrot.slane %v1706, %v1719
        %v1721 = vcombine.low %v1688, %v1704
        %v1722 = vcombine.high %v1688, %v1704
        %v1724 = vunpack.c.l.s4 1934713408
        %v1725 = vunpack.c.0.s8 %v1724
        %v1726 = vlaneseq
        %v1727 = vshrl.u32 %v1726, 7
        %v1728 = vsub.s32 %v1725, %v1727
        %v1729 = vrot.slane %v1721, %v1728
        %v1731 = vunpack.c.l.s4 1934713408
        %v1732 = vunpack.c.0.s8 %v1731
        %v1733 = vlaneseq
        %v1734 = vshrl.u32 %v1733, 7
        %v1735 = vsub.s32 %v1732, %v1734
        %v1736 = vrot.slane %v1722, %v1735
        %v1737 = vcombine.high %v1713, 0.0
        %v1738 = vcombine.high %v1720, 0.0
        %v1739 = vcombine.high %v1729, 0.0
        %v1740 = vcombine.high %v1736, 0.0
        %v1741 = vpack.c.bf16 %v1713, %v1713
        %v1742 = vpack.c.bf16 %v1737, %v1737
        %v1743 = vpack.c.bf16 %v1720, %v1720
        %v1744 = vpack.c.bf16 %v1738, %v1738
        %v1745 = vpack.c.bf16 %v1729, %v1729
        %v1746 = vpack.c.bf16 %v1739, %v1739
        %v1747 = vpack.c.bf16 %v1736, %v1736
        %v1748 = vpack.c.bf16 %v1740, %v1740
        %v1750 = vsel %vm935, %v1741, 0
        %v1753 = vsel %vm935, %v1665, 0
        %1755 = vmatprep.subr.bf16.mxu0 0
        %1756 = vmatpush1.bf16.xpose.msra.mxu0 %v1753
        %1757 = vmatprep.subr.bf16.mxu0 0
        %1758 = vmatpush1.bf16.xpose.msra.mxu0 0
        %1759 = vmatprep.subr.bf16.mxu0 0
        %1760 = vmatpush1.bf16.xpose.msra.mxu0 0
        %1761 = vmatprep.subr.bf16.mxu0 0
        %1762 = vmatpush1.bf16.xpose.msra.mxu0 0
        %1763 = vmatprep.subr.bf16.mxu0 0
        %1764 = vmatpush1.bf16.xpose.msra.mxu0 0
        %1765 = vmatprep.subr.bf16.mxu0 0
        %1766 = vmatpush1.bf16.xpose.msra.mxu0 0
        %1767 = vmatprep.subr.bf16.mxu0 0
        %1768 = vmatpush1.bf16.xpose.msra.mxu0 0
        %1769 = vmatprep.subr.bf16.mxu0 0
        %1770 = vmatpush1.bf16.xpose.msra.mxu0 0
        %1771 = vmatprep.subr.bf16.mxu0 0
        %1772 = vmatpush1.bf16.xpose.msra.mxu0 0
        %1773 = vmatprep.subr.bf16.mxu0 0
        %1774 = vmatpush1.bf16.xpose.msra.mxu0 0
        %1775 = vmatprep.subr.bf16.mxu0 0
        %1776 = vmatpush1.bf16.xpose.msra.mxu0 0
        %1777 = vmatprep.subr.bf16.mxu0 0
        %1778 = vmatpush1.bf16.xpose.msra.mxu0 0
        %1779 = vmatprep.subr.bf16.mxu0 0
        %1780 = vmatpush1.bf16.xpose.msra.mxu0 0
        %1781 = vmatprep.subr.bf16.mxu0 0
        %1782 = vmatpush1.bf16.xpose.msra.mxu0 0
        %1783 = vmatprep.subr.bf16.mxu0 0
        %1784 = vmatpush1.bf16.xpose.msra.mxu0 0
        %1785 = vmatprep.subr.bf16.mxu0 0
        %1786 = vmatpush1.bf16.xpose.msra.mxu0 0
        %1787 = vmatprep.mubr.bf16.mxu0 0
        %1788 = vmatmul.mubr.bf16.gmra.mrb[0].mxu0 %v1750
        %v1789 = vpop.f32.mrb[0].mxu0
        %v1790 = vadd.f32 0.0, %v1789
        %v1791 = vpop.f32.mrb[0].mxu0
        %v1792 = vpop.f32.mrb[0].mxu0
        %v1793 = vpop.f32.mrb[0].mxu0
        %1794 = vdwg.mxu0
        %v1796 = vsel %vm935, %v1742, 0
        %v1799 = vsel %vm935, %v1666, 0
        %1801 = vmatprep.subr.bf16.mxu0 0
        %1802 = vmatpush1.bf16.xpose.msra.mxu0 %v1799
        %1803 = vmatprep.subr.bf16.mxu0 0
        %1804 = vmatpush1.bf16.xpose.msra.mxu0 0
        %1805 = vmatprep.subr.bf16.mxu0 0
        %1806 = vmatpush1.bf16.xpose.msra.mxu0 0
        %1807 = vmatprep.subr.bf16.mxu0 0
        %1808 = vmatpush1.bf16.xpose.msra.mxu0 0
        %1809 = vmatprep.subr.bf16.mxu0 0
        %1810 = vmatpush1.bf16.xpose.msra.mxu0 0
        %1811 = vmatprep.subr.bf16.mxu0 0
        %1812 = vmatpush1.bf16.xpose.msra.mxu0 0
        %1813 = vmatprep.subr.bf16.mxu0 0
        %1814 = vmatpush1.bf16.xpose.msra.mxu0 0
        %1815 = vmatprep.subr.bf16.mxu0 0
        %1816 = vmatpush1.bf16.xpose.msra.mxu0 0
        %1817 = vmatprep.subr.bf16.mxu0 0
        %1818 = vmatpush1.bf16.xpose.msra.mxu0 0
        %1819 = vmatprep.subr.bf16.mxu0 0
        %1820 = vmatpush1.bf16.xpose.msra.mxu0 0
        %1821 = vmatprep.subr.bf16.mxu0 0
        %1822 = vmatpush1.bf16.xpose.msra.mxu0 0
        %1823 = vmatprep.subr.bf16.mxu0 0
        %1824 = vmatpush1.bf16.xpose.msra.mxu0 0
        %1825 = vmatprep.subr.bf16.mxu0 0
        %1826 = vmatpush1.bf16.xpose.msra.mxu0 0
        %1827 = vmatprep.subr.bf16.mxu0 0
        %1828 = vmatpush1.bf16.xpose.msra.mxu0 0
        %1829 = vmatprep.subr.bf16.mxu0 0
        %1830 = vmatpush1.bf16.xpose.msra.mxu0 0
        %1831 = vmatprep.subr.bf16.mxu0 0
        %1832 = vmatpush1.bf16.xpose.msra.mxu0 0
        %1833 = vmatprep.mubr.bf16.mxu0 0
        %1834 = vmatmul.mubr.bf16.gmra.mrb[0].mxu0 %v1796
        %v1835 = vpop.f32.mrb[0].mxu0
        %v1836 = vadd.f32 0.0, %v1835
        %v1837 = vpop.f32.mrb[0].mxu0
        %v1838 = vpop.f32.mrb[0].mxu0
        %v1839 = vpop.f32.mrb[0].mxu0
        %1840 = vdwg.mxu0
        %v1842 = vsel %vm935, %v1743, 0
        %v1845 = vsel %vm935, %v1667, 0
        %1847 = vmatprep.subr.bf16.mxu0 0
        %1848 = vmatpush1.bf16.xpose.msra.mxu0 %v1845
        %1849 = vmatprep.subr.bf16.mxu0 0
        %1850 = vmatpush1.bf16.xpose.msra.mxu0 0
        %1851 = vmatprep.subr.bf16.mxu0 0
        %1852 = vmatpush1.bf16.xpose.msra.mxu0 0
        %1853 = vmatprep.subr.bf16.mxu0 0
        %1854 = vmatpush1.bf16.xpose.msra.mxu0 0
        %1855 = vmatprep.subr.bf16.mxu0 0
        %1856 = vmatpush1.bf16.xpose.msra.mxu0 0
        %1857 = vmatprep.subr.bf16.mxu0 0
        %1858 = vmatpush1.bf16.xpose.msra.mxu0 0
        %1859 = vmatprep.subr.bf16.mxu0 0
        %1860 = vmatpush1.bf16.xpose.msra.mxu0 0
        %1861 = vmatprep.subr.bf16.mxu0 0
        %1862 = vmatpush1.bf16.xpose.msra.mxu0 0
        %1863 = vmatprep.subr.bf16.mxu0 0
        %1864 = vmatpush1.bf16.xpose.msra.mxu0 0
        %1865 = vmatprep.subr.bf16.mxu0 0
        %1866 = vmatpush1.bf16.xpose.msra.mxu0 0
        %1867 = vmatprep.subr.bf16.mxu0 0
        %1868 = vmatpush1.bf16.xpose.msra.mxu0 0
        %1869 = vmatprep.subr.bf16.mxu0 0
        %1870 = vmatpush1.bf16.xpose.msra.mxu0 0
        %1871 = vmatprep.subr.bf16.mxu0 0
        %1872 = vmatpush1.bf16.xpose.msra.mxu0 0
        %1873 = vmatprep.subr.bf16.mxu0 0
        %1874 = vmatpush1.bf16.xpose.msra.mxu0 0
        %1875 = vmatprep.subr.bf16.mxu0 0
        %1876 = vmatpush1.bf16.xpose.msra.mxu0 0
        %1877 = vmatprep.subr.bf16.mxu0 0
        %1878 = vmatpush1.bf16.xpose.msra.mxu0 0
        %1879 = vmatprep.mubr.bf16.mxu0 0
        %1880 = vmatmul.mubr.bf16.gmra.mrb[0].mxu0 %v1842
        %v1881 = vpop.f32.mrb[0].mxu0
        %v1882 = vadd.f32 0.0, %v1881
        %v1883 = vpop.f32.mrb[0].mxu0
        %v1884 = vpop.f32.mrb[0].mxu0
        %v1885 = vpop.f32.mrb[0].mxu0
        %1886 = vdwg.mxu0
        %v1888 = vsel %vm935, %v1744, 0
        %v1891 = vsel %vm935, %v1668, 0
        %1893 = vmatprep.subr.bf16.mxu0 0
        %1894 = vmatpush1.bf16.xpose.msra.mxu0 %v1891
        %1895 = vmatprep.subr.bf16.mxu0 0
        %1896 = vmatpush1.bf16.xpose.msra.mxu0 0
        %1897 = vmatprep.subr.bf16.mxu0 0
        %1898 = vmatpush1.bf16.xpose.msra.mxu0 0
        %1899 = vmatprep.subr.bf16.mxu0 0
        %1900 = vmatpush1.bf16.xpose.msra.mxu0 0
        %1901 = vmatprep.subr.bf16.mxu0 0
        %1902 = vmatpush1.bf16.xpose.msra.mxu0 0
        %1903 = vmatprep.subr.bf16.mxu0 0
        %1904 = vmatpush1.bf16.xpose.msra.mxu0 0
        %1905 = vmatprep.subr.bf16.mxu0 0
        %1906 = vmatpush1.bf16.xpose.msra.mxu0 0
        %1907 = vmatprep.subr.bf16.mxu0 0
        %1908 = vmatpush1.bf16.xpose.msra.mxu0 0
        %1909 = vmatprep.subr.bf16.mxu0 0
        %1910 = vmatpush1.bf16.xpose.msra.mxu0 0
        %1911 = vmatprep.subr.bf16.mxu0 0
        %1912 = vmatpush1.bf16.xpose.msra.mxu0 0
        %1913 = vmatprep.subr.bf16.mxu0 0
        %1914 = vmatpush1.bf16.xpose.msra.mxu0 0
        %1915 = vmatprep.subr.bf16.mxu0 0
        %1916 = vmatpush1.bf16.xpose.msra.mxu0 0
        %1917 = vmatprep.subr.bf16.mxu0 0
        %1918 = vmatpush1.bf16.xpose.msra.mxu0 0
        %1919 = vmatprep.subr.bf16.mxu0 0
        %1920 = vmatpush1.bf16.xpose.msra.mxu0 0
        %1921 = vmatprep.subr.bf16.mxu0 0
        %1922 = vmatpush1.bf16.xpose.msra.mxu0 0
        %1923 = vmatprep.subr.bf16.mxu0 0
        %1924 = vmatpush1.bf16.xpose.msra.mxu0 0
        %1925 = vmatprep.mubr.bf16.mxu0 0
        %1926 = vmatmul.mubr.bf16.gmra.mrb[0].mxu0 %v1888
        %v1927 = vpop.f32.mrb[0].mxu0
        %v1928 = vadd.f32 0.0, %v1927
        %v1929 = vpop.f32.mrb[0].mxu0
        %v1930 = vpop.f32.mrb[0].mxu0
        %v1931 = vpop.f32.mrb[0].mxu0
        %1932 = vdwg.mxu0
        %v1934 = vsel %vm935, %v1745, 0
        %v1937 = vsel %vm935, %v1669, 0
        %1939 = vmatprep.subr.bf16.mxu0 0
        %1940 = vmatpush1.bf16.xpose.msra.mxu0 %v1937
        %1941 = vmatprep.subr.bf16.mxu0 0
        %1942 = vmatpush1.bf16.xpose.msra.mxu0 0
        %1943 = vmatprep.subr.bf16.mxu0 0
        %1944 = vmatpush1.bf16.xpose.msra.mxu0 0
        %1945 = vmatprep.subr.bf16.mxu0 0
        %1946 = vmatpush1.bf16.xpose.msra.mxu0 0
        %1947 = vmatprep.subr.bf16.mxu0 0
        %1948 = vmatpush1.bf16.xpose.msra.mxu0 0
        %1949 = vmatprep.subr.bf16.mxu0 0
        %1950 = vmatpush1.bf16.xpose.msra.mxu0 0
        %1951 = vmatprep.subr.bf16.mxu0 0
        %1952 = vmatpush1.bf16.xpose.msra.mxu0 0
        %1953 = vmatprep.subr.bf16.mxu0 0
        %1954 = vmatpush1.bf16.xpose.msra.mxu0 0
        %1955 = vmatprep.subr.bf16.mxu0 0
        %1956 = vmatpush1.bf16.xpose.msra.mxu0 0
        %1957 = vmatprep.subr.bf16.mxu0 0
        %1958 = vmatpush1.bf16.xpose.msra.mxu0 0
        %1959 = vmatprep.subr.bf16.mxu0 0
        %1960 = vmatpush1.bf16.xpose.msra.mxu0 0
        %1961 = vmatprep.subr.bf16.mxu0 0
        %1962 = vmatpush1.bf16.xpose.msra.mxu0 0
        %1963 = vmatprep.subr.bf16.mxu0 0
        %1964 = vmatpush1.bf16.xpose.msra.mxu0 0
        %1965 = vmatprep.subr.bf16.mxu0 0
        %1966 = vmatpush1.bf16.xpose.msra.mxu0 0
        %1967 = vmatprep.subr.bf16.mxu0 0
        %1968 = vmatpush1.bf16.xpose.msra.mxu0 0
        %1969 = vmatprep.subr.bf16.mxu0 0
        %1970 = vmatpush1.bf16.xpose.msra.mxu0 0
        %1971 = vmatprep.mubr.bf16.mxu0 0
        %1972 = vmatmul.mubr.bf16.gmra.mrb[0].mxu0 %v1934
        %v1973 = vpop.f32.mrb[0].mxu0
        %v1974 = vadd.f32 0.0, %v1973
        %v1975 = vpop.f32.mrb[0].mxu0
        %v1976 = vpop.f32.mrb[0].mxu0
        %v1977 = vpop.f32.mrb[0].mxu0
        %1978 = vdwg.mxu0
        %v1980 = vsel %vm935, %v1746, 0
        %v1983 = vsel %vm935, %v1670, 0
        %1985 = vmatprep.subr.bf16.mxu0 0
        %1986 = vmatpush1.bf16.xpose.msra.mxu0 %v1983
        %1987 = vmatprep.subr.bf16.mxu0 0
        %1988 = vmatpush1.bf16.xpose.msra.mxu0 0
        %1989 = vmatprep.subr.bf16.mxu0 0
        %1990 = vmatpush1.bf16.xpose.msra.mxu0 0
        %1991 = vmatprep.subr.bf16.mxu0 0
        %1992 = vmatpush1.bf16.xpose.msra.mxu0 0
        %1993 = vmatprep.subr.bf16.mxu0 0
        %1994 = vmatpush1.bf16.xpose.msra.mxu0 0
        %1995 = vmatprep.subr.bf16.mxu0 0
        %1996 = vmatpush1.bf16.xpose.msra.mxu0 0
        %1997 = vmatprep.subr.bf16.mxu0 0
        %1998 = vmatpush1.bf16.xpose.msra.mxu0 0
        %1999 = vmatprep.subr.bf16.mxu0 0
        %2000 = vmatpush1.bf16.xpose.msra.mxu0 0
        %2001 = vmatprep.subr.bf16.mxu0 0
        %2002 = vmatpush1.bf16.xpose.msra.mxu0 0
        %2003 = vmatprep.subr.bf16.mxu0 0
        %2004 = vmatpush1.bf16.xpose.msra.mxu0 0
        %2005 = vmatprep.subr.bf16.mxu0 0
        %2006 = vmatpush1.bf16.xpose.msra.mxu0 0
        %2007 = vmatprep.subr.bf16.mxu0 0
        %2008 = vmatpush1.bf16.xpose.msra.mxu0 0
        %2009 = vmatprep.subr.bf16.mxu0 0
        %2010 = vmatpush1.bf16.xpose.msra.mxu0 0
        %2011 = vmatprep.subr.bf16.mxu0 0
        %2012 = vmatpush1.bf16.xpose.msra.mxu0 0
        %2013 = vmatprep.subr.bf16.mxu0 0
        %2014 = vmatpush1.bf16.xpose.msra.mxu0 0
        %2015 = vmatprep.subr.bf16.mxu0 0
        %2016 = vmatpush1.bf16.xpose.msra.mxu0 0
        %2017 = vmatprep.mubr.bf16.mxu0 0
        %2018 = vmatmul.mubr.bf16.gmra.mrb[0].mxu0 %v1980
        %v2019 = vpop.f32.mrb[0].mxu0
        %v2020 = vadd.f32 0.0, %v2019
        %v2021 = vpop.f32.mrb[0].mxu0
        %v2022 = vpop.f32.mrb[0].mxu0
        %v2023 = vpop.f32.mrb[0].mxu0
        %2024 = vdwg.mxu0
        %v2026 = vsel %vm935, %v1747, 0
        %v2029 = vsel %vm935, %v1671, 0
        %2031 = vmatprep.subr.bf16.mxu0 0
        %2032 = vmatpush1.bf16.xpose.msra.mxu0 %v2029
        %2033 = vmatprep.subr.bf16.mxu0 0
        %2034 = vmatpush1.bf16.xpose.msra.mxu0 0
        %2035 = vmatprep.subr.bf16.mxu0 0
        %2036 = vmatpush1.bf16.xpose.msra.mxu0 0
        %2037 = vmatprep.subr.bf16.mxu0 0
        %2038 = vmatpush1.bf16.xpose.msra.mxu0 0
        %2039 = vmatprep.subr.bf16.mxu0 0
        %2040 = vmatpush1.bf16.xpose.msra.mxu0 0
        %2041 = vmatprep.subr.bf16.mxu0 0
        %2042 = vmatpush1.bf16.xpose.msra.mxu0 0
        %2043 = vmatprep.subr.bf16.mxu0 0
        %2044 = vmatpush1.bf16.xpose.msra.mxu0 0
        %2045 = vmatprep.subr.bf16.mxu0 0
        %2046 = vmatpush1.bf16.xpose.msra.mxu0 0
        %2047 = vmatprep.subr.bf16.mxu0 0
        %2048 = vmatpush1.bf16.xpose.msra.mxu0 0
        %2049 = vmatprep.subr.bf16.mxu0 0
        %2050 = vmatpush1.bf16.xpose.msra.mxu0 0
        %2051 = vmatprep.subr.bf16.mxu0 0
        %2052 = vmatpush1.bf16.xpose.msra.mxu0 0
        %2053 = vmatprep.subr.bf16.mxu0 0
        %2054 = vmatpush1.bf16.xpose.msra.mxu0 0
        %2055 = vmatprep.subr.bf16.mxu0 0
        %2056 = vmatpush1.bf16.xpose.msra.mxu0 0
        %2057 = vmatprep.subr.bf16.mxu0 0
        %2058 = vmatpush1.bf16.xpose.msra.mxu0 0
        %2059 = vmatprep.subr.bf16.mxu0 0
        %2060 = vmatpush1.bf16.xpose.msra.mxu0 0
        %2061 = vmatprep.subr.bf16.mxu0 0
        %2062 = vmatpush1.bf16.xpose.msra.mxu0 0
        %2063 = vmatprep.mubr.bf16.mxu0 0
        %2064 = vmatmul.mubr.bf16.gmra.mrb[0].mxu0 %v2026
        %v2065 = vpop.f32.mrb[0].mxu0
        %v2066 = vadd.f32 0.0, %v2065
        %v2067 = vpop.f32.mrb[0].mxu0
        %v2068 = vpop.f32.mrb[0].mxu0
        %v2069 = vpop.f32.mrb[0].mxu0
        %2070 = vdwg.mxu0
        %v2072 = vsel %vm935, %v1748, 0
        %v2075 = vsel %vm935, %v1672, 0
        %2077 = vmatprep.subr.bf16.mxu0 0
        %2078 = vmatpush1.bf16.xpose.msra.mxu0 %v2075
        %2079 = vmatprep.subr.bf16.mxu0 0
        %2080 = vmatpush1.bf16.xpose.msra.mxu0 0
        %2081 = vmatprep.subr.bf16.mxu0 0
        %2082 = vmatpush1.bf16.xpose.msra.mxu0 0
        %2083 = vmatprep.subr.bf16.mxu0 0
        %2084 = vmatpush1.bf16.xpose.msra.mxu0 0
        %2085 = vmatprep.subr.bf16.mxu0 0
        %2086 = vmatpush1.bf16.xpose.msra.mxu0 0
        %2087 = vmatprep.subr.bf16.mxu0 0
        %2088 = vmatpush1.bf16.xpose.msra.mxu0 0
        %2089 = vmatprep.subr.bf16.mxu0 0
        %2090 = vmatpush1.bf16.xpose.msra.mxu0 0
        %2091 = vmatprep.subr.bf16.mxu0 0
        %2092 = vmatpush1.bf16.xpose.msra.mxu0 0
        %2093 = vmatprep.subr.bf16.mxu0 0
        %2094 = vmatpush1.bf16.xpose.msra.mxu0 0
        %2095 = vmatprep.subr.bf16.mxu0 0
        %2096 = vmatpush1.bf16.xpose.msra.mxu0 0
        %2097 = vmatprep.subr.bf16.mxu0 0
        %2098 = vmatpush1.bf16.xpose.msra.mxu0 0
        %2099 = vmatprep.subr.bf16.mxu0 0
        %2100 = vmatpush1.bf16.xpose.msra.mxu0 0
        %2101 = vmatprep.subr.bf16.mxu0 0
        %2102 = vmatpush1.bf16.xpose.msra.mxu0 0
        %2103 = vmatprep.subr.bf16.mxu0 0
        %2104 = vmatpush1.bf16.xpose.msra.mxu0 0
        %2105 = vmatprep.subr.bf16.mxu0 0
        %2106 = vmatpush1.bf16.xpose.msra.mxu0 0
        %2107 = vmatprep.subr.bf16.mxu0 0
        %2108 = vmatpush1.bf16.xpose.msra.mxu0 0
        %2109 = vmatprep.mubr.bf16.mxu0 0
        %2110 = vmatmul.mubr.bf16.gmra.mrb[0].mxu0 %v2072
        %v2111 = vpop.f32.mrb[0].mxu0
        %v2112 = vadd.f32 0.0, %v2111
        %v2113 = vpop.f32.mrb[0].mxu0
        %v2114 = vpop.f32.mrb[0].mxu0
        %v2115 = vpop.f32.mrb[0].mxu0
        %2116 = vdwg.mxu0
        %v2117 = vcombine.low %v1790, %v1882
        %v2119 = vunpack.c.l.s4 1983009808
        %v2120 = vunpack.c.0.s8 %v2119
        %v2121 = vlaneseq
        %v2122 = vshrl.u32 %v2121, 7
        %v2123 = vsub.s32 %v2120, %v2122
        %v2124 = vrot.slane %v2117, %v2123
        %v2125 = vcombine.low %v1836, %v1928
        %v2127 = vunpack.c.l.s4 1983009808
        %v2128 = vunpack.c.0.s8 %v2127
        %v2129 = vlaneseq
        %v2130 = vshrl.u32 %v2129, 7
        %v2131 = vsub.s32 %v2128, %v2130
        %v2132 = vrot.slane %v2125, %v2131
        %v2133 = vcombine.low %v1974, %v2066
        %v2135 = vunpack.c.l.s4 1983009808
        %v2136 = vunpack.c.0.s8 %v2135
        %v2137 = vlaneseq
        %v2138 = vshrl.u32 %v2137, 7
        %v2139 = vsub.s32 %v2136, %v2138
        %v2140 = vrot.slane %v2133, %v2139
        %v2141 = vcombine.low %v2020, %v2112
        %v2143 = vunpack.c.l.s4 1983009808
        %v2144 = vunpack.c.0.s8 %v2143
        %v2145 = vlaneseq
        %v2146 = vshrl.u32 %v2145, 7
        %v2147 = vsub.s32 %v2144, %v2146
        %v2148 = vrot.slane %v2141, %v2147
        %v2149 = vcombine.low %v2124, %v2132
        %v2150 = vcombine.high %v2124, %v2132
        %v2152 = vunpack.c.l.s4 1934713408
        %v2153 = vunpack.c.0.s8 %v2152
        %v2154 = vlaneseq
        %v2155 = vshrl.u32 %v2154, 7
        %v2156 = vsub.s32 %v2153, %v2155
        %v2157 = vrot.slane %v2149, %v2156
        %v2159 = vunpack.c.l.s4 1934713408
        %v2160 = vunpack.c.0.s8 %v2159
        %v2161 = vlaneseq
        %v2162 = vshrl.u32 %v2161, 7
        %v2163 = vsub.s32 %v2160, %v2162
        %v2164 = vrot.slane %v2150, %v2163
        %v2165 = vcombine.low %v2140, %v2148
        %v2166 = vcombine.high %v2140, %v2148
        %v2168 = vunpack.c.l.s4 1934713408
        %v2169 = vunpack.c.0.s8 %v2168
        %v2170 = vlaneseq
        %v2171 = vshrl.u32 %v2170, 7
        %v2172 = vsub.s32 %v2169, %v2171
        %v2173 = vrot.slane %v2165, %v2172
        %v2175 = vunpack.c.l.s4 1934713408
        %v2176 = vunpack.c.0.s8 %v2175
        %v2177 = vlaneseq
        %v2178 = vshrl.u32 %v2177, 7
        %v2179 = vsub.s32 %v2176, %v2178
        %v2180 = vrot.slane %v2166, %v2179
        %v2181 = vcombine.low %v2157, %v2173
        %v2182 = vcombine.high %v2157, %v2173
        %v2183 = vcombine.low %v2164, %v2180
        %v2184 = vcombine.high %v2164, %v2180
        %v2186 = vsel %vm935, %v1657, 0
        %v2189 = vsel %vm935, %v1661, 0
        %2191 = vmatprep.subr.bf16.mxu0 0
        %2192 = vmatpush1.bf16.xpose.msra.mxu0 %v2189
        %2193 = vmatprep.subr.bf16.mxu0 0
        %2194 = vmatpush1.bf16.xpose.msra.mxu0 0
        %2195 = vmatprep.subr.bf16.mxu0 0
        %2196 = vmatpush1.bf16.xpose.msra.mxu0 0
        %2197 = vmatprep.subr.bf16.mxu0 0
        %2198 = vmatpush1.bf16.xpose.msra.mxu0 0
        %2199 = vmatprep.subr.bf16.mxu0 0
        %2200 = vmatpush1.bf16.xpose.msra.mxu0 0
        %2201 = vmatprep.subr.bf16.mxu0 0
        %2202 = vmatpush1.bf16.xpose.msra.mxu0 0
        %2203 = vmatprep.subr.bf16.mxu0 0
        %2204 = vmatpush1.bf16.xpose.msra.mxu0 0
        %2205 = vmatprep.subr.bf16.mxu0 0
        %2206 = vmatpush1.bf16.xpose.msra.mxu0 0
        %2207 = vmatprep.subr.bf16.mxu0 0
        %2208 = vmatpush1.bf16.xpose.msra.mxu0 0
        %2209 = vmatprep.subr.bf16.mxu0 0
        %2210 = vmatpush1.bf16.xpose.msra.mxu0 0
        %2211 = vmatprep.subr.bf16.mxu0 0
        %2212 = vmatpush1.bf16.xpose.msra.mxu0 0
        %2213 = vmatprep.subr.bf16.mxu0 0
        %2214 = vmatpush1.bf16.xpose.msra.mxu0 0
        %2215 = vmatprep.subr.bf16.mxu0 0
        %2216 = vmatpush1.bf16.xpose.msra.mxu0 0
        %2217 = vmatprep.subr.bf16.mxu0 0
        %2218 = vmatpush1.bf16.xpose.msra.mxu0 0
        %2219 = vmatprep.subr.bf16.mxu0 0
        %2220 = vmatpush1.bf16.xpose.msra.mxu0 0
        %2221 = vmatprep.subr.bf16.mxu0 0
        %2222 = vmatpush1.bf16.xpose.msra.mxu0 0
        %2223 = vmatprep.mubr.bf16.mxu0 0
        %2224 = vmatmul.mubr.bf16.gmra.mrb[0].mxu0 %v2186
        %v2225 = vpop.f32.mrb[0].mxu0
        %v2226 = vadd.f32 %v2181, %v2225
        %v2227 = vpop.f32.mrb[0].mxu0
        %v2228 = vpop.f32.mrb[0].mxu0
        %v2229 = vpop.f32.mrb[0].mxu0
        %2230 = vdwg.mxu0
        %v2232 = vsel %vm935, %v1658, 0
        %v2235 = vsel %vm935, %v1662, 0
        %2237 = vmatprep.subr.bf16.mxu0 0
        %2238 = vmatpush1.bf16.xpose.msra.mxu0 %v2235
        %2239 = vmatprep.subr.bf16.mxu0 0
        %2240 = vmatpush1.bf16.xpose.msra.mxu0 0
        %2241 = vmatprep.subr.bf16.mxu0 0
        %2242 = vmatpush1.bf16.xpose.msra.mxu0 0
        %2243 = vmatprep.subr.bf16.mxu0 0
        %2244 = vmatpush1.bf16.xpose.msra.mxu0 0
        %2245 = vmatprep.subr.bf16.mxu0 0
        %2246 = vmatpush1.bf16.xpose.msra.mxu0 0
        %2247 = vmatprep.subr.bf16.mxu0 0
        %2248 = vmatpush1.bf16.xpose.msra.mxu0 0
        %2249 = vmatprep.subr.bf16.mxu0 0
        %2250 = vmatpush1.bf16.xpose.msra.mxu0 0
        %2251 = vmatprep.subr.bf16.mxu0 0
        %2252 = vmatpush1.bf16.xpose.msra.mxu0 0
        %2253 = vmatprep.subr.bf16.mxu0 0
        %2254 = vmatpush1.bf16.xpose.msra.mxu0 0
        %2255 = vmatprep.subr.bf16.mxu0 0
        %2256 = vmatpush1.bf16.xpose.msra.mxu0 0
        %2257 = vmatprep.subr.bf16.mxu0 0
        %2258 = vmatpush1.bf16.xpose.msra.mxu0 0
        %2259 = vmatprep.subr.bf16.mxu0 0
        %2260 = vmatpush1.bf16.xpose.msra.mxu0 0
        %2261 = vmatprep.subr.bf16.mxu0 0
        %2262 = vmatpush1.bf16.xpose.msra.mxu0 0
        %2263 = vmatprep.subr.bf16.mxu0 0
        %2264 = vmatpush1.bf16.xpose.msra.mxu0 0
        %2265 = vmatprep.subr.bf16.mxu0 0
        %2266 = vmatpush1.bf16.xpose.msra.mxu0 0
        %2267 = vmatprep.subr.bf16.mxu0 0
        %2268 = vmatpush1.bf16.xpose.msra.mxu0 0
        %2269 = vmatprep.mubr.bf16.mxu0 0
        %2270 = vmatmul.mubr.bf16.gmra.mrb[0].mxu0 %v2232
        %v2271 = vpop.f32.mrb[0].mxu0
        %v2272 = vadd.f32 %v2182, %v2271
        %v2273 = vpop.f32.mrb[0].mxu0
        %v2274 = vpop.f32.mrb[0].mxu0
        %v2275 = vpop.f32.mrb[0].mxu0
        %2276 = vdwg.mxu0
        %v2278 = vsel %vm935, %v1659, 0
        %v2281 = vsel %vm935, %v1663, 0
        %2283 = vmatprep.subr.bf16.mxu0 0
        %2284 = vmatpush1.bf16.xpose.msra.mxu0 %v2281
        %2285 = vmatprep.subr.bf16.mxu0 0
        %2286 = vmatpush1.bf16.xpose.msra.mxu0 0
        %2287 = vmatprep.subr.bf16.mxu0 0
        %2288 = vmatpush1.bf16.xpose.msra.mxu0 0
        %2289 = vmatprep.subr.bf16.mxu0 0
        %2290 = vmatpush1.bf16.xpose.msra.mxu0 0
        %2291 = vmatprep.subr.bf16.mxu0 0
        %2292 = vmatpush1.bf16.xpose.msra.mxu0 0
        %2293 = vmatprep.subr.bf16.mxu0 0
        %2294 = vmatpush1.bf16.xpose.msra.mxu0 0
        %2295 = vmatprep.subr.bf16.mxu0 0
        %2296 = vmatpush1.bf16.xpose.msra.mxu0 0
        %2297 = vmatprep.subr.bf16.mxu0 0
        %2298 = vmatpush1.bf16.xpose.msra.mxu0 0
        %2299 = vmatprep.subr.bf16.mxu0 0
        %2300 = vmatpush1.bf16.xpose.msra.mxu0 0
        %2301 = vmatprep.subr.bf16.mxu0 0
        %2302 = vmatpush1.bf16.xpose.msra.mxu0 0
        %2303 = vmatprep.subr.bf16.mxu0 0
        %2304 = vmatpush1.bf16.xpose.msra.mxu0 0
        %2305 = vmatprep.subr.bf16.mxu0 0
        %2306 = vmatpush1.bf16.xpose.msra.mxu0 0
        %2307 = vmatprep.subr.bf16.mxu0 0
        %2308 = vmatpush1.bf16.xpose.msra.mxu0 0
        %2309 = vmatprep.subr.bf16.mxu0 0
        %2310 = vmatpush1.bf16.xpose.msra.mxu0 0
        %2311 = vmatprep.subr.bf16.mxu0 0
        %2312 = vmatpush1.bf16.xpose.msra.mxu0 0
        %2313 = vmatprep.subr.bf16.mxu0 0
        %2314 = vmatpush1.bf16.xpose.msra.mxu0 0
        %2315 = vmatprep.mubr.bf16.mxu0 0
        %2316 = vmatmul.mubr.bf16.gmra.mrb[0].mxu0 %v2278
        %v2317 = vpop.f32.mrb[0].mxu0
        %v2318 = vadd.f32 %v2183, %v2317
        %v2319 = vpop.f32.mrb[0].mxu0
        %v2320 = vpop.f32.mrb[0].mxu0
        %v2321 = vpop.f32.mrb[0].mxu0
        %2322 = vdwg.mxu0
        %v2324 = vsel %vm935, %v1660, 0
        %v2327 = vsel %vm935, %v1664, 0
        %2329 = vmatprep.subr.bf16.mxu0 0
        %2330 = vmatpush1.bf16.xpose.msra.mxu0 %v2327
        %2331 = vmatprep.subr.bf16.mxu0 0
        %2332 = vmatpush1.bf16.xpose.msra.mxu0 0
        %2333 = vmatprep.subr.bf16.mxu0 0
        %2334 = vmatpush1.bf16.xpose.msra.mxu0 0
        %2335 = vmatprep.subr.bf16.mxu0 0
        %2336 = vmatpush1.bf16.xpose.msra.mxu0 0
        %2337 = vmatprep.subr.bf16.mxu0 0
        %2338 = vmatpush1.bf16.xpose.msra.mxu0 0
        %2339 = vmatprep.subr.bf16.mxu0 0
        %2340 = vmatpush1.bf16.xpose.msra.mxu0 0
        %2341 = vmatprep.subr.bf16.mxu0 0
        %2342 = vmatpush1.bf16.xpose.msra.mxu0 0
        %2343 = vmatprep.subr.bf16.mxu0 0
        %2344 = vmatpush1.bf16.xpose.msra.mxu0 0
        %2345 = vmatprep.subr.bf16.mxu0 0
        %2346 = vmatpush1.bf16.xpose.msra.mxu0 0
        %2347 = vmatprep.subr.bf16.mxu0 0
        %2348 = vmatpush1.bf16.xpose.msra.mxu0 0
        %2349 = vmatprep.subr.bf16.mxu0 0
        %2350 = vmatpush1.bf16.xpose.msra.mxu0 0
        %2351 = vmatprep.subr.bf16.mxu0 0
        %2352 = vmatpush1.bf16.xpose.msra.mxu0 0
        %2353 = vmatprep.subr.bf16.mxu0 0
        %2354 = vmatpush1.bf16.xpose.msra.mxu0 0
        %2355 = vmatprep.subr.bf16.mxu0 0
        %2356 = vmatpush1.bf16.xpose.msra.mxu0 0
        %2357 = vmatprep.subr.bf16.mxu0 0
        %2358 = vmatpush1.bf16.xpose.msra.mxu0 0
        %2359 = vmatprep.subr.bf16.mxu0 0
        %2360 = vmatpush1.bf16.xpose.msra.mxu0 0
        %2361 = vmatprep.mubr.bf16.mxu0 0
        %2362 = vmatmul.mubr.bf16.gmra.mrb[0].mxu0 %v2324
        %v2363 = vpop.f32.mrb[0].mxu0
        %v2364 = vadd.f32 %v2184, %v2363
        %v2365 = vpop.f32.mrb[0].mxu0
        %v2366 = vpop.f32.mrb[0].mxu0
        %v2367 = vpop.f32.mrb[0].mxu0
        %2368 = vdwg.mxu0
        %v2369 = vmul.f32 %v2226, 0.35355338
        %v2370 = vmul.f32 %v2272, 0.35355338
        %v2371 = vmul.f32 %v2318, 0.35355338
        %v2372 = vmul.f32 %v2364, 0.35355338
        %v2373 = vadd.f32 %v2369, %v710
        %v2374 = vadd.f32 %v2370, %v710
        %v2375 = vadd.f32 %v2371, %v710
        %v2376 = vadd.f32 %v2372, %v710
        %v2377 = vsel %vm935, %v2373, -inf
        %2378 = vmax.xlane.f32.xlu0 %v2377
        %v2379 = vpop.xlane.xlu0 %2378
        %v2380 = vsel %vm935, %v2374, -inf
        %2381 = vmax.xlane.f32.xlu0 %v2380
        %v2382 = vpop.xlane.xlu0 %2381
        %v2383 = vsel %vm935, %v2375, -inf
        %2384 = vmax.xlane.f32.xlu0 %v2383
        %v2385 = vpop.xlane.xlu0 %2384
        %v2386 = vsel %vm935, %v2376, -inf
        %2387 = vmax.xlane.f32.xlu0 %v2386
        %v2388 = vpop.xlane.xlu0 %2387
        %v2389 = vsub.f32 %v2373, %v2379
        %v2390 = vsub.f32 %v2374, %v2382
        %v2391 = vsub.f32 %v2375, %v2385
        %v2392 = vsub.f32 %v2376, %v2388
        %v2393 = vmul.f32 %v2389, 1.442695
        %v2394 = vpow.pop %v2393
        %v2395 = vmul.f32 %v2390, 1.442695
        %v2396 = vpow.pop %v2395
        %v2397 = vmul.f32 %v2391, 1.442695
        %v2398 = vpow.pop %v2397
        %v2399 = vmul.f32 %v2392, 1.442695
        %v2400 = vpow.pop %v2399
        %v2401 = vsel %vm935, %v2394, 0.0
        %2402 = vadd.xlane.f32.xlu0 %v2401
        %v2403 = vpop.xlane.xlu0 %2402
        %v2404 = vsel %vm935, %v2396, 0.0
        %2405 = vadd.xlane.f32.xlu0 %v2404
        %v2406 = vpop.xlane.xlu0 %2405
        %v2407 = vsel %vm935, %v2398, 0.0
        %2408 = vadd.xlane.f32.xlu0 %v2407
        %v2409 = vpop.xlane.xlu0 %2408
        %v2410 = vsel %vm935, %v2400, 0.0
        %2411 = vadd.xlane.f32.xlu0 %v2410
        %v2412 = vpop.xlane.xlu0 %2411
        %v2413 = vrcp.pop %v2403
        %v2414 = vrcp.pop %v2406
        %v2415 = vrcp.pop %v2409
        %v2416 = vrcp.pop %v2412
        %v2417 = vmul.f32 %v2394, %v2413
        %v2418 = vmul.f32 %v2396, %v2414
        %v2419 = vmul.f32 %v2398, %v2415
        %v2420 = vmul.f32 %v2400, %v2416
        %v2421 = vpack.c.bf16 %v2417, %v2417
        %v2422 = vpack.c.bf16 %v2418, %v2418
        %v2423 = vpack.c.bf16 %v2419, %v2419
        %v2424 = vpack.c.bf16 %v2420, %v2420
        %v2425 = vpack.c.bf16 %v1622, %v1622
        %v2426 = vpack.c.bf16 %v1649, %v1649
        %v2427 = vpack.c.bf16 %v1652, %v1652
        %v2428 = vpack.c.bf16 %v1655, %v1655
        %v2429 = vcombine.low %v2417, %v2419
        %v2430 = vcombine.high %v2417, %v2419
        %v2432 = vunpack.c.l.s4 1983009808
        %v2433 = vunpack.c.0.s8 %v2432
        %v2434 = vlaneseq
        %v2435 = vshrl.u32 %v2434, 7
        %v2436 = vsub.s32 %v2433, %v2435
        %v2437 = vrot.slane %v2429, %v2436
        %v2439 = vunpack.c.l.s4 1983009808
        %v2440 = vunpack.c.0.s8 %v2439
        %v2441 = vlaneseq
        %v2442 = vshrl.u32 %v2441, 7
        %v2443 = vsub.s32 %v2440, %v2442
        %v2444 = vrot.slane %v2430, %v2443
        %v2445 = vcombine.low %v2418, %v2420
        %v2446 = vcombine.high %v2418, %v2420
        %v2448 = vunpack.c.l.s4 1983009808
        %v2449 = vunpack.c.0.s8 %v2448
        %v2450 = vlaneseq
        %v2451 = vshrl.u32 %v2450, 7
        %v2452 = vsub.s32 %v2449, %v2451
        %v2453 = vrot.slane %v2445, %v2452
        %v2455 = vunpack.c.l.s4 1983009808
        %v2456 = vunpack.c.0.s8 %v2455
        %v2457 = vlaneseq
        %v2458 = vshrl.u32 %v2457, 7
        %v2459 = vsub.s32 %v2456, %v2458
        %v2460 = vrot.slane %v2446, %v2459
        %v2461 = vcombine.low %v2437, %v2453
        %v2462 = vcombine.high %v2437, %v2453
        %v2464 = vunpack.c.l.s4 1934713408
        %v2465 = vunpack.c.0.s8 %v2464
        %v2466 = vlaneseq
        %v2467 = vshrl.u32 %v2466, 7
        %v2468 = vsub.s32 %v2465, %v2467
        %v2469 = vrot.slane %v2461, %v2468
        %v2471 = vunpack.c.l.s4 1934713408
        %v2472 = vunpack.c.0.s8 %v2471
        %v2473 = vlaneseq
        %v2474 = vshrl.u32 %v2473, 7
        %v2475 = vsub.s32 %v2472, %v2474
        %v2476 = vrot.slane %v2462, %v2475
        %v2477 = vcombine.low %v2444, %v2460
        %v2478 = vcombine.high %v2444, %v2460
        %v2480 = vunpack.c.l.s4 1934713408
        %v2481 = vunpack.c.0.s8 %v2480
        %v2482 = vlaneseq
        %v2483 = vshrl.u32 %v2482, 7
        %v2484 = vsub.s32 %v2481, %v2483
        %v2485 = vrot.slane %v2477, %v2484
        %v2487 = vunpack.c.l.s4 1934713408
        %v2488 = vunpack.c.0.s8 %v2487
        %v2489 = vlaneseq
        %v2490 = vshrl.u32 %v2489, 7
        %v2491 = vsub.s32 %v2488, %v2490
        %v2492 = vrot.slane %v2478, %v2491
        %v2493 = vcombine.high %v2469, 0.0
        %v2494 = vcombine.high %v2476, 0.0
        %v2495 = vcombine.high %v2485, 0.0
        %v2496 = vcombine.high %v2492, 0.0
        %v2497 = vpack.c.bf16 %v2469, %v2469
        %v2498 = vpack.c.bf16 %v2493, %v2493
        %v2499 = vpack.c.bf16 %v2476, %v2476
        %v2500 = vpack.c.bf16 %v2494, %v2494
        %v2501 = vpack.c.bf16 %v2485, %v2485
        %v2502 = vpack.c.bf16 %v2495, %v2495
        %v2503 = vpack.c.bf16 %v2492, %v2492
        %v2504 = vpack.c.bf16 %v2496, %v2496
        %v2506 = vsel %vm935, %v2497, 0
        %v2508 = vsel %vm1183, %v1665, 0
        %2510 = vmatprep.subr.bf16.mxu0 0
        %2511 = vmatpush1.bf16.msra.mxu0 %v2508
        %2512 = vmatprep.subr.bf16.mxu0 0
        %2513 = vmatpush1.bf16.msra.mxu0 0
        %2514 = vmatprep.subr.bf16.mxu0 0
        %2515 = vmatpush1.bf16.msra.mxu0 0
        %2516 = vmatprep.subr.bf16.mxu0 0
        %2517 = vmatpush1.bf16.msra.mxu0 0
        %2518 = vmatprep.subr.bf16.mxu0 0
        %2519 = vmatpush1.bf16.msra.mxu0 0
        %2520 = vmatprep.subr.bf16.mxu0 0
        %2521 = vmatpush1.bf16.msra.mxu0 0
        %2522 = vmatprep.subr.bf16.mxu0 0
        %2523 = vmatpush1.bf16.msra.mxu0 0
        %2524 = vmatprep.subr.bf16.mxu0 0
        %2525 = vmatpush1.bf16.msra.mxu0 0
        %2526 = vmatprep.subr.bf16.mxu0 0
        %2527 = vmatpush1.bf16.msra.mxu0 0
        %2528 = vmatprep.subr.bf16.mxu0 0
        %2529 = vmatpush1.bf16.msra.mxu0 0
        %2530 = vmatprep.subr.bf16.mxu0 0
        %2531 = vmatpush1.bf16.msra.mxu0 0
        %2532 = vmatprep.subr.bf16.mxu0 0
        %2533 = vmatpush1.bf16.msra.mxu0 0
        %2534 = vmatprep.subr.bf16.mxu0 0
        %2535 = vmatpush1.bf16.msra.mxu0 0
        %2536 = vmatprep.subr.bf16.mxu0 0
        %2537 = vmatpush1.bf16.msra.mxu0 0
        %2538 = vmatprep.subr.bf16.mxu0 0
        %2539 = vmatpush1.bf16.msra.mxu0 0
        %2540 = vmatprep.subr.bf16.mxu0 0
        %2541 = vmatpush1.bf16.msra.mxu0 0
        %2542 = vmatprep.mubr.bf16.mxu0 0
        %2543 = vmatmul.mubr.bf16.gmra.mrb[0].mxu0 %v2506
        %v2544 = vpop.f32.mrb[0].mxu0
        %v2545 = vadd.f32 0.0, %v2544
        %v2546 = vpop.f32.mrb[0].mxu0
        %v2547 = vpop.f32.mrb[0].mxu0
        %v2548 = vpop.f32.mrb[0].mxu0
        %2549 = vdwg.mxu0
        %v2551 = vsel %vm935, %v2498, 0
        %v2553 = vsel %vm1183, %v1666, 0
        %2555 = vmatprep.subr.bf16.mxu0 0
        %2556 = vmatpush1.bf16.msra.mxu0 %v2553
        %2557 = vmatprep.subr.bf16.mxu0 0
        %2558 = vmatpush1.bf16.msra.mxu0 0
        %2559 = vmatprep.subr.bf16.mxu0 0
        %2560 = vmatpush1.bf16.msra.mxu0 0
        %2561 = vmatprep.subr.bf16.mxu0 0
        %2562 = vmatpush1.bf16.msra.mxu0 0
        %2563 = vmatprep.subr.bf16.mxu0 0
        %2564 = vmatpush1.bf16.msra.mxu0 0
        %2565 = vmatprep.subr.bf16.mxu0 0
        %2566 = vmatpush1.bf16.msra.mxu0 0
        %2567 = vmatprep.subr.bf16.mxu0 0
        %2568 = vmatpush1.bf16.msra.mxu0 0
        %2569 = vmatprep.subr.bf16.mxu0 0
        %2570 = vmatpush1.bf16.msra.mxu0 0
        %2571 = vmatprep.subr.bf16.mxu0 0
        %2572 = vmatpush1.bf16.msra.mxu0 0
        %2573 = vmatprep.subr.bf16.mxu0 0
        %2574 = vmatpush1.bf16.msra.mxu0 0
        %2575 = vmatprep.subr.bf16.mxu0 0
        %2576 = vmatpush1.bf16.msra.mxu0 0
        %2577 = vmatprep.subr.bf16.mxu0 0
        %2578 = vmatpush1.bf16.msra.mxu0 0
        %2579 = vmatprep.subr.bf16.mxu0 0
        %2580 = vmatpush1.bf16.msra.mxu0 0
        %2581 = vmatprep.subr.bf16.mxu0 0
        %2582 = vmatpush1.bf16.msra.mxu0 0
        %2583 = vmatprep.subr.bf16.mxu0 0
        %2584 = vmatpush1.bf16.msra.mxu0 0
        %2585 = vmatprep.subr.bf16.mxu0 0
        %2586 = vmatpush1.bf16.msra.mxu0 0
        %2587 = vmatprep.mubr.bf16.mxu0 0
        %2588 = vmatmul.mubr.bf16.gmra.mrb[0].mxu0 %v2551
        %v2589 = vpop.f32.mrb[0].mxu0
        %v2590 = vadd.f32 0.0, %v2589
        %v2591 = vpop.f32.mrb[0].mxu0
        %v2592 = vpop.f32.mrb[0].mxu0
        %v2593 = vpop.f32.mrb[0].mxu0
        %2594 = vdwg.mxu0
        %v2596 = vsel %vm935, %v2499, 0
        %v2598 = vsel %vm1183, %v1667, 0
        %2600 = vmatprep.subr.bf16.mxu0 0
        %2601 = vmatpush1.bf16.msra.mxu0 %v2598
        %2602 = vmatprep.subr.bf16.mxu0 0
        %2603 = vmatpush1.bf16.msra.mxu0 0
        %2604 = vmatprep.subr.bf16.mxu0 0
        %2605 = vmatpush1.bf16.msra.mxu0 0
        %2606 = vmatprep.subr.bf16.mxu0 0
        %2607 = vmatpush1.bf16.msra.mxu0 0
        %2608 = vmatprep.subr.bf16.mxu0 0
        %2609 = vmatpush1.bf16.msra.mxu0 0
        %2610 = vmatprep.subr.bf16.mxu0 0
        %2611 = vmatpush1.bf16.msra.mxu0 0
        %2612 = vmatprep.subr.bf16.mxu0 0
        %2613 = vmatpush1.bf16.msra.mxu0 0
        %2614 = vmatprep.subr.bf16.mxu0 0
        %2615 = vmatpush1.bf16.msra.mxu0 0
        %2616 = vmatprep.subr.bf16.mxu0 0
        %2617 = vmatpush1.bf16.msra.mxu0 0
        %2618 = vmatprep.subr.bf16.mxu0 0
        %2619 = vmatpush1.bf16.msra.mxu0 0
        %2620 = vmatprep.subr.bf16.mxu0 0
        %2621 = vmatpush1.bf16.msra.mxu0 0
        %2622 = vmatprep.subr.bf16.mxu0 0
        %2623 = vmatpush1.bf16.msra.mxu0 0
        %2624 = vmatprep.subr.bf16.mxu0 0
        %2625 = vmatpush1.bf16.msra.mxu0 0
        %2626 = vmatprep.subr.bf16.mxu0 0
        %2627 = vmatpush1.bf16.msra.mxu0 0
        %2628 = vmatprep.subr.bf16.mxu0 0
        %2629 = vmatpush1.bf16.msra.mxu0 0
        %2630 = vmatprep.subr.bf16.mxu0 0
        %2631 = vmatpush1.bf16.msra.mxu0 0
        %2632 = vmatprep.mubr.bf16.mxu0 0
        %2633 = vmatmul.mubr.bf16.gmra.mrb[0].mxu0 %v2596
        %v2634 = vpop.f32.mrb[0].mxu0
        %v2635 = vadd.f32 0.0, %v2634
        %v2636 = vpop.f32.mrb[0].mxu0
        %v2637 = vpop.f32.mrb[0].mxu0
        %v2638 = vpop.f32.mrb[0].mxu0
        %2639 = vdwg.mxu0
        %v2641 = vsel %vm935, %v2500, 0
        %v2643 = vsel %vm1183, %v1668, 0
        %2645 = vmatprep.subr.bf16.mxu0 0
        %2646 = vmatpush1.bf16.msra.mxu0 %v2643
        %2647 = vmatprep.subr.bf16.mxu0 0
        %2648 = vmatpush1.bf16.msra.mxu0 0
        %2649 = vmatprep.subr.bf16.mxu0 0
        %2650 = vmatpush1.bf16.msra.mxu0 0
        %2651 = vmatprep.subr.bf16.mxu0 0
        %2652 = vmatpush1.bf16.msra.mxu0 0
        %2653 = vmatprep.subr.bf16.mxu0 0
        %2654 = vmatpush1.bf16.msra.mxu0 0
        %2655 = vmatprep.subr.bf16.mxu0 0
        %2656 = vmatpush1.bf16.msra.mxu0 0
        %2657 = vmatprep.subr.bf16.mxu0 0
        %2658 = vmatpush1.bf16.msra.mxu0 0
        %2659 = vmatprep.subr.bf16.mxu0 0
        %2660 = vmatpush1.bf16.msra.mxu0 0
        %2661 = vmatprep.subr.bf16.mxu0 0
        %2662 = vmatpush1.bf16.msra.mxu0 0
        %2663 = vmatprep.subr.bf16.mxu0 0
        %2664 = vmatpush1.bf16.msra.mxu0 0
        %2665 = vmatprep.subr.bf16.mxu0 0
        %2666 = vmatpush1.bf16.msra.mxu0 0
        %2667 = vmatprep.subr.bf16.mxu0 0
        %2668 = vmatpush1.bf16.msra.mxu0 0
        %2669 = vmatprep.subr.bf16.mxu0 0
        %2670 = vmatpush1.bf16.msra.mxu0 0
        %2671 = vmatprep.subr.bf16.mxu0 0
        %2672 = vmatpush1.bf16.msra.mxu0 0
        %2673 = vmatprep.subr.bf16.mxu0 0
        %2674 = vmatpush1.bf16.msra.mxu0 0
        %2675 = vmatprep.subr.bf16.mxu0 0
        %2676 = vmatpush1.bf16.msra.mxu0 0
        %2677 = vmatprep.mubr.bf16.mxu0 0
        %2678 = vmatmul.mubr.bf16.gmra.mrb[0].mxu0 %v2641
        %v2679 = vpop.f32.mrb[0].mxu0
        %v2680 = vadd.f32 0.0, %v2679
        %v2681 = vpop.f32.mrb[0].mxu0
        %v2682 = vpop.f32.mrb[0].mxu0
        %v2683 = vpop.f32.mrb[0].mxu0
        %2684 = vdwg.mxu0
        %v2686 = vsel %vm935, %v2501, 0
        %v2688 = vsel %vm1183, %v1669, 0
        %2690 = vmatprep.subr.bf16.mxu0 0
        %2691 = vmatpush1.bf16.msra.mxu0 %v2688
        %2692 = vmatprep.subr.bf16.mxu0 0
        %2693 = vmatpush1.bf16.msra.mxu0 0
        %2694 = vmatprep.subr.bf16.mxu0 0
        %2695 = vmatpush1.bf16.msra.mxu0 0
        %2696 = vmatprep.subr.bf16.mxu0 0
        %2697 = vmatpush1.bf16.msra.mxu0 0
        %2698 = vmatprep.subr.bf16.mxu0 0
        %2699 = vmatpush1.bf16.msra.mxu0 0
        %2700 = vmatprep.subr.bf16.mxu0 0
        %2701 = vmatpush1.bf16.msra.mxu0 0
        %2702 = vmatprep.subr.bf16.mxu0 0
        %2703 = vmatpush1.bf16.msra.mxu0 0
        %2704 = vmatprep.subr.bf16.mxu0 0
        %2705 = vmatpush1.bf16.msra.mxu0 0
        %2706 = vmatprep.subr.bf16.mxu0 0
        %2707 = vmatpush1.bf16.msra.mxu0 0
        %2708 = vmatprep.subr.bf16.mxu0 0
        %2709 = vmatpush1.bf16.msra.mxu0 0
        %2710 = vmatprep.subr.bf16.mxu0 0
        %2711 = vmatpush1.bf16.msra.mxu0 0
        %2712 = vmatprep.subr.bf16.mxu0 0
        %2713 = vmatpush1.bf16.msra.mxu0 0
        %2714 = vmatprep.subr.bf16.mxu0 0
        %2715 = vmatpush1.bf16.msra.mxu0 0
        %2716 = vmatprep.subr.bf16.mxu0 0
        %2717 = vmatpush1.bf16.msra.mxu0 0
        %2718 = vmatprep.subr.bf16.mxu0 0
        %2719 = vmatpush1.bf16.msra.mxu0 0
        %2720 = vmatprep.subr.bf16.mxu0 0
        %2721 = vmatpush1.bf16.msra.mxu0 0
        %2722 = vmatprep.mubr.bf16.mxu0 0
        %2723 = vmatmul.mubr.bf16.gmra.mrb[0].mxu0 %v2686
        %v2724 = vpop.f32.mrb[0].mxu0
        %v2725 = vadd.f32 0.0, %v2724
        %v2726 = vpop.f32.mrb[0].mxu0
        %v2727 = vpop.f32.mrb[0].mxu0
        %v2728 = vpop.f32.mrb[0].mxu0
        %2729 = vdwg.mxu0
        %v2731 = vsel %vm935, %v2502, 0
        %v2733 = vsel %vm1183, %v1670, 0
        %2735 = vmatprep.subr.bf16.mxu0 0
        %2736 = vmatpush1.bf16.msra.mxu0 %v2733
        %2737 = vmatprep.subr.bf16.mxu0 0
        %2738 = vmatpush1.bf16.msra.mxu0 0
        %2739 = vmatprep.subr.bf16.mxu0 0
        %2740 = vmatpush1.bf16.msra.mxu0 0
        %2741 = vmatprep.subr.bf16.mxu0 0
        %2742 = vmatpush1.bf16.msra.mxu0 0
        %2743 = vmatprep.subr.bf16.mxu0 0
        %2744 = vmatpush1.bf16.msra.mxu0 0
        %2745 = vmatprep.subr.bf16.mxu0 0
        %2746 = vmatpush1.bf16.msra.mxu0 0
        %2747 = vmatprep.subr.bf16.mxu0 0
        %2748 = vmatpush1.bf16.msra.mxu0 0
        %2749 = vmatprep.subr.bf16.mxu0 0
        %2750 = vmatpush1.bf16.msra.mxu0 0
        %2751 = vmatprep.subr.bf16.mxu0 0
        %2752 = vmatpush1.bf16.msra.mxu0 0
        %2753 = vmatprep.subr.bf16.mxu0 0
        %2754 = vmatpush1.bf16.msra.mxu0 0
        %2755 = vmatprep.subr.bf16.mxu0 0
        %2756 = vmatpush1.bf16.msra.mxu0 0
        %2757 = vmatprep.subr.bf16.mxu0 0
        %2758 = vmatpush1.bf16.msra.mxu0 0
        %2759 = vmatprep.subr.bf16.mxu0 0
        %2760 = vmatpush1.bf16.msra.mxu0 0
        %2761 = vmatprep.subr.bf16.mxu0 0
        %2762 = vmatpush1.bf16.msra.mxu0 0
        %2763 = vmatprep.subr.bf16.mxu0 0
        %2764 = vmatpush1.bf16.msra.mxu0 0
        %2765 = vmatprep.subr.bf16.mxu0 0
        %2766 = vmatpush1.bf16.msra.mxu0 0
        %2767 = vmatprep.mubr.bf16.mxu0 0
        %2768 = vmatmul.mubr.bf16.gmra.mrb[0].mxu0 %v2731
        %v2769 = vpop.f32.mrb[0].mxu0
        %v2770 = vadd.f32 0.0, %v2769
        %v2771 = vpop.f32.mrb[0].mxu0
        %v2772 = vpop.f32.mrb[0].mxu0
        %v2773 = vpop.f32.mrb[0].mxu0
        %2774 = vdwg.mxu0
        %v2776 = vsel %vm935, %v2503, 0
        %v2778 = vsel %vm1183, %v1671, 0
        %2780 = vmatprep.subr.bf16.mxu0 0
        %2781 = vmatpush1.bf16.msra.mxu0 %v2778
        %2782 = vmatprep.subr.bf16.mxu0 0
        %2783 = vmatpush1.bf16.msra.mxu0 0
        %2784 = vmatprep.subr.bf16.mxu0 0
        %2785 = vmatpush1.bf16.msra.mxu0 0
        %2786 = vmatprep.subr.bf16.mxu0 0
        %2787 = vmatpush1.bf16.msra.mxu0 0
        %2788 = vmatprep.subr.bf16.mxu0 0
        %2789 = vmatpush1.bf16.msra.mxu0 0
        %2790 = vmatprep.subr.bf16.mxu0 0
        %2791 = vmatpush1.bf16.msra.mxu0 0
        %2792 = vmatprep.subr.bf16.mxu0 0
        %2793 = vmatpush1.bf16.msra.mxu0 0
        %2794 = vmatprep.subr.bf16.mxu0 0
        %2795 = vmatpush1.bf16.msra.mxu0 0
        %2796 = vmatprep.subr.bf16.mxu0 0
        %2797 = vmatpush1.bf16.msra.mxu0 0
        %2798 = vmatprep.subr.bf16.mxu0 0
        %2799 = vmatpush1.bf16.msra.mxu0 0
        %2800 = vmatprep.subr.bf16.mxu0 0
        %2801 = vmatpush1.bf16.msra.mxu0 0
        %2802 = vmatprep.subr.bf16.mxu0 0
        %2803 = vmatpush1.bf16.msra.mxu0 0
        %2804 = vmatprep.subr.bf16.mxu0 0
        %2805 = vmatpush1.bf16.msra.mxu0 0
        %2806 = vmatprep.subr.bf16.mxu0 0
        %2807 = vmatpush1.bf16.msra.mxu0 0
        %2808 = vmatprep.subr.bf16.mxu0 0
        %2809 = vmatpush1.bf16.msra.mxu0 0
        %2810 = vmatprep.subr.bf16.mxu0 0
        %2811 = vmatpush1.bf16.msra.mxu0 0
        %2812 = vmatprep.mubr.bf16.mxu0 0
        %2813 = vmatmul.mubr.bf16.gmra.mrb[0].mxu0 %v2776
        %v2814 = vpop.f32.mrb[0].mxu0
        %v2815 = vadd.f32 0.0, %v2814
        %v2816 = vpop.f32.mrb[0].mxu0
        %v2817 = vpop.f32.mrb[0].mxu0
        %v2818 = vpop.f32.mrb[0].mxu0
        %2819 = vdwg.mxu0
        %v2821 = vsel %vm935, %v2504, 0
        %v2823 = vsel %vm1183, %v1672, 0
        %2825 = vmatprep.subr.bf16.mxu0 0
        %2826 = vmatpush1.bf16.msra.mxu0 %v2823
        %2827 = vmatprep.subr.bf16.mxu0 0
        %2828 = vmatpush1.bf16.msra.mxu0 0
        %2829 = vmatprep.subr.bf16.mxu0 0
        %2830 = vmatpush1.bf16.msra.mxu0 0
        %2831 = vmatprep.subr.bf16.mxu0 0
        %2832 = vmatpush1.bf16.msra.mxu0 0
        %2833 = vmatprep.subr.bf16.mxu0 0
        %2834 = vmatpush1.bf16.msra.mxu0 0
        %2835 = vmatprep.subr.bf16.mxu0 0
        %2836 = vmatpush1.bf16.msra.mxu0 0
        %2837 = vmatprep.subr.bf16.mxu0 0
        %2838 = vmatpush1.bf16.msra.mxu0 0
        %2839 = vmatprep.subr.bf16.mxu0 0
        %2840 = vmatpush1.bf16.msra.mxu0 0
        %2841 = vmatprep.subr.bf16.mxu0 0
        %2842 = vmatpush1.bf16.msra.mxu0 0
        %2843 = vmatprep.subr.bf16.mxu0 0
        %2844 = vmatpush1.bf16.msra.mxu0 0
        %2845 = vmatprep.subr.bf16.mxu0 0
        %2846 = vmatpush1.bf16.msra.mxu0 0
        %2847 = vmatprep.subr.bf16.mxu0 0
        %2848 = vmatpush1.bf16.msra.mxu0 0
        %2849 = vmatprep.subr.bf16.mxu0 0
        %2850 = vmatpush1.bf16.msra.mxu0 0
        %2851 = vmatprep.subr.bf16.mxu0 0
        %2852 = vmatpush1.bf16.msra.mxu0 0
        %2853 = vmatprep.subr.bf16.mxu0 0
        %2854 = vmatpush1.bf16.msra.mxu0 0
        %2855 = vmatprep.subr.bf16.mxu0 0
        %2856 = vmatpush1.bf16.msra.mxu0 0
        %2857 = vmatprep.mubr.bf16.mxu0 0
        %2858 = vmatmul.mubr.bf16.gmra.mrb[0].mxu0 %v2821
        %v2859 = vpop.f32.mrb[0].mxu0
        %v2860 = vadd.f32 0.0, %v2859
        %v2861 = vpop.f32.mrb[0].mxu0
        %v2862 = vpop.f32.mrb[0].mxu0
        %v2863 = vpop.f32.mrb[0].mxu0
        %2864 = vdwg.mxu0
        %v2865 = vcombine.low %v2545, %v2635
        %v2867 = vunpack.c.l.s4 1983009808
        %v2868 = vunpack.c.0.s8 %v2867
        %v2869 = vlaneseq
        %v2870 = vshrl.u32 %v2869, 7
        %v2871 = vsub.s32 %v2868, %v2870
        %v2872 = vrot.slane %v2865, %v2871
        %v2873 = vcombine.low %v2590, %v2680
        %v2875 = vunpack.c.l.s4 1983009808
        %v2876 = vunpack.c.0.s8 %v2875
        %v2877 = vlaneseq
        %v2878 = vshrl.u32 %v2877, 7
        %v2879 = vsub.s32 %v2876, %v2878
        %v2880 = vrot.slane %v2873, %v2879
        %v2881 = vcombine.low %v2725, %v2815
        %v2883 = vunpack.c.l.s4 1983009808
        %v2884 = vunpack.c.0.s8 %v2883
        %v2885 = vlaneseq
        %v2886 = vshrl.u32 %v2885, 7
        %v2887 = vsub.s32 %v2884, %v2886
        %v2888 = vrot.slane %v2881, %v2887
        %v2889 = vcombine.low %v2770, %v2860
        %v2891 = vunpack.c.l.s4 1983009808
        %v2892 = vunpack.c.0.s8 %v2891
        %v2893 = vlaneseq
        %v2894 = vshrl.u32 %v2893, 7
        %v2895 = vsub.s32 %v2892, %v2894
        %v2896 = vrot.slane %v2889, %v2895
        %v2897 = vcombine.low %v2872, %v2880
        %v2898 = vcombine.high %v2872, %v2880
        %v2900 = vunpack.c.l.s4 1934713408
        %v2901 = vunpack.c.0.s8 %v2900
        %v2902 = vlaneseq
        %v2903 = vshrl.u32 %v2902, 7
        %v2904 = vsub.s32 %v2901, %v2903
        %v2905 = vrot.slane %v2897, %v2904
        %v2907 = vunpack.c.l.s4 1934713408
        %v2908 = vunpack.c.0.s8 %v2907
        %v2909 = vlaneseq
        %v2910 = vshrl.u32 %v2909, 7
        %v2911 = vsub.s32 %v2908, %v2910
        %v2912 = vrot.slane %v2898, %v2911
        %v2913 = vcombine.low %v2888, %v2896
        %v2914 = vcombine.high %v2888, %v2896
        %v2916 = vunpack.c.l.s4 1934713408
        %v2917 = vunpack.c.0.s8 %v2916
        %v2918 = vlaneseq
        %v2919 = vshrl.u32 %v2918, 7
        %v2920 = vsub.s32 %v2917, %v2919
        %v2921 = vrot.slane %v2913, %v2920
        %v2923 = vunpack.c.l.s4 1934713408
        %v2924 = vunpack.c.0.s8 %v2923
        %v2925 = vlaneseq
        %v2926 = vshrl.u32 %v2925, 7
        %v2927 = vsub.s32 %v2924, %v2926
        %v2928 = vrot.slane %v2914, %v2927
        %v2929 = vcombine.low %v2905, %v2921
        %v2930 = vcombine.high %v2905, %v2921
        %v2931 = vcombine.low %v2912, %v2928
        %v2932 = vcombine.high %v2912, %v2928
        %v2934 = vsel %vm935, %v2421, 0
        %v2937 = vsel %vm1183, %v2425, 0
        %2939 = vmatprep.subr.bf16.mxu0 0
        %2940 = vmatpush1.bf16.msra.mxu0 %v2937
        %2941 = vmatprep.subr.bf16.mxu0 0
        %2942 = vmatpush1.bf16.msra.mxu0 0
        %2943 = vmatprep.subr.bf16.mxu0 0
        %2944 = vmatpush1.bf16.msra.mxu0 0
        %2945 = vmatprep.subr.bf16.mxu0 0
        %2946 = vmatpush1.bf16.msra.mxu0 0
        %2947 = vmatprep.subr.bf16.mxu0 0
        %2948 = vmatpush1.bf16.msra.mxu0 0
        %2949 = vmatprep.subr.bf16.mxu0 0
        %2950 = vmatpush1.bf16.msra.mxu0 0
        %2951 = vmatprep.subr.bf16.mxu0 0
        %2952 = vmatpush1.bf16.msra.mxu0 0
        %2953 = vmatprep.subr.bf16.mxu0 0
        %2954 = vmatpush1.bf16.msra.mxu0 0
        %2955 = vmatprep.subr.bf16.mxu0 0
        %2956 = vmatpush1.bf16.msra.mxu0 0
        %2957 = vmatprep.subr.bf16.mxu0 0
        %2958 = vmatpush1.bf16.msra.mxu0 0
        %2959 = vmatprep.subr.bf16.mxu0 0
        %2960 = vmatpush1.bf16.msra.mxu0 0
        %2961 = vmatprep.subr.bf16.mxu0 0
        %2962 = vmatpush1.bf16.msra.mxu0 0
        %2963 = vmatprep.subr.bf16.mxu0 0
        %2964 = vmatpush1.bf16.msra.mxu0 0
        %2965 = vmatprep.subr.bf16.mxu0 0
        %2966 = vmatpush1.bf16.msra.mxu0 0
        %2967 = vmatprep.subr.bf16.mxu0 0
        %2968 = vmatpush1.bf16.msra.mxu0 0
        %2969 = vmatprep.subr.bf16.mxu0 0
        %2970 = vmatpush1.bf16.msra.mxu0 0
        %2971 = vmatprep.mubr.bf16.mxu0 0
        %2972 = vmatmul.mubr.bf16.gmra.mrb[0].mxu0 %v2934
        %v2973 = vpop.f32.mrb[0].mxu0
        %v2974 = vadd.f32 %v2929, %v2973
        %v2975 = vpop.f32.mrb[0].mxu0
        %v2976 = vpop.f32.mrb[0].mxu0
        %v2977 = vpop.f32.mrb[0].mxu0
        %2978 = vdwg.mxu0
        %v2980 = vsel %vm935, %v2422, 0
        %v2983 = vsel %vm1183, %v2426, 0
        %2985 = vmatprep.subr.bf16.mxu0 0
        %2986 = vmatpush1.bf16.msra.mxu0 %v2983
        %2987 = vmatprep.subr.bf16.mxu0 0
        %2988 = vmatpush1.bf16.msra.mxu0 0
        %2989 = vmatprep.subr.bf16.mxu0 0
        %2990 = vmatpush1.bf16.msra.mxu0 0
        %2991 = vmatprep.subr.bf16.mxu0 0
        %2992 = vmatpush1.bf16.msra.mxu0 0
        %2993 = vmatprep.subr.bf16.mxu0 0
        %2994 = vmatpush1.bf16.msra.mxu0 0
        %2995 = vmatprep.subr.bf16.mxu0 0
        %2996 = vmatpush1.bf16.msra.mxu0 0
        %2997 = vmatprep.subr.bf16.mxu0 0
        %2998 = vmatpush1.bf16.msra.mxu0 0
        %2999 = vmatprep.subr.bf16.mxu0 0
        %3000 = vmatpush1.bf16.msra.mxu0 0
        %3001 = vmatprep.subr.bf16.mxu0 0
        %3002 = vmatpush1.bf16.msra.mxu0 0
        %3003 = vmatprep.subr.bf16.mxu0 0
        %3004 = vmatpush1.bf16.msra.mxu0 0
        %3005 = vmatprep.subr.bf16.mxu0 0
        %3006 = vmatpush1.bf16.msra.mxu0 0
        %3007 = vmatprep.subr.bf16.mxu0 0
        %3008 = vmatpush1.bf16.msra.mxu0 0
        %3009 = vmatprep.subr.bf16.mxu0 0
        %3010 = vmatpush1.bf16.msra.mxu0 0
        %3011 = vmatprep.subr.bf16.mxu0 0
        %3012 = vmatpush1.bf16.msra.mxu0 0
        %3013 = vmatprep.subr.bf16.mxu0 0
        %3014 = vmatpush1.bf16.msra.mxu0 0
        %3015 = vmatprep.subr.bf16.mxu0 0
        %3016 = vmatpush1.bf16.msra.mxu0 0
        %3017 = vmatprep.mubr.bf16.mxu0 0
        %3018 = vmatmul.mubr.bf16.gmra.mrb[0].mxu0 %v2980
        %v3019 = vpop.f32.mrb[0].mxu0
        %v3020 = vadd.f32 %v2930, %v3019
        %v3021 = vpop.f32.mrb[0].mxu0
        %v3022 = vpop.f32.mrb[0].mxu0
        %v3023 = vpop.f32.mrb[0].mxu0
        %3024 = vdwg.mxu0
        %v3026 = vsel %vm935, %v2423, 0
        %v3029 = vsel %vm1183, %v2427, 0
        %3031 = vmatprep.subr.bf16.mxu0 0
        %3032 = vmatpush1.bf16.msra.mxu0 %v3029
        %3033 = vmatprep.subr.bf16.mxu0 0
        %3034 = vmatpush1.bf16.msra.mxu0 0
        %3035 = vmatprep.subr.bf16.mxu0 0
        %3036 = vmatpush1.bf16.msra.mxu0 0
        %3037 = vmatprep.subr.bf16.mxu0 0
        %3038 = vmatpush1.bf16.msra.mxu0 0
        %3039 = vmatprep.subr.bf16.mxu0 0
        %3040 = vmatpush1.bf16.msra.mxu0 0
        %3041 = vmatprep.subr.bf16.mxu0 0
        %3042 = vmatpush1.bf16.msra.mxu0 0
        %3043 = vmatprep.subr.bf16.mxu0 0
        %3044 = vmatpush1.bf16.msra.mxu0 0
        %3045 = vmatprep.subr.bf16.mxu0 0
        %3046 = vmatpush1.bf16.msra.mxu0 0
        %3047 = vmatprep.subr.bf16.mxu0 0
        %3048 = vmatpush1.bf16.msra.mxu0 0
        %3049 = vmatprep.subr.bf16.mxu0 0
        %3050 = vmatpush1.bf16.msra.mxu0 0
        %3051 = vmatprep.subr.bf16.mxu0 0
        %3052 = vmatpush1.bf16.msra.mxu0 0
        %3053 = vmatprep.subr.bf16.mxu0 0
        %3054 = vmatpush1.bf16.msra.mxu0 0
        %3055 = vmatprep.subr.bf16.mxu0 0
        %3056 = vmatpush1.bf16.msra.mxu0 0
        %3057 = vmatprep.subr.bf16.mxu0 0
        %3058 = vmatpush1.bf16.msra.mxu0 0
        %3059 = vmatprep.subr.bf16.mxu0 0
        %3060 = vmatpush1.bf16.msra.mxu0 0
        %3061 = vmatprep.subr.bf16.mxu0 0
        %3062 = vmatpush1.bf16.msra.mxu0 0
        %3063 = vmatprep.mubr.bf16.mxu0 0
        %3064 = vmatmul.mubr.bf16.gmra.mrb[0].mxu0 %v3026
        %v3065 = vpop.f32.mrb[0].mxu0
        %v3066 = vadd.f32 %v2931, %v3065
        %v3067 = vpop.f32.mrb[0].mxu0
        %v3068 = vpop.f32.mrb[0].mxu0
        %v3069 = vpop.f32.mrb[0].mxu0
        %3070 = vdwg.mxu0
        %v3072 = vsel %vm935, %v2424, 0
        %v3075 = vsel %vm1183, %v2428, 0
        %3077 = vmatprep.subr.bf16.mxu0 0
        %3078 = vmatpush1.bf16.msra.mxu0 %v3075
        %3079 = vmatprep.subr.bf16.mxu0 0
        %3080 = vmatpush1.bf16.msra.mxu0 0
        %3081 = vmatprep.subr.bf16.mxu0 0
        %3082 = vmatpush1.bf16.msra.mxu0 0
        %3083 = vmatprep.subr.bf16.mxu0 0
        %3084 = vmatpush1.bf16.msra.mxu0 0
        %3085 = vmatprep.subr.bf16.mxu0 0
        %3086 = vmatpush1.bf16.msra.mxu0 0
        %3087 = vmatprep.subr.bf16.mxu0 0
        %3088 = vmatpush1.bf16.msra.mxu0 0
        %3089 = vmatprep.subr.bf16.mxu0 0
        %3090 = vmatpush1.bf16.msra.mxu0 0
        %3091 = vmatprep.subr.bf16.mxu0 0
        %3092 = vmatpush1.bf16.msra.mxu0 0
        %3093 = vmatprep.subr.bf16.mxu0 0
        %3094 = vmatpush1.bf16.msra.mxu0 0
        %3095 = vmatprep.subr.bf16.mxu0 0
        %3096 = vmatpush1.bf16.msra.mxu0 0
        %3097 = vmatprep.subr.bf16.mxu0 0
        %3098 = vmatpush1.bf16.msra.mxu0 0
        %3099 = vmatprep.subr.bf16.mxu0 0
        %3100 = vmatpush1.bf16.msra.mxu0 0
        %3101 = vmatprep.subr.bf16.mxu0 0
        %3102 = vmatpush1.bf16.msra.mxu0 0
        %3103 = vmatprep.subr.bf16.mxu0 0
        %3104 = vmatpush1.bf16.msra.mxu0 0
        %3105 = vmatprep.subr.bf16.mxu0 0
        %3106 = vmatpush1.bf16.msra.mxu0 0
        %3107 = vmatprep.subr.bf16.mxu0 0
        %3108 = vmatpush1.bf16.msra.mxu0 0
        %3109 = vmatprep.mubr.bf16.mxu0 0
        %3110 = vmatmul.mubr.bf16.gmra.mrb[0].mxu0 %v3072
        %v3111 = vpop.f32.mrb[0].mxu0
        %v3112 = vadd.f32 %v2932, %v3111
        %v3113 = vpop.f32.mrb[0].mxu0
        %v3114 = vpop.f32.mrb[0].mxu0
        %v3115 = vpop.f32.mrb[0].mxu0
        %3116 = vdwg.mxu0
        %3118 = vrot.lane.b32.xlu0 %v3020, 8
        %v3119 = vpop.permute.xlu0 %3118
        %3122 = vrot.lane.b32.xlu0 %v3066, 16
        %v3123 = vpop.permute.xlu0 %3122
        %3126 = vrot.lane.b32.xlu0 %v3112, 24
        %v3127 = vpop.permute.xlu0 %3126
        %v3129 = vsel %vm935, %v2974, %v3119
        %v3130 = vsel %vm1378, %v3129, %v3123
        %v3131 = vsel %vm1380, %v3130, %v3127
        %v3132 = vpack.c.bf16 %v3131, %v3131
        %s3133 = scalar_lea.vmem [#allocation10], 96
        %v3134 = vld [vmem:[%s3133] sm:$0xff]
        %v3135 = vld [vmem:[%s3133 + $0x8] sm:$0xff]
        %v3136 = vld [vmem:[%s3133 + $0x10] sm:$0xff]
        %v3137 = vld [vmem:[%s3133 + $0x18] sm:$0xff]
        %v3138 = vpack.c.bf16 %v3135, %v3134
        %v3139 = vpack.c.bf16 %v3137, %v3136
        %v3140 = vld [vmem:[%s8 + $0x3] sm:$0x1]
        %v3141 = vlaneseq
        %v3142 = vshrl.u32 %v3141, 7
        %v3143 = vsub.s32 0, %v3142
        %v3144 = vrot.slane %v3140, %v3143
        %v3146 = vsel %vm713, %v3132, 0
        %3148 = vmatprep.subr.bf16.mxu0 0
        %3149 = vmatpush1.bf16.msra.mxu0 %v3138
        %3150 = vmatprep.subr.bf16.mxu0 0
        %3151 = vmatpush1.bf16.msra.mxu0 %v3139
        %3152 = vmatprep.subr.bf16.mxu0 0
        %3153 = vmatpush1.bf16.msra.mxu0 0
        %3154 = vmatprep.subr.bf16.mxu0 0
        %3155 = vmatpush1.bf16.msra.mxu0 0
        %3156 = vmatprep.subr.bf16.mxu0 0
        %3157 = vmatpush1.bf16.msra.mxu0 0
        %3158 = vmatprep.subr.bf16.mxu0 0
        %3159 = vmatpush1.bf16.msra.mxu0 0
        %3160 = vmatprep.subr.bf16.mxu0 0
        %3161 = vmatpush1.bf16.msra.mxu0 0
        %3162 = vmatprep.subr.bf16.mxu0 0
        %3163 = vmatpush1.bf16.msra.mxu0 0
        %3164 = vmatprep.subr.bf16.mxu0 0
        %3165 = vmatpush1.bf16.msra.mxu0 0
        %3166 = vmatprep.subr.bf16.mxu0 0
        %3167 = vmatpush1.bf16.msra.mxu0 0
        %3168 = vmatprep.subr.bf16.mxu0 0
        %3169 = vmatpush1.bf16.msra.mxu0 0
        %3170 = vmatprep.subr.bf16.mxu0 0
        %3171 = vmatpush1.bf16.msra.mxu0 0
        %3172 = vmatprep.subr.bf16.mxu0 0
        %3173 = vmatpush1.bf16.msra.mxu0 0
        %3174 = vmatprep.subr.bf16.mxu0 0
        %3175 = vmatpush1.bf16.msra.mxu0 0
        %3176 = vmatprep.subr.bf16.mxu0 0
        %3177 = vmatpush1.bf16.msra.mxu0 0
        %3178 = vmatprep.subr.bf16.mxu0 0
        %3179 = vmatpush1.bf16.msra.mxu0 0
        %3180 = vmatprep.mubr.bf16.mxu0 0
        %3181 = vmatmul.mubr.bf16.gmra.mrb[0].mxu0 %v3146
        %v3182 = vpop.f32.mrb[0].mxu0
        %v3183 = vadd.f32 %v3144, %v3182
        %v3184 = vpop.f32.mrb[0].mxu0
        %v3185 = vpop.f32.mrb[0].mxu0
        %v3186 = vpop.f32.mrb[0].mxu0
        %3187 = vdwg.mxu0
        %v3188 = vadd.f32 %v1438, %v3183
        %v3189 = vld [vmem:[%s9 + $0x2] sm:$0x1]
        %v3190 = vld [vmem:[%s10 + $0x2] sm:$0x1]
        %v3191 = vsel %vm713, %v3188, 0.0
        %3192 = vadd.xlane.f32.xlu0 %v3191
        %v3193 = vpop.xlane.xlu0 %3192
        %v3194 = vmul.f32 %v3193, %v717
        %v3195 = vsub.f32 %v3188, %v3194
        %v3196 = vmul.f32 %v3195, %v3195
        %v3197 = vsel %vm713, %v3196, 0.0
        %3198 = vadd.xlane.f32.xlu0 %v3197
        %v3199 = vpop.xlane.xlu0 %3198
        %v3200 = vmul.f32 %v3199, %v717
        %v3201 = vadd.f32 %v3200, 1e-06
        %v3202 = vrsqrt.pop %v3201
        %v3203 = vmul.f32 %v3195, %v3202
        %v3204 = vlaneseq
        %v3205 = vshrl.u32 %v3204, 7
        %v3206 = vsub.s32 0, %v3205
        %v3207 = vrot.slane %v3189, %v3206
        %v3208 = vmul.f32 %v3203, %v3207
        %v3209 = vlaneseq
        %v3210 = vshrl.u32 %v3209, 7
        %v3211 = vsub.s32 0, %v3210
        %v3212 = vrot.slane %v3190, %v3211
        %v3213 = vadd.f32 %v3208, %v3212
        %v3214 = vpack.c.bf16 %v3213, %v3213
        %v3215 = vld [vmem:[%s11] sm:$0xff]
        %v3216 = vld [vmem:[%s11 + $0x8] sm:$0xff]
        %v3217 = vld [vmem:[%s11 + $0x10] sm:$0xff]
        %v3218 = vld [vmem:[%s11 + $0x18] sm:$0xff]
        %v3219 = vpack.c.bf16 %v3216, %v3215
        %v3220 = vpack.c.bf16 %v3218, %v3217
        %v3221 = vld [vmem:[%s12] sm:$0x1]
        %v3223 = vlaneseq
        %v3224 = vshrl.u32 %v3223, 7
        %v3225 = vsub.s32 0, %v3224
        %v3226 = vrot.slane %v3221, %v3225
        %v3229 = vsel %vm713, %v3214, 0
        %3231 = vmatprep.subr.bf16.mxu0 0
        %3232 = vmatpush1.bf16.msra.mxu0 %v3219
        %3233 = vmatprep.subr.bf16.mxu0 0
        %3234 = vmatpush1.bf16.msra.mxu0 %v3220
        %3235 = vmatprep.subr.bf16.mxu0 0
        %3236 = vmatpush1.bf16.msra.mxu0 0
        %3237 = vmatprep.subr.bf16.mxu0 0
        %3238 = vmatpush1.bf16.msra.mxu0 0
        %3239 = vmatprep.subr.bf16.mxu0 0
        %3240 = vmatpush1.bf16.msra.mxu0 0
        %3241 = vmatprep.subr.bf16.mxu0 0
        %3242 = vmatpush1.bf16.msra.mxu0 0
        %3243 = vmatprep.subr.bf16.mxu0 0
        %3244 = vmatpush1.bf16.msra.mxu0 0
        %3245 = vmatprep.subr.bf16.mxu0 0
        %3246 = vmatpush1.bf16.msra.mxu0 0
        %3247 = vmatprep.subr.bf16.mxu0 0
        %3248 = vmatpush1.bf16.msra.mxu0 0
        %3249 = vmatprep.subr.bf16.mxu0 0
        %3250 = vmatpush1.bf16.msra.mxu0 0
        %3251 = vmatprep.subr.bf16.mxu0 0
        %3252 = vmatpush1.bf16.msra.mxu0 0
        %3253 = vmatprep.subr.bf16.mxu0 0
        %3254 = vmatpush1.bf16.msra.mxu0 0
        %3255 = vmatprep.subr.bf16.mxu0 0
        %3256 = vmatpush1.bf16.msra.mxu0 0
        %3257 = vmatprep.subr.bf16.mxu0 0
        %3258 = vmatpush1.bf16.msra.mxu0 0
        %3259 = vmatprep.subr.bf16.mxu0 0
        %3260 = vmatpush1.bf16.msra.mxu0 0
        %3261 = vmatprep.subr.bf16.mxu0 0
        %3262 = vmatpush1.bf16.msra.mxu0 0
        %3263 = vmatprep.mubr.bf16.mxu0 0
        %3264 = vmatmul.mubr.bf16.gmra.mrb[0].mxu0 %v3229
        %v3265 = vpop.f32.mrb[0].mxu0
        %v3266 = vadd.f32 %v3226, %v3265
        %v3267 = vpop.f32.mrb[0].mxu0
        %v3268 = vpop.f32.mrb[0].mxu0
        %v3269 = vpop.f32.mrb[0].mxu0
        %3270 = vdwg.mxu0
        %v3271 = vmul.f32 %v3266, %v3266
        %v3272 = vmul.f32 %v3266, %v3271
        %v3273 = vmul.f32 %v3272, 0.044715
        %v3274 = vadd.f32 %v3266, %v3273
        %v3275 = vmul.f32 %v3274, 0.7978846
        %v3276 = vtanh.pop %v3275
        %v3277 = vadd.f32 %v3276, 1.0
        %v3278 = vmul.f32 %v3277, 0.5
        %v3279 = vmul.f32 %v3266, %v3278
        %v3280 = vpack.c.bf16 %v3279, %v3279
        %v3281 = vld [vmem:[%s13] sm:$0xff]
        %v3282 = vld [vmem:[%s13 + $0x8] sm:$0xff]
        %v3283 = vld [vmem:[%s13 + $0x10] sm:$0xff]
        %v3284 = vld [vmem:[%s13 + $0x18] sm:$0xff]
        %v3285 = vld [vmem:[%s13 + $0x20] sm:$0xff]
        %v3286 = vld [vmem:[%s13 + $0x28] sm:$0xff]
        %v3287 = vld [vmem:[%s13 + $0x30] sm:$0xff]
        %v3288 = vld [vmem:[%s13 + $0x38] sm:$0xff]
        %v3289 = vld [vmem:[%s13 + $0x40] sm:$0xff]
        %v3290 = vld [vmem:[%s13 + $0x48] sm:$0xff]
        %v3291 = vld [vmem:[%s13 + $0x50] sm:$0xff]
        %v3292 = vld [vmem:[%s13 + $0x58] sm:$0xff]
        %v3293 = vld [vmem:[%s13 + $0x60] sm:$0xff]
        %v3294 = vld [vmem:[%s13 + $0x68] sm:$0xff]
        %v3295 = vld [vmem:[%s13 + $0x70] sm:$0xff]
        %v3296 = vld [vmem:[%s13 + $0x78] sm:$0xff]
        %v3297 = vpack.c.bf16 %v3282, %v3281
        %v3298 = vpack.c.bf16 %v3284, %v3283
        %v3299 = vpack.c.bf16 %v3286, %v3285
        %v3300 = vpack.c.bf16 %v3288, %v3287
        %v3301 = vpack.c.bf16 %v3290, %v3289
        %v3302 = vpack.c.bf16 %v3292, %v3291
        %v3303 = vpack.c.bf16 %v3294, %v3293
        %v3304 = vpack.c.bf16 %v3296, %v3295
        %v3305 = vld [vmem:[%s14] sm:$0x1]
        %v3307 = vlaneseq
        %v3308 = vshrl.u32 %v3307, 7
        %v3309 = vsub.s32 0, %v3308
        %v3310 = vrot.slane %v3305, %v3309
        %3312 = vmatprep.subr.bf16.mxu0 0
        %3313 = vmatpush1.bf16.msra.mxu0 %v3297
        %3314 = vmatprep.subr.bf16.mxu0 0
        %3315 = vmatpush1.bf16.msra.mxu0 %v3298
        %3316 = vmatprep.subr.bf16.mxu0 0
        %3317 = vmatpush1.bf16.msra.mxu0 %v3299
        %3318 = vmatprep.subr.bf16.mxu0 0
        %3319 = vmatpush1.bf16.msra.mxu0 %v3300
        %3320 = vmatprep.subr.bf16.mxu0 0
        %3321 = vmatpush1.bf16.msra.mxu0 %v3301
        %3322 = vmatprep.subr.bf16.mxu0 0
        %3323 = vmatpush1.bf16.msra.mxu0 %v3302
        %3324 = vmatprep.subr.bf16.mxu0 0
        %3325 = vmatpush1.bf16.msra.mxu0 %v3303
        %3326 = vmatprep.subr.bf16.mxu0 0
        %3327 = vmatpush1.bf16.msra.mxu0 %v3304
        %3328 = vmatprep.subr.bf16.mxu0 0
        %3329 = vmatpush1.bf16.msra.mxu0 0
        %3330 = vmatprep.subr.bf16.mxu0 0
        %3331 = vmatpush1.bf16.msra.mxu0 0
        %3332 = vmatprep.subr.bf16.mxu0 0
        %3333 = vmatpush1.bf16.msra.mxu0 0
        %3334 = vmatprep.subr.bf16.mxu0 0
        %3335 = vmatpush1.bf16.msra.mxu0 0
        %3336 = vmatprep.subr.bf16.mxu0 0
        %3337 = vmatpush1.bf16.msra.mxu0 0
        %3338 = vmatprep.subr.bf16.mxu0 0
        %3339 = vmatpush1.bf16.msra.mxu0 0
        %3340 = vmatprep.subr.bf16.mxu0 0
        %3341 = vmatpush1.bf16.msra.mxu0 0
        %3342 = vmatprep.subr.bf16.mxu0 0
        %3343 = vmatpush1.bf16.msra.mxu0 0
        %3344 = vmatprep.mubr.bf16.mxu0 0
        %3345 = vmatmul.mubr.bf16.gmra.mrb[0].mxu0 %v3280
        %v3346 = vpop.f32.mrb[0].mxu0
        %v3347 = vadd.f32 %v3310, %v3346
        %v3348 = vpop.f32.mrb[0].mxu0
        %v3349 = vpop.f32.mrb[0].mxu0
        %v3350 = vpop.f32.mrb[0].mxu0
        %3351 = vdwg.mxu0
        %v3352 = vadd.f32 %v3188, %v3347
        %3353 = vst.msk [vmem:[%s676] sm:$0xff] %vm713, %v3352
        %s3354 = sand.u32 %s406, 1
        %s3355 = scalar_lea.sflag [#allocation4], %s3354
        %s3356 = sand.u32 %s406, 1
        %s3357 = smul.addr %s3356, 8
        %s3358 = scalar_lea.vmem [#allocation11], %s3357
        // Predicated region
        $region101: #{tpu_custom_call.1} parent=79 // pred_check
          %p3359 = pneg %p416
        $region102: #{tpu_custom_call.1} parent=79 // pred_check_branch
          %3361 = sbr.rel (%p3359) target = $region104
        $region103: #{tpu_custom_call.1} parent=79 // pred_region
          %s3363 = ssub.s32 128, 128
          %3364 = vsyncadd %s3355, %s3363
          %s3365 = sadd.s32 %s41, %s40
          %s3366 = smul.addr %s3365, 128
          %s3367 = scalar_lea.hbm %s15, %s3366
          %s3369 = sshll.u32 %s3358, 4
          %s3370 = int_to_ptr.vmem [resolvable:$true] %s3369
          %3372 = dma.vmem_to_hbm [thread:$0]  %s3370, 128, %s3367, %s3355
        $region104: #{tpu_custom_call.1} parent=79 // pred_fallthru
          _
      $region80: #{tpu_custom_call.1} parent=5 // pred_fallthru
        _
      %p3373 = scmp.le.s32.totalorder 2, %s31
      // Predicated region
      $region105: #{tpu_custom_call.1} parent=5 // pred_check
        %p3374 = pneg %p3373
      $region106: #{tpu_custom_call.1} parent=5 // pred_check_branch
        %3376 = sbr.rel (%p3374) target = $region108
      $region107: #{tpu_custom_call.1} parent=5 // pred_region
        %s3377 = ssub.s32 %s31, 2
        // Predicated region
        $region109: #{tpu_custom_call.1} parent=107 // pred_check
          %p3378 = pneg %p422
        $region110: #{tpu_custom_call.1} parent=107 // pred_check_branch
          %3380 = sbr.rel (%p3378) target = $region112
        $region111: #{tpu_custom_call.1} parent=107 // pred_region
          %s3381 = sand.u32 %s407, 1
          %s3382 = scalar_lea.sflag [#allocation4], %s3381
          %s3383 = sand.u32 %s407, 1
          %s3384 = smul.addr %s3383, 8
          %s3385 = scalar_lea.vmem [#allocation11], %s3384
          %3386 = dma.done %s3382, 128
        $region112: #{tpu_custom_call.1} parent=107 // pred_fallthru
          _
      $region108: #{tpu_custom_call.1} parent=5 // pred_fallthru
        _
    $region6: #{tpu_custom_call.1} parent=1 // loop_footer
      %s35 = sadd.s32 1, %s31
    $region7: #{tpu_custom_call.1} parent=1 // loop_footer_branch
      %30 = sbr.rel target = $region3
    $region8: #{tpu_custom_call.1} parent=1 // loop_exit
      _
    %3387 = vsyncpa [#allocation3], 1
    %s3388 = scalar_lea.sflag [#allocation3], 1
    %3389 = vsyncpa %s3388, 1
    %3390 = vsyncpa [#allocation6], 1
    %s3391 = scalar_lea.sflag [#allocation6], 1
    %3392 = vsyncpa %s3391, 1
    %3393 = vsyncpa [#allocation9], 1
    %3394 = vsyncpa [#allocation4], 1
    %s3395 = scalar_lea.sflag [#allocation4], 1
    %3396 = vsyncpa %s3395, 1

</llo_original>
